<compile_context>
chip_gen: v5e
topology: v5e:2x2
jax: 0.10.0
libtpu: 0.0.40
codegen_flags: <defaults>
</compile_context>

<pallas_src>
import jax
import jax.numpy as jnp
from jax.experimental import pallas as pl
from jax.experimental.pallas import tpu as pltpu

F32 = jnp.float32


# ----------------------------------------------------------------------------
# Pallas kernels (single-block: all (small) matrices resident in VMEM)
# TODO(synk): for a batch of graphs add a leading "parallel" grid axis so both
# v7x TensorCores do work; single-graph forward stays gridless.
# ----------------------------------------------------------------------------

def _start_kernel(lr_ref, w0_ref, b0_ref, wd_ref, bd_ref, pw_ref, pb_ref,
                  a_ref, x0_ref, xd_ref, s_ref):
    # normalize_adj_torch:  D^{-1/2} @ mx.T @ D^{-1/2},  D = diag(rowsum)
    mx = lr_ref[...]
    rowsum = jnp.sum(mx, axis=1, keepdims=True)                  # (n, 1)
    r = jax.lax.rsqrt(rowsum)
    r = jnp.where(rowsum == 0.0, 0.0, r)                         # torch isinf -> 0 guard
    a = jnp.transpose(mx) * r * jnp.transpose(r)
    a_ref[...] = a
    # start_gcn (I == A):  X0 = relu((A @ A) @ W0 + b0)
    x0 = jnp.maximum(
        jnp.dot(jnp.dot(a, a, preferred_element_type=F32), w0_ref[...],
                preferred_element_type=F32) + b0_ref[...], 0.0)
    x0_ref[...] = x0
    # down_gcn[0]:  Xd = relu((A @ X0) @ Wd + bd)
    xd = jnp.maximum(
        jnp.dot(jnp.dot(a, x0, preferred_element_type=F32), wd_ref[...],
                preferred_element_type=F32) + bd_ref[...], 0.0)
    xd_ref[...] = xd
    # pool score[0], lane-dense (1, n):  sigmoid(pw . Xd_rows + pb)
    s = jax.lax.dot_general(pw_ref[...], xd, (((1,), (1,)), ((), ())),
                            preferred_element_type=F32) + pb_ref[...]
    s_ref[...] = jax.nn.sigmoid(s)


def _down_kernel(grow_ref, gcol_ref, xp_ref, w_ref, b_ref, pw_ref, pb_ref,
                 g_ref, xd_ref, s_ref):
    # pooled adjacency: un_g[idx,:][:,idx] == (g[idx,:]!=0) @ (g[:,idx]!=0) != 0
    gr = (grow_ref[...] != 0.0).astype(jnp.bfloat16)   # exact 0/1, f32 accumulation
    gc = (gcol_ref[...] != 0.0).astype(jnp.bfloat16)
    un = (jnp.dot(gr, gc, preferred_element_type=F32) != 0.0).astype(F32)
    # norm_g (torch broadcasting: column j divided by rowsum[j])
    deg = jnp.sum(un, axis=1, keepdims=True)
    g_new = un / jnp.transpose(deg)
    g_ref[...] = g_new
    # next down_gcn:  Xd = relu((g_new @ Xp) @ W + b)
    xd = jnp.maximum(
        jnp.dot(jnp.dot(g_new, xp_ref[...], preferred_element_type=F32),
                w_ref[...], preferred_element_type=F32) + b_ref[...], 0.0)
    xd_ref[...] = xd
    # next pool score, lane-dense (1, kk)
    s = jax.lax.dot_general(pw_ref[...], xd, (((1,), (1,)), ((), ())),
                            preferred_element_type=F32) + pb_ref[...]
    s_ref[...] = jax.nn.sigmoid(s)


def _bottom_kernel(grow_ref, gcol_ref, xp_ref, w_ref, b_ref, x_ref):
    # final pooled adjacency (stays in VMEM only) + bottom_gcn
    gr = (grow_ref[...] != 0.0).astype(jnp.bfloat16)
    gc = (gcol_ref[...] != 0.0).astype(jnp.bfloat16)
    un = (jnp.dot(gr, gc, preferred_element_type=F32) != 0.0).astype(F32)
    deg = jnp.sum(un, axis=1, keepdims=True)
    g_new = un / jnp.transpose(deg)
    x_ref[...] = jnp.maximum(
        jnp.dot(jnp.dot(g_new, xp_ref[...], preferred_element_type=F32),
                w_ref[...], preferred_element_type=F32) + b_ref[...], 0.0)


def _up_skip_kernel(g_ref, x_ref, w_ref, b_ref, skip_ref, out_ref):
    # up_gcn + fused skip add:  relu((g @ X) @ W + b) + down_outs
    y = jnp.maximum(
        jnp.dot(jnp.dot(g_ref[...], x_ref[...], preferred_element_type=F32),
                w_ref[...], preferred_element_type=F32) + b_ref[...], 0.0)
    out_ref[...] = y + skip_ref[...]


def _up_end_kernel(g_ref, x_ref, w_ref, b_ref, skip_ref, orgx_ref,
                   we1_ref, we2_ref, be_ref, out_ref):
    # last up_gcn + skip, fused with end_gcn using split weights:
    #   relu((g @ cat(Xu, orgX)) @ W_end + b) = relu((g@Xu)@We1 + (g@orgX)@We2 + b)
    g = g_ref[...]
    xu = jnp.maximum(
        jnp.dot(jnp.dot(g, x_ref[...], preferred_element_type=F32),
                w_ref[...], preferred_element_type=F32) + b_ref[...], 0.0)
    xu = xu + skip_ref[...]
    gx = jnp.dot(g, xu, preferred_element_type=F32)
    go = jnp.dot(g, orgx_ref[...], preferred_element_type=F32)
    y = (jnp.dot(gx, we1_ref[...], preferred_element_type=F32)
         + jnp.dot(go, we2_ref[...], preferred_element_type=F32) + be_ref[...])
    out_ref[...] = jnp.maximum(y, 0.0)


def _tail_kernel(wf_ref, u_ref, f_ref, gc1w_ref, gc2w_ref, adj_ref, z_ref):
    # GSRLayer (weights pre-folded: wf = W[:, :lr] + W[:, lr:] == W @ cat(I, I, 0))
    #   b = wf @ U.T   (dot_general contracting last dims — no explicit transpose)
    b = jax.lax.dot_general(wf_ref[...], u_ref[...], (((1,), (1,)), ((), ())),
                            preferred_element_type=F32)
    f_d = jnp.abs(jnp.dot(b, f_ref[...], preferred_element_type=F32))
    hr = f_d.shape[0]
    ri = jax.lax.broadcasted_iota(jnp.int32, (hr, hr), 0)
    ci = jax.lax.broadcasted_iota(jnp.int32, (hr, hr), 1)
    diag = ri == ci
    f_d = jnp.where(diag, 1.0, f_d)
    adj_ref[...] = f_d                                            # self.outputs
    # Z = |sym(adj @ adj.T)| with unit diag   (kept in VMEM only)
    x = jax.lax.dot_general(f_d, f_d, (((1,), (1,)), ((), ())),
                            preferred_element_type=F32)
    x = (x + jnp.transpose(x)) * 0.5
    z = jnp.abs(jnp.where(diag, 1.0, x))
    # gc1:  hidden1 = relu(Z @ (outputs @ W1))       (kept in VMEM only)
    sup1 = jnp.dot(f_d, gc1w_ref[...], preferred_element_type=F32)
    h1 = jnp.maximum(jnp.dot(z, sup1, preferred_element_type=F32), 0.0)
    # gc2 + tail:  hidden2 = relu(hidden1 @ (outputs @ W2)); sym; diag=1; abs
    sup2 = jnp.dot(f_d, gc2w_ref[...], preferred_element_type=F32)
    h2 = jnp.maximum(jnp.dot(h1, sup2, preferred_element_type=F32), 0.0)
    zz = (h2 + jnp.transpose(h2)) * 0.5
    zz = jnp.where(diag, 1.0, zz)
    z_ref[...] = jnp.abs(zz)


# ----------------------------------------------------------------------------
# pallas_call helper: whole-array single-block kernels in VMEM
# ----------------------------------------------------------------------------

def _pcall(kernel, out_shape, *args, vmem_limit_bytes=None):
    vmem = pl.BlockSpec(memory_space=pltpu.MemorySpace.VMEM)
    if isinstance(out_shape, (list, tuple)):
        out_specs = tuple(vmem for _ in out_shape)
        out_shape = tuple(out_shape)
    else:
        out_specs = vmem
    kwargs = {}
    if vmem_limit_bytes is not None:
        # v5e default scoped VMEM is 16 MiB; raise it for the fused tail kernel
        # so larger hr_dim configs still fit (32 MiB is safe on v5e/v6e/v7x).
        kwargs["compiler_params"] = pltpu.CompilerParams(
            vmem_limit_bytes=vmem_limit_bytes)
    return pl.pallas_call(
        kernel,
        out_shape=out_shape,
        in_specs=[vmem] * len(args),
        out_specs=out_specs,
        **kwargs,
    )(*args)


# ----------------------------------------------------------------------------
# Parameter init (deterministic; shapes correspond to the nn.Module params,
# with biases / pool projection stored pre-shaped for the kernels)
# ----------------------------------------------------------------------------

def init_params(key, lr_dim, hr_dim, hidden_dim, n_levels):
    keys = iter(jax.random.split(key, 16 + 8 * n_levels))

    def linear(in_d, out_d):
        bound = 1.0 / float(in_d) ** 0.5
        w = jax.random.uniform(next(keys), (in_d, out_d), F32, -bound, bound)
        b = jax.random.uniform(next(keys), (1, out_d), F32, -bound, bound)
        return w, b

    def glorot(in_d, out_d):
        lim = (6.0 / (in_d + out_d)) ** 0.5
        return jax.random.uniform(next(keys), (in_d, out_d), F32, -lim, lim)

    p = {}
    p["start_w"], p["start_b"] = linear(lr_dim, hr_dim)          # GraphUnet.start_gcn
    p["down_w"], p["down_b"], p["pool_w"], p["pool_b"] = [], [], [], []
    p["up_w"], p["up_b"] = [], []
    for _ in range(n_levels):
        w, b = linear(hr_dim, hr_dim)
        p["down_w"].append(w); p["down_b"].append(b)
        pw, pb = linear(hr_dim, 1)                               # Pool proj (hr -> 1)
        p["pool_w"].append(jnp.transpose(pw))                    # stored lane-dense (1, hr)
        p["pool_b"].append(pb.reshape(1, 1))
    p["bottom_w"], p["bottom_b"] = linear(hr_dim, hr_dim)        # GraphUnet.bottom_gcn
    for _ in range(n_levels):
        w, b = linear(hr_dim, hr_dim)
        p["up_w"].append(w); p["up_b"].append(b)
    p["end_w"], p["end_b"] = linear(2 * hr_dim, hr_dim)          # GraphUnet.end_gcn
    p["gsr_w"] = glorot(hr_dim, hr_dim)                          # GSRLayer.weights
    p["gc1_w"] = glorot(hr_dim, hidden_dim)                      # GraphConvolution 1
    p["gc2_w"] = glorot(hidden_dim, hr_dim)                      # GraphConvolution 2
    return p


# ----------------------------------------------------------------------------
# Forward pass
# ----------------------------------------------------------------------------

def gsrnet_forward(lr, params, ks):
    lr_dim = lr.shape[0]
    hr_dim = params["gsr_w"].shape[0]
    hidden_dim = params["gc1_w"].shape[1]
    L = len(ks)
    assert L >= 1
    assert hr_dim == 2 * lr_dim, "GSRLayer requires hr_dim == 2 * lr_dim"
    assert hidden_dim == hr_dim, "Team-02 forward requires hidden_dim == hr_dim"

    n0 = lr_dim
    # Fused: normalize_adj + start_gcn + down_gcn[0] + pool score[0]
    A, X0, X, s = _pcall(
        _start_kernel,
        (jax.ShapeDtypeStruct((n0, n0), F32),
         jax.ShapeDtypeStruct((n0, hr_dim), F32),
         jax.ShapeDtypeStruct((n0, hr_dim), F32),
         jax.ShapeDtypeStruct((1, n0), F32)),
        lr, params["start_w"], params["start_b"],
        params["down_w"][0], params["down_b"][0],
        params["pool_w"][0], params["pool_b"][0])
    start_gcn_outs = X0
    org_X = X0

    adj_ms = [A]          # g at entry of each down level
    down_outs = [X]
    idx_list = []
    sizes = [n0]
    g = A
    scores = s[0]

    for i in range(L):
        n = sizes[i]
        kk = max(2, int(ks[i] * n))
        sizes.append(kk)
        # TODO(synk): top-k selection + row/col gathers are data-dependent
        # indexing; kept in JAX glue (gather BEFORE the boolean matmul).
        values, idx = jax.lax.top_k(scores, kk)
        idx_list.append(idx)
        Xp = X[idx, :] * values[:, None]
        g_rows = g[idx, :]
        g_cols = g[:, idx]
        if i < L - 1:
            # Fused: boolean matmul + norm_g + down_gcn[i+1] + pool score[i+1]
            g, X, s = _pcall(
                _down_kernel,
                (jax.ShapeDtypeStruct((kk, kk), F32),
                 jax.ShapeDtypeStruct((kk, hr_dim), F32),
                 jax.ShapeDtypeStruct((1, kk), F32)),
                g_rows, g_cols, Xp,
                params["down_w"][i + 1], params["down_b"][i + 1],
                params["pool_w"][i + 1], params["pool_b"][i + 1])
            scores = s[0]
            adj_ms.append(g)
            down_outs.append(X)
        else:
            # Fused: boolean matmul + norm_g + bottom_gcn (pooled g stays in VMEM)
            X = _pcall(
                _bottom_kernel,
                jax.ShapeDtypeStruct((kk, hr_dim), F32),
                g_rows, g_cols, Xp,
                params["bottom_w"], params["bottom_b"])

    # end_gcn weight split (replaces concat(X, org_X) @ W_end)
    we1 = params["end_w"][:hr_dim, :]
    we2 = params["end_w"][hr_dim:, :]

    net_outs = None
    for i in range(L):
        up_idx = L - i - 1
        g_u = adj_ms[up_idx]
        idx = idx_list[up_idx]
        n_u = sizes[up_idx]
        # TODO(synk): unpool row-scatter is data-dependent; kept in JAX glue.
        Xu = jnp.zeros((n_u, hr_dim), F32).at[idx].set(X)
        if i < L - 1:
            # Fused: up_gcn + skip add
            X = _pcall(_up_skip_kernel,
                       jax.ShapeDtypeStruct((n_u, hr_dim), F32),
                       g_u, Xu, params["up_w"][i], params["up_b"][i],
                       down_outs[up_idx])
        else:
            # Fused: last up_gcn + skip add + end_gcn (split weights, no concat)
            net_outs = _pcall(_up_end_kernel,
                              jax.ShapeDtypeStruct((n_u, hr_dim), F32),
                              g_u, Xu, params["up_w"][i], params["up_b"][i],
                              down_outs[up_idx], org_X,
                              we1, we2, params["end_b"])

    # ----------------------- GSRLayer + gc1 + gc2 + tail (single kernel) ----
    # TODO(synk): eigendecomposition (torch.symeig) has no Pallas equivalent.
    _, U = jnp.linalg.eigh(A)
    # Pre-fold W @ cat(I_lr, I_lr, dim=0)  ==  W[:, :lr] + W[:, lr:]
    w_folded = params["gsr_w"][:, :lr_dim] + params["gsr_w"][:, lr_dim:]
    outputs, z_abs = _pcall(
        _tail_kernel,
        (jax.ShapeDtypeStruct((hr_dim, hr_dim), F32),
         jax.ShapeDtypeStruct((hr_dim, hr_dim), F32)),
        w_folded, U.astype(F32), net_outs,
        params["gc1_w"], params["gc2_w"],
        vmem_limit_bytes=32 * 1024 * 1024)

    return z_abs, net_outs, start_gcn_outs, outputs


# ----------------------------------------------------------------------------

if __name__ == "__main__":
    lr_dim, hr_dim, hidden_dim = 16, 32, 32
    ks = (0.9, 0.7)

    key = jax.random.PRNGKey(0)
    k_in, k_par = jax.random.split(key)

    # Small symmetric non-negative "low-resolution connectivity" matrix.
    m = jax.random.uniform(k_in, (lr_dim, lr_dim), F32)
    lr = (m + m.T) / 2.0

    params = init_params(k_par, lr_dim, hr_dim, hidden_dim, len(ks))

    fwd = jax.jit(lambda lr_, params_: gsrnet_forward(lr_, params_, ks))
    outs = fwd(lr, params)
    jax.block_until_ready(outs)

    z_abs, net_outs, start_gcn_outs, outputs = outs
    assert z_abs.shape == (hr_dim, hr_dim)
    assert net_outs.shape == (lr_dim, hr_dim)
    assert start_gcn_outs.shape == (lr_dim, hr_dim)
    assert outputs.shape == (hr_dim, hr_dim)
    assert bool(jnp.all(jnp.isfinite(z_abs)))
    print("KERNEL_OK")
</pallas_src>

<mosaic_0001>
module attributes {stable_mosaic.version = 11 : i64} {
  func.func @_start_kernel(%arg0: memref<16x16xf32, #tpu.memory_space<vmem>>, %arg1: memref<16x32xf32, #tpu.memory_space<vmem>>, %arg2: memref<1x32xf32, #tpu.memory_space<vmem>>, %arg3: memref<32x32xf32, #tpu.memory_space<vmem>>, %arg4: memref<1x32xf32, #tpu.memory_space<vmem>>, %arg5: memref<1x32xf32, #tpu.memory_space<vmem>>, %arg6: memref<1x1xf32, #tpu.memory_space<vmem>>, %arg7: memref<16x16xf32, #tpu.memory_space<vmem>>, %arg8: memref<16x32xf32, #tpu.memory_space<vmem>>, %arg9: memref<16x32xf32, #tpu.memory_space<vmem>>, %arg10: memref<1x16xf32, #tpu.memory_space<vmem>>) attributes {dimension_semantics = [], scalar_prefetch = 0 : i64, scratch_operands = 0 : i64, tpu.core_type = #tpu.core_type<tc>} {
    %c0 = arith.constant 0 : index
    %c0_0 = arith.constant 0 : index
    %0 = vector.load %arg0[%c0, %c0_0] : memref<16x16xf32, #tpu.memory_space<vmem>>, vector<16x16xf32>
    %cst = arith.constant dense<0.000000e+00> : vector<16xf32>
    %1 = vector.multi_reduction <add>, %0, %cst [1] : vector<16x16xf32> to vector<16xf32>
    %2 = vector.shape_cast %1 : vector<16xf32> to vector<16x1xf32>
    %3 = math.rsqrt %2 : vector<16x1xf32>
    %cst_1 = arith.constant 0.000000e+00 : f32
    %4 = vector.broadcast %cst_1 : f32 to vector<16x1xf32>
    %5 = arith.cmpf oeq, %2, %4 : vector<16x1xf32>
    %cst_2 = arith.constant 0.000000e+00 : f32
    %6 = vector.broadcast %cst_2 : f32 to vector<16x1xf32>
    %7 = arith.select %5, %6, %3 : vector<16x1xi1>, vector<16x1xf32>
    %8 = tpu.transpose %0, [1, 0] : vector<16x16xf32> -> vector<16x16xf32>
    %9 = vector.broadcast %7 : vector<16x1xf32> to vector<16x16xf32>
    %10 = arith.mulf %8, %9 : vector<16x16xf32>
    %11 = tpu.transpose %7, [1, 0] : vector<16x1xf32> -> vector<1x16xf32>
    %12 = vector.broadcast %11 : vector<1x16xf32> to vector<16x16xf32>
    %13 = arith.mulf %10, %12 : vector<16x16xf32>
    %c0_3 = arith.constant 0 : index
    %c0_4 = arith.constant 0 : index
    %14 = vector.load %arg7[%c0_3, %c0_4] : memref<16x16xf32, #tpu.memory_space<vmem>>, vector<16x16xf32>
    tpu.vector_store %arg7[%c0_3, %c0_4], %13 {strides = array<i32>} : memref<16x16xf32, #tpu.memory_space<vmem>>, vector<16x16xf32>,
    %cst_5 = arith.constant dense<0.000000e+00> : vector<16x16xf32>
    %15 = tpu.matmul %13, %13, %cst_5 {dimension_numbers = #tpu.dot_dimension_numbers<[1], [0], [0], [1], [0, 0, 1, 1], [], []>} : vector<16x16xf32>, vector<16x16xf32>, vector<16x16xf32> -> vector<16x16xf32>
    %c0_6 = arith.constant 0 : index
    %c0_7 = arith.constant 0 : index
    %16 = vector.load %arg1[%c0_6, %c0_7] : memref<16x32xf32, #tpu.memory_space<vmem>>, vector<16x32xf32>
    %cst_8 = arith.constant dense<0.000000e+00> : vector<16x32xf32>
    %17 = tpu.matmul %15, %16, %cst_8 {dimension_numbers = #tpu.dot_dimension_numbers<[1], [0], [0], [1], [0, 0, 1, 1], [], []>} : vector<16x16xf32>, vector<16x32xf32>, vector<16x32xf32> -> vector<16x32xf32>
    %c0_9 = arith.constant 0 : index
    %c0_10 = arith.constant 0 : index
    %18 = vector.load %arg2[%c0_9, %c0_10] : memref<1x32xf32, #tpu.memory_space<vmem>>, vector<1x32xf32>
    %19 = vector.broadcast %18 : vector<1x32xf32> to vector<16x32xf32>
    %20 = arith.addf %17, %19 : vector<16x32xf32>
    %cst_11 = arith.constant 0.000000e+00 : f32
    %21 = vector.broadcast %cst_11 : f32 to vector<16x32xf32>
    %22 = arith.maximumf %20, %21 : vector<16x32xf32>
    %c0_12 = arith.constant 0 : index
    %c0_13 = arith.constant 0 : index
    %23 = vector.load %arg8[%c0_12, %c0_13] : memref<16x32xf32, #tpu.memory_space<vmem>>, vector<16x32xf32>
    tpu.vector_store %arg8[%c0_12, %c0_13], %22 {strides = array<i32>} : memref<16x32xf32, #tpu.memory_space<vmem>>, vector<16x32xf32>,
    %cst_14 = arith.constant dense<0.000000e+00> : vector<16x32xf32>
    %24 = tpu.matmul %13, %22, %cst_14 {dimension_numbers = #tpu.dot_dimension_numbers<[1], [0], [0], [1], [0, 0, 1, 1], [], []>} : vector<16x16xf32>, vector<16x32xf32>, vector<16x32xf32> -> vector<16x32xf32>
    %c0_15 = arith.constant 0 : index
    %c0_16 = arith.constant 0 : index
    %25 = vector.load %arg3[%c0_15, %c0_16] : memref<32x32xf32, #tpu.memory_space<vmem>>, vector<32x32xf32>
    %cst_17 = arith.constant dense<0.000000e+00> : vector<16x32xf32>
    %26 = tpu.matmul %24, %25, %cst_17 {dimension_numbers = #tpu.dot_dimension_numbers<[1], [0], [0], [1], [0, 0, 1, 1], [], []>} : vector<16x32xf32>, vector<32x32xf32>, vector<16x32xf32> -> vector<16x32xf32>
    %c0_18 = arith.constant 0 : index
    %c0_19 = arith.constant 0 : index
    %27 = vector.load %arg4[%c0_18, %c0_19] : memref<1x32xf32, #tpu.memory_space<vmem>>, vector<1x32xf32>
    %28 = vector.broadcast %27 : vector<1x32xf32> to vector<16x32xf32>
    %29 = arith.addf %26, %28 : vector<16x32xf32>
    %cst_20 = arith.constant 0.000000e+00 : f32
    %30 = vector.broadcast %cst_20 : f32 to vector<16x32xf32>
    %31 = arith.maximumf %29, %30 : vector<16x32xf32>
    %c0_21 = arith.constant 0 : index
    %c0_22 = arith.constant 0 : index
    %32 = vector.load %arg9[%c0_21, %c0_22] : memref<16x32xf32, #tpu.memory_space<vmem>>, vector<16x32xf32>
    tpu.vector_store %arg9[%c0_21, %c0_22], %31 {strides = array<i32>} : memref<16x32xf32, #tpu.memory_space<vmem>>, vector<16x32xf32>,
    %c0_23 = arith.constant 0 : index
    %c0_24 = arith.constant 0 : index
    %33 = vector.load %arg5[%c0_23, %c0_24] : memref<1x32xf32, #tpu.memory_space<vmem>>, vector<1x32xf32>
    %cst_25 = arith.constant dense<0.000000e+00> : vector<1x16xf32>
    %34 = tpu.matmul %33, %31, %cst_25 {dimension_numbers = #tpu.dot_dimension_numbers<[1], [1], [0], [0], [0, 0, 1, 0], [], []>} : vector<1x32xf32>, vector<16x32xf32>, vector<1x16xf32> -> vector<1x16xf32>
    %c0_26 = arith.constant 0 : index
    %c0_27 = arith.constant 0 : index
    %35 = vector.load %arg6[%c0_26, %c0_27] : memref<1x1xf32, #tpu.memory_space<vmem>>, vector<1x1xf32>
    %36 = vector.broadcast %35 : vector<1x1xf32> to vector<1x16xf32>
    %37 = arith.addf %34, %36 : vector<1x16xf32>
    %38 = arith.negf %37 : vector<1x16xf32>
    %39 = math.exp %38 : vector<1x16xf32>
    %cst_28 = arith.constant 1.000000e+00 : f32
    %40 = vector.broadcast %cst_28 : f32 to vector<1x16xf32>
    %41 = arith.addf %40, %39 : vector<1x16xf32>
    %42 = arith.divf %40, %41 : vector<1x16xf32>
    %c0_29 = arith.constant 0 : index
    %c0_30 = arith.constant 0 : index
    %43 = vector.load %arg10[%c0_29, %c0_30] : memref<1x16xf32, #tpu.memory_space<vmem>>, vector<1x16xf32>
    tpu.vector_store %arg10[%c0_29, %c0_30], %42 {strides = array<i32>} : memref<1x16xf32, #tpu.memory_space<vmem>>, vector<1x16xf32>,
    return
  }
}

module attributes {stable_mosaic.version = 11 : i64} {
  func.func @_down_kernel(%arg0: memref<14x16xf32, #tpu.memory_space<vmem>>, %arg1: memref<16x14xf32, #tpu.memory_space<vmem>>, %arg2: memref<14x32xf32, #tpu.memory_space<vmem>>, %arg3: memref<32x32xf32, #tpu.memory_space<vmem>>, %arg4: memref<1x32xf32, #tpu.memory_space<vmem>>, %arg5: memref<1x32xf32, #tpu.memory_space<vmem>>, %arg6: memref<1x1xf32, #tpu.memory_space<vmem>>, %arg7: memref<14x14xf32, #tpu.memory_space<vmem>>, %arg8: memref<14x32xf32, #tpu.memory_space<vmem>>, %arg9: memref<1x14xf32, #tpu.memory_space<vmem>>) attributes {dimension_semantics = [], scalar_prefetch = 0 : i64, scratch_operands = 0 : i64, tpu.core_type = #tpu.core_type<tc>} {
    %c0 = arith.constant 0 : index
    %c0_0 = arith.constant 0 : index
    %0 = vector.load %arg0[%c0, %c0_0] : memref<14x16xf32, #tpu.memory_space<vmem>>, vector<14x16xf32>
    %cst = arith.constant 0.000000e+00 : f32
    %1 = vector.broadcast %cst : f32 to vector<14x16xf32>
    %2 = arith.cmpf one, %0, %1 : vector<14x16xf32>
    %3 = arith.extui %2 : vector<14x16xi1> to vector<14x16xi32>
    %4 = arith.sitofp %3 : vector<14x16xi32> to vector<14x16xf32>
    %5 = arith.truncf %4 : vector<14x16xf32> to vector<14x16xbf16>
    %c0_1 = arith.constant 0 : index
    %c0_2 = arith.constant 0 : index
    %6 = vector.load %arg1[%c0_1, %c0_2] : memref<16x14xf32, #tpu.memory_space<vmem>>, vector<16x14xf32>
    %cst_3 = arith.constant 0.000000e+00 : f32
    %7 = vector.broadcast %cst_3 : f32 to vector<16x14xf32>
    %8 = arith.cmpf one, %6, %7 : vector<16x14xf32>
    %9 = arith.extui %8 : vector<16x14xi1> to vector<16x14xi32>
    %10 = arith.sitofp %9 : vector<16x14xi32> to vector<16x14xf32>
    %11 = arith.truncf %10 : vector<16x14xf32> to vector<16x14xbf16>
    %cst_4 = arith.constant dense<0.000000e+00> : vector<14x14xf32>
    %12 = tpu.matmul %5, %11, %cst_4 {dimension_numbers = #tpu.dot_dimension_numbers<[1], [0], [0], [1], [0, 0, 1, 1], [], []>} : vector<14x16xbf16>, vector<16x14xbf16>, vector<14x14xf32> -> vector<14x14xf32>
    %cst_5 = arith.constant 0.000000e+00 : f32
    %13 = vector.broadcast %cst_5 : f32 to vector<14x14xf32>
    %14 = arith.cmpf one, %12, %13 : vector<14x14xf32>
    %15 = arith.extui %14 : vector<14x14xi1> to vector<14x14xi32>
    %16 = arith.sitofp %15 : vector<14x14xi32> to vector<14x14xf32>
    %cst_6 = arith.constant dense<0.000000e+00> : vector<14xf32>
    %17 = vector.multi_reduction <add>, %16, %cst_6 [1] : vector<14x14xf32> to vector<14xf32>
    %18 = vector.shape_cast %17 : vector<14xf32> to vector<14x1xf32>
    %19 = tpu.transpose %18, [1, 0] : vector<14x1xf32> -> vector<1x14xf32>
    %20 = vector.broadcast %19 : vector<1x14xf32> to vector<14x14xf32>
    %21 = arith.divf %16, %20 : vector<14x14xf32>
    %c0_7 = arith.constant 0 : index
    %c0_8 = arith.constant 0 : index
    %22 = vector.load %arg7[%c0_7, %c0_8] : memref<14x14xf32, #tpu.memory_space<vmem>>, vector<14x14xf32>
    tpu.vector_store %arg7[%c0_7, %c0_8], %21 {strides = array<i32>} : memref<14x14xf32, #tpu.memory_space<vmem>>, vector<14x14xf32>,
    %c0_9 = arith.constant 0 : index
    %c0_10 = arith.constant 0 : index
    %23 = vector.load %arg2[%c0_9, %c0_10] : memref<14x32xf32, #tpu.memory_space<vmem>>, vector<14x32xf32>
    %cst_11 = arith.constant dense<0.000000e+00> : vector<14x32xf32>
    %24 = tpu.matmul %21, %23, %cst_11 {dimension_numbers = #tpu.dot_dimension_numbers<[1], [0], [0], [1], [0, 0, 1, 1], [], []>} : vector<14x14xf32>, vector<14x32xf32>, vector<14x32xf32> -> vector<14x32xf32>
    %c0_12 = arith.constant 0 : index
    %c0_13 = arith.constant 0 : index
    %25 = vector.load %arg3[%c0_12, %c0_13] : memref<32x32xf32, #tpu.memory_space<vmem>>, vector<32x32xf32>
    %cst_14 = arith.constant dense<0.000000e+00> : vector<14x32xf32>
    %26 = tpu.matmul %24, %25, %cst_14 {dimension_numbers = #tpu.dot_dimension_numbers<[1], [0], [0], [1], [0, 0, 1, 1], [], []>} : vector<14x32xf32>, vector<32x32xf32>, vector<14x32xf32> -> vector<14x32xf32>
    %c0_15 = arith.constant 0 : index
    %c0_16 = arith.constant 0 : index
    %27 = vector.load %arg4[%c0_15, %c0_16] : memref<1x32xf32, #tpu.memory_space<vmem>>, vector<1x32xf32>
    %28 = vector.broadcast %27 : vector<1x32xf32> to vector<14x32xf32>
    %29 = arith.addf %26, %28 : vector<14x32xf32>
    %cst_17 = arith.constant 0.000000e+00 : f32
    %30 = vector.broadcast %cst_17 : f32 to vector<14x32xf32>
    %31 = arith.maximumf %29, %30 : vector<14x32xf32>
    %c0_18 = arith.constant 0 : index
    %c0_19 = arith.constant 0 : index
    %32 = vector.load %arg8[%c0_18, %c0_19] : memref<14x32xf32, #tpu.memory_space<vmem>>, vector<14x32xf32>
    tpu.vector_store %arg8[%c0_18, %c0_19], %31 {strides = array<i32>} : memref<14x32xf32, #tpu.memory_space<vmem>>, vector<14x32xf32>,
    %c0_20 = arith.constant 0 : index
    %c0_21 = arith.constant 0 : index
    %33 = vector.load %arg5[%c0_20, %c0_21] : memref<1x32xf32, #tpu.memory_space<vmem>>, vector<1x32xf32>
    %cst_22 = arith.constant dense<0.000000e+00> : vector<1x14xf32>
    %34 = tpu.matmul %33, %31, %cst_22 {dimension_numbers = #tpu.dot_dimension_numbers<[1], [1], [0], [0], [0, 0, 1, 0], [], []>} : vector<1x32xf32>, vector<14x32xf32>, vector<1x14xf32> -> vector<1x14xf32>
    %c0_23 = arith.constant 0 : index
    %c0_24 = arith.constant 0 : index
    %35 = vector.load %arg6[%c0_23, %c0_24] : memref<1x1xf32, #tpu.memory_space<vmem>>, vector<1x1xf32>
    %36 = vector.broadcast %35 : vector<1x1xf32> to vector<1x14xf32>
    %37 = arith.addf %34, %36 : vector<1x14xf32>
    %38 = arith.negf %37 : vector<1x14xf32>
    %39 = math.exp %38 : vector<1x14xf32>
    %cst_25 = arith.constant 1.000000e+00 : f32
    %40 = vector.broadcast %cst_25 : f32 to vector<1x14xf32>
    %41 = arith.addf %40, %39 : vector<1x14xf32>
    %42 = arith.divf %40, %41 : vector<1x14xf32>
    %c0_26 = arith.constant 0 : index
    %c0_27 = arith.constant 0 : index
    %43 = vector.load %arg9[%c0_26, %c0_27] : memref<1x14xf32, #tpu.memory_space<vmem>>, vector<1x14xf32>
    tpu.vector_store %arg9[%c0_26, %c0_27], %42 {strides = array<i32>} : memref<1x14xf32, #tpu.memory_space<vmem>>, vector<1x14xf32>,
    return
  }
}

module attributes {stable_mosaic.version = 11 : i64} {
  func.func @_bottom_kernel(%arg0: memref<9x14xf32, #tpu.memory_space<vmem>>, %arg1: memref<14x9xf32, #tpu.memory_space<vmem>>, %arg2: memref<9x32xf32, #tpu.memory_space<vmem>>, %arg3: memref<32x32xf32, #tpu.memory_space<vmem>>, %arg4: memref<1x32xf32, #tpu.memory_space<vmem>>, %arg5: memref<9x32xf32, #tpu.memory_space<vmem>>) attributes {dimension_semantics = [], scalar_prefetch = 0 : i64, scratch_operands = 0 : i64, tpu.core_type = #tpu.core_type<tc>} {
    %c0 = arith.constant 0 : index
    %c0_0 = arith.constant 0 : index
    %0 = vector.load %arg0[%c0, %c0_0] : memref<9x14xf32, #tpu.memory_space<vmem>>, vector<9x14xf32>
    %cst = arith.constant 0.000000e+00 : f32
    %1 = vector.broadcast %cst : f32 to vector<9x14xf32>
    %2 = arith.cmpf one, %0, %1 : vector<9x14xf32>
    %3 = arith.extui %2 : vector<9x14xi1> to vector<9x14xi32>
    %4 = arith.sitofp %3 : vector<9x14xi32> to vector<9x14xf32>
    %5 = arith.truncf %4 : vector<9x14xf32> to vector<9x14xbf16>
    %c0_1 = arith.constant 0 : index
    %c0_2 = arith.constant 0 : index
    %6 = vector.load %arg1[%c0_1, %c0_2] : memref<14x9xf32, #tpu.memory_space<vmem>>, vector<14x9xf32>
    %cst_3 = arith.constant 0.000000e+00 : f32
    %7 = vector.broadcast %cst_3 : f32 to vector<14x9xf32>
    %8 = arith.cmpf one, %6, %7 : vector<14x9xf32>
    %9 = arith.extui %8 : vector<14x9xi1> to vector<14x9xi32>
    %10 = arith.sitofp %9 : vector<14x9xi32> to vector<14x9xf32>
    %11 = arith.truncf %10 : vector<14x9xf32> to vector<14x9xbf16>
    %cst_4 = arith.constant dense<0.000000e+00> : vector<9x9xf32>
    %12 = tpu.matmul %5, %11, %cst_4 {dimension_numbers = #tpu.dot_dimension_numbers<[1], [0], [0], [1], [0, 0, 1, 1], [], []>} : vector<9x14xbf16>, vector<14x9xbf16>, vector<9x9xf32> -> vector<9x9xf32>
    %cst_5 = arith.constant 0.000000e+00 : f32
    %13 = vector.broadcast %cst_5 : f32 to vector<9x9xf32>
    %14 = arith.cmpf one, %12, %13 : vector<9x9xf32>
    %15 = arith.extui %14 : vector<9x9xi1> to vector<9x9xi32>
    %16 = arith.sitofp %15 : vector<9x9xi32> to vector<9x9xf32>
    %cst_6 = arith.constant dense<0.000000e+00> : vector<9xf32>
    %17 = vector.multi_reduction <add>, %16, %cst_6 [1] : vector<9x9xf32> to vector<9xf32>
    %18 = vector.shape_cast %17 : vector<9xf32> to vector<9x1xf32>
    %19 = tpu.transpose %18, [1, 0] : vector<9x1xf32> -> vector<1x9xf32>
    %20 = vector.broadcast %19 : vector<1x9xf32> to vector<9x9xf32>
    %21 = arith.divf %16, %20 : vector<9x9xf32>
    %c0_7 = arith.constant 0 : index
    %c0_8 = arith.constant 0 : index
    %22 = vector.load %arg2[%c0_7, %c0_8] : memref<9x32xf32, #tpu.memory_space<vmem>>, vector<9x32xf32>
    %cst_9 = arith.constant dense<0.000000e+00> : vector<9x32xf32>
    %23 = tpu.matmul %21, %22, %cst_9 {dimension_numbers = #tpu.dot_dimension_numbers<[1], [0], [0], [1], [0, 0, 1, 1], [], []>} : vector<9x9xf32>, vector<9x32xf32>, vector<9x32xf32> -> vector<9x32xf32>
    %c0_10 = arith.constant 0 : index
    %c0_11 = arith.constant 0 : index
    %24 = vector.load %arg3[%c0_10, %c0_11] : memref<32x32xf32, #tpu.memory_space<vmem>>, vector<32x32xf32>
    %cst_12 = arith.constant dense<0.000000e+00> : vector<9x32xf32>
    %25 = tpu.matmul %23, %24, %cst_12 {dimension_numbers = #tpu.dot_dimension_numbers<[1], [0], [0], [1], [0, 0, 1, 1], [], []>} : vector<9x32xf32>, vector<32x32xf32>, vector<9x32xf32> -> vector<9x32xf32>
    %c0_13 = arith.constant 0 : index
    %c0_14 = arith.constant 0 : index
    %26 = vector.load %arg4[%c0_13, %c0_14] : memref<1x32xf32, #tpu.memory_space<vmem>>, vector<1x32xf32>
    %27 = vector.broadcast %26 : vector<1x32xf32> to vector<9x32xf32>
    %28 = arith.addf %25, %27 : vector<9x32xf32>
    %cst_15 = arith.constant 0.000000e+00 : f32
    %29 = vector.broadcast %cst_15 : f32 to vector<9x32xf32>
    %30 = arith.maximumf %28, %29 : vector<9x32xf32>
    %c0_16 = arith.constant 0 : index
    %c0_17 = arith.constant 0 : index
    %31 = vector.load %arg5[%c0_16, %c0_17] : memref<9x32xf32, #tpu.memory_space<vmem>>, vector<9x32xf32>
    tpu.vector_store %arg5[%c0_16, %c0_17], %30 {strides = array<i32>} : memref<9x32xf32, #tpu.memory_space<vmem>>, vector<9x32xf32>,
    return
  }
}

module attributes {stable_mosaic.version = 11 : i64} {
  func.func @_up_skip_kernel(%arg0: memref<14x14xf32, #tpu.memory_space<vmem>>, %arg1: memref<14x32xf32, #tpu.memory_space<vmem>>, %arg2: memref<32x32xf32, #tpu.memory_space<vmem>>, %arg3: memref<1x32xf32, #tpu.memory_space<vmem>>, %arg4: memref<14x32xf32, #tpu.memory_space<vmem>>, %arg5: memref<14x32xf32, #tpu.memory_space<vmem>>) attributes {dimension_semantics = [], scalar_prefetch = 0 : i64, scratch_operands = 0 : i64, tpu.core_type = #tpu.core_type<tc>} {
    %c0 = arith.constant 0 : index
    %c0_0 = arith.constant 0 : index
    %0 = vector.load %arg0[%c0, %c0_0] : memref<14x14xf32, #tpu.memory_space<vmem>>, vector<14x14xf32>
    %c0_1 = arith.constant 0 : index
    %c0_2 = arith.constant 0 : index
    %1 = vector.load %arg1[%c0_1, %c0_2] : memref<14x32xf32, #tpu.memory_space<vmem>>, vector<14x32xf32>
    %cst = arith.constant dense<0.000000e+00> : vector<14x32xf32>
    %2 = tpu.matmul %0, %1, %cst {dimension_numbers = #tpu.dot_dimension_numbers<[1], [0], [0], [1], [0, 0, 1, 1], [], []>} : vector<14x14xf32>, vector<14x32xf32>, vector<14x32xf32> -> vector<14x32xf32>
    %c0_3 = arith.constant 0 : index
    %c0_4 = arith.constant 0 : index
    %3 = vector.load %arg2[%c0_3, %c0_4] : memref<32x32xf32, #tpu.memory_space<vmem>>, vector<32x32xf32>
    %cst_5 = arith.constant dense<0.000000e+00> : vector<14x32xf32>
    %4 = tpu.matmul %2, %3, %cst_5 {dimension_numbers = #tpu.dot_dimension_numbers<[1], [0], [0], [1], [0, 0, 1, 1], [], []>} : vector<14x32xf32>, vector<32x32xf32>, vector<14x32xf32> -> vector<14x32xf32>
    %c0_6 = arith.constant 0 : index
    %c0_7 = arith.constant 0 : index
    %5 = vector.load %arg3[%c0_6, %c0_7] : memref<1x32xf32, #tpu.memory_space<vmem>>, vector<1x32xf32>
    %6 = vector.broadcast %5 : vector<1x32xf32> to vector<14x32xf32>
    %7 = arith.addf %4, %6 : vector<14x32xf32>
    %cst_8 = arith.constant 0.000000e+00 : f32
    %8 = vector.broadcast %cst_8 : f32 to vector<14x32xf32>
    %9 = arith.maximumf %7, %8 : vector<14x32xf32>
    %c0_9 = arith.constant 0 : index
    %c0_10 = arith.constant 0 : index
    %10 = vector.load %arg4[%c0_9, %c0_10] : memref<14x32xf32, #tpu.memory_space<vmem>>, vector<14x32xf32>
    %11 = arith.addf %9, %10 : vector<14x32xf32>
    %c0_11 = arith.constant 0 : index
    %c0_12 = arith.constant 0 : index
    %12 = vector.load %arg5[%c0_11, %c0_12] : memref<14x32xf32, #tpu.memory_space<vmem>>, vector<14x32xf32>
    tpu.vector_store %arg5[%c0_11, %c0_12], %11 {strides = array<i32>} : memref<14x32xf32, #tpu.memory_space<vmem>>, vector<14x32xf32>,
    return
  }
}

module attributes {stable_mosaic.version = 11 : i64} {
  func.func @_up_end_kernel(%arg0: memref<16x16xf32, #tpu.memory_space<vmem>>, %arg1: memref<16x32xf32, #tpu.memory_space<vmem>>, %arg2: memref<32x32xf32, #tpu.memory_space<vmem>>, %arg3: memref<1x32xf32, #tpu.memory_space<vmem>>, %arg4: memref<16x32xf32, #tpu.memory_space<vmem>>, %arg5: memref<16x32xf32, #tpu.memory_space<vmem>>, %arg6: memref<32x32xf32, #tpu.memory_space<vmem>>, %arg7: memref<32x32xf32, #tpu.memory_space<vmem>>, %arg8: memref<1x32xf32, #tpu.memory_space<vmem>>, %arg9: memref<16x32xf32, #tpu.memory_space<vmem>>) attributes {dimension_semantics = [], scalar_prefetch = 0 : i64, scratch_operands = 0 : i64, tpu.core_type = #tpu.core_type<tc>} {
    %c0 = arith.constant 0 : index
    %c0_0 = arith.constant 0 : index
    %0 = vector.load %arg0[%c0, %c0_0] : memref<16x16xf32, #tpu.memory_space<vmem>>, vector<16x16xf32>
    %c0_1 = arith.constant 0 : index
    %c0_2 = arith.constant 0 : index
    %1 = vector.load %arg1[%c0_1, %c0_2] : memref<16x32xf32, #tpu.memory_space<vmem>>, vector<16x32xf32>
    %cst = arith.constant dense<0.000000e+00> : vector<16x32xf32>
    %2 = tpu.matmul %0, %1, %cst {dimension_numbers = #tpu.dot_dimension_numbers<[1], [0], [0], [1], [0, 0, 1, 1], [], []>} : vector<16x16xf32>, vector<16x32xf32>, vector<16x32xf32> -> vector<16x32xf32>
    %c0_3 = arith.constant 0 : index
    %c0_4 = arith.constant 0 : index
    %3 = vector.load %arg2[%c0_3, %c0_4] : memref<32x32xf32, #tpu.memory_space<vmem>>, vector<32x32xf32>
    %cst_5 = arith.constant dense<0.000000e+00> : vector<16x32xf32>
    %4 = tpu.matmul %2, %3, %cst_5 {dimension_numbers = #tpu.dot_dimension_numbers<[1], [0], [0], [1], [0, 0, 1, 1], [], []>} : vector<16x32xf32>, vector<32x32xf32>, vector<16x32xf32> -> vector<16x32xf32>
    %c0_6 = arith.constant 0 : index
    %c0_7 = arith.constant 0 : index
    %5 = vector.load %arg3[%c0_6, %c0_7] : memref<1x32xf32, #tpu.memory_space<vmem>>, vector<1x32xf32>
    %6 = vector.broadcast %5 : vector<1x32xf32> to vector<16x32xf32>
    %7 = arith.addf %4, %6 : vector<16x32xf32>
    %cst_8 = arith.constant 0.000000e+00 : f32
    %8 = vector.broadcast %cst_8 : f32 to vector<16x32xf32>
    %9 = arith.maximumf %7, %8 : vector<16x32xf32>
    %c0_9 = arith.constant 0 : index
    %c0_10 = arith.constant 0 : index
    %10 = vector.load %arg4[%c0_9, %c0_10] : memref<16x32xf32, #tpu.memory_space<vmem>>, vector<16x32xf32>
    %11 = arith.addf %9, %10 : vector<16x32xf32>
    %cst_11 = arith.constant dense<0.000000e+00> : vector<16x32xf32>
    %12 = tpu.matmul %0, %11, %cst_11 {dimension_numbers = #tpu.dot_dimension_numbers<[1], [0], [0], [1], [0, 0, 1, 1], [], []>} : vector<16x16xf32>, vector<16x32xf32>, vector<16x32xf32> -> vector<16x32xf32>
    %c0_12 = arith.constant 0 : index
    %c0_13 = arith.constant 0 : index
    %13 = vector.load %arg5[%c0_12, %c0_13] : memref<16x32xf32, #tpu.memory_space<vmem>>, vector<16x32xf32>
    %cst_14 = arith.constant dense<0.000000e+00> : vector<16x32xf32>
    %14 = tpu.matmul %0, %13, %cst_14 {dimension_numbers = #tpu.dot_dimension_numbers<[1], [0], [0], [1], [0, 0, 1, 1], [], []>} : vector<16x16xf32>, vector<16x32xf32>, vector<16x32xf32> -> vector<16x32xf32>
    %c0_15 = arith.constant 0 : index
    %c0_16 = arith.constant 0 : index
    %15 = vector.load %arg6[%c0_15, %c0_16] : memref<32x32xf32, #tpu.memory_space<vmem>>, vector<32x32xf32>
    %cst_17 = arith.constant dense<0.000000e+00> : vector<16x32xf32>
    %16 = tpu.matmul %12, %15, %cst_17 {dimension_numbers = #tpu.dot_dimension_numbers<[1], [0], [0], [1], [0, 0, 1, 1], [], []>} : vector<16x32xf32>, vector<32x32xf32>, vector<16x32xf32> -> vector<16x32xf32>
    %c0_18 = arith.constant 0 : index
    %c0_19 = arith.constant 0 : index
    %17 = vector.load %arg7[%c0_18, %c0_19] : memref<32x32xf32, #tpu.memory_space<vmem>>, vector<32x32xf32>
    %cst_20 = arith.constant dense<0.000000e+00> : vector<16x32xf32>
    %18 = tpu.matmul %14, %17, %cst_20 {dimension_numbers = #tpu.dot_dimension_numbers<[1], [0], [0], [1], [0, 0, 1, 1], [], []>} : vector<16x32xf32>, vector<32x32xf32>, vector<16x32xf32> -> vector<16x32xf32>
    %19 = arith.addf %16, %18 : vector<16x32xf32>
    %c0_21 = arith.constant 0 : index
    %c0_22 = arith.constant 0 : index
    %20 = vector.load %arg8[%c0_21, %c0_22] : memref<1x32xf32, #tpu.memory_space<vmem>>, vector<1x32xf32>
    %21 = vector.broadcast %20 : vector<1x32xf32> to vector<16x32xf32>
    %22 = arith.addf %19, %21 : vector<16x32xf32>
    %cst_23 = arith.constant 0.000000e+00 : f32
    %23 = vector.broadcast %cst_23 : f32 to vector<16x32xf32>
    %24 = arith.maximumf %22, %23 : vector<16x32xf32>
    %c0_24 = arith.constant 0 : index
    %c0_25 = arith.constant 0 : index
    %25 = vector.load %arg9[%c0_24, %c0_25] : memref<16x32xf32, #tpu.memory_space<vmem>>, vector<16x32xf32>
    tpu.vector_store %arg9[%c0_24, %c0_25], %24 {strides = array<i32>} : memref<16x32xf32, #tpu.memory_space<vmem>>, vector<16x32xf32>,
    return
  }
}

module attributes {stable_mosaic.version = 11 : i64} {
  func.func @_tail_kernel(%arg0: memref<32x16xf32, #tpu.memory_space<vmem>>, %arg1: memref<16x16xf32, #tpu.memory_space<vmem>>, %arg2: memref<16x32xf32, #tpu.memory_space<vmem>>, %arg3: memref<32x32xf32, #tpu.memory_space<vmem>>, %arg4: memref<32x32xf32, #tpu.memory_space<vmem>>, %arg5: memref<32x32xf32, #tpu.memory_space<vmem>>, %arg6: memref<32x32xf32, #tpu.memory_space<vmem>>) attributes {dimension_semantics = [], scalar_prefetch = 0 : i64, scratch_operands = 0 : i64, tpu.core_type = #tpu.core_type<tc>} {
    %c0 = arith.constant 0 : index
    %c0_0 = arith.constant 0 : index
    %0 = vector.load %arg0[%c0, %c0_0] : memref<32x16xf32, #tpu.memory_space<vmem>>, vector<32x16xf32>
    %c0_1 = arith.constant 0 : index
    %c0_2 = arith.constant 0 : index
    %1 = vector.load %arg1[%c0_1, %c0_2] : memref<16x16xf32, #tpu.memory_space<vmem>>, vector<16x16xf32>
    %cst = arith.constant dense<0.000000e+00> : vector<32x16xf32>
    %2 = tpu.matmul %0, %1, %cst {dimension_numbers = #tpu.dot_dimension_numbers<[1], [1], [0], [0], [0, 0, 1, 0], [], []>} : vector<32x16xf32>, vector<16x16xf32>, vector<32x16xf32> -> vector<32x16xf32>
    %c0_3 = arith.constant 0 : index
    %c0_4 = arith.constant 0 : index
    %3 = vector.load %arg2[%c0_3, %c0_4] : memref<16x32xf32, #tpu.memory_space<vmem>>, vector<16x32xf32>
    %cst_5 = arith.constant dense<0.000000e+00> : vector<32x32xf32>
    %4 = tpu.matmul %2, %3, %cst_5 {dimension_numbers = #tpu.dot_dimension_numbers<[1], [0], [0], [1], [0, 0, 1, 1], [], []>} : vector<32x16xf32>, vector<16x32xf32>, vector<32x32xf32> -> vector<32x32xf32>
    %5 = math.absf %4 : vector<32x32xf32>
    %6 = tpu.iota {dimensions = array<i32: 0>} : vector<32x32xi32>
    %7 = tpu.iota {dimensions = array<i32: 1>} : vector<32x32xi32>
    %8 = arith.cmpi eq, %6, %7 : vector<32x32xi32>
    %cst_6 = arith.constant 1.000000e+00 : f32
    %9 = vector.broadcast %cst_6 : f32 to vector<32x32xf32>
    %10 = arith.select %8, %9, %5 : vector<32x32xi1>, vector<32x32xf32>
    %c0_7 = arith.constant 0 : index
    %c0_8 = arith.constant 0 : index
    %11 = vector.load %arg5[%c0_7, %c0_8] : memref<32x32xf32, #tpu.memory_space<vmem>>, vector<32x32xf32>
    tpu.vector_store %arg5[%c0_7, %c0_8], %10 {strides = array<i32>} : memref<32x32xf32, #tpu.memory_space<vmem>>, vector<32x32xf32>,
    %cst_9 = arith.constant dense<0.000000e+00> : vector<32x32xf32>
    %12 = tpu.matmul %10, %10, %cst_9 {dimension_numbers = #tpu.dot_dimension_numbers<[1], [1], [0], [0], [0, 0, 1, 0], [], []>} : vector<32x32xf32>, vector<32x32xf32>, vector<32x32xf32> -> vector<32x32xf32>
    %13 = tpu.transpose %12, [1, 0] : vector<32x32xf32> -> vector<32x32xf32>
    %14 = arith.addf %12, %13 : vector<32x32xf32>
    %cst_10 = arith.constant 5.000000e-01 : f32
    %15 = vector.broadcast %cst_10 : f32 to vector<32x32xf32>
    %16 = arith.mulf %14, %15 : vector<32x32xf32>
    %cst_11 = arith.constant 1.000000e+00 : f32
    %17 = vector.broadcast %cst_11 : f32 to vector<32x32xf32>
    %18 = arith.select %8, %17, %16 : vector<32x32xi1>, vector<32x32xf32>
    %19 = math.absf %18 : vector<32x32xf32>
    %c0_12 = arith.constant 0 : index
    %c0_13 = arith.constant 0 : index
    %20 = vector.load %arg3[%c0_12, %c0_13] : memref<32x32xf32, #tpu.memory_space<vmem>>, vector<32x32xf32>
    %cst_14 = arith.constant dense<0.000000e+00> : vector<32x32xf32>
    %21 = tpu.matmul %10, %20, %cst_14 {dimension_numbers = #tpu.dot_dimension_numbers<[1], [0], [0], [1], [0, 0, 1, 1], [], []>} : vector<32x32xf32>, vector<32x32xf32>, vector<32x32xf32> -> vector<32x32xf32>
    %cst_15 = arith.constant dense<0.000000e+00> : vector<32x32xf32>
    %22 = tpu.matmul %19, %21, %cst_15 {dimension_numbers = #tpu.dot_dimension_numbers<[1], [0], [0], [1], [0, 0, 1, 1], [], []>} : vector<32x32xf32>, vector<32x32xf32>, vector<32x32xf32> -> vector<32x32xf32>
    %cst_16 = arith.constant 0.000000e+00 : f32
    %23 = vector.broadcast %cst_16 : f32 to vector<32x32xf32>
    %24 = arith.maximumf %22, %23 : vector<32x32xf32>
    %c0_17 = arith.constant 0 : index
    %c0_18 = arith.constant 0 : index
    %25 = vector.load %arg4[%c0_17, %c0_18] : memref<32x32xf32, #tpu.memory_space<vmem>>, vector<32x32xf32>
    %cst_19 = arith.constant dense<0.000000e+00> : vector<32x32xf32>
    %26 = tpu.matmul %10, %25, %cst_19 {dimension_numbers = #tpu.dot_dimension_numbers<[1], [0], [0], [1], [0, 0, 1, 1], [], []>} : vector<32x32xf32>, vector<32x32xf32>, vector<32x32xf32> -> vector<32x32xf32>
    %cst_20 = arith.constant dense<0.000000e+00> : vector<32x32xf32>
    %27 = tpu.matmul %24, %26, %cst_20 {dimension_numbers = #tpu.dot_dimension_numbers<[1], [0], [0], [1], [0, 0, 1, 1], [], []>} : vector<32x32xf32>, vector<32x32xf32>, vector<32x32xf32> -> vector<32x32xf32>
    %cst_21 = arith.constant 0.000000e+00 : f32
    %28 = vector.broadcast %cst_21 : f32 to vector<32x32xf32>
    %29 = arith.maximumf %27, %28 : vector<32x32xf32>
    %30 = tpu.transpose %29, [1, 0] : vector<32x32xf32> -> vector<32x32xf32>
    %31 = arith.addf %29, %30 : vector<32x32xf32>
    %cst_22 = arith.constant 5.000000e-01 : f32
    %32 = vector.broadcast %cst_22 : f32 to vector<32x32xf32>
    %33 = arith.mulf %31, %32 : vector<32x32xf32>
    %cst_23 = arith.constant 1.000000e+00 : f32
    %34 = vector.broadcast %cst_23 : f32 to vector<32x32xf32>
    %35 = arith.select %8, %34, %33 : vector<32x32xi1>, vector<32x32xf32>
    %36 = math.absf %35 : vector<32x32xf32>
    %c0_24 = arith.constant 0 : index
    %c0_25 = arith.constant 0 : index
    %37 = vector.load %arg6[%c0_24, %c0_25] : memref<32x32xf32, #tpu.memory_space<vmem>>, vector<32x32xf32>
    tpu.vector_store %arg6[%c0_24, %c0_25], %36 {strides = array<i32>} : memref<32x32xf32, #tpu.memory_space<vmem>>, vector<32x32xf32>,
    return
  }
}

</mosaic_0001>

<llo_original>
// kernel: _lambda_.6
$region0: #{_lambda_.6}
  #allocation0 [shape = 'u32[]', space=smem, size = 0x4, offset = 0x4, fixed_abs, tag = 'smem constant byte address 0x4 - core index']
  #allocation1 [shape = 'u32[72,128]{1,0:T(1,128)}', space=vmem, size = 0x9000, scoped, tag = 'internal scratch']
  #allocation2 [shape = 'f32[1,1]{1,0:T(1,128)S(1)}', space=vmem, size = 0x200, scoped, tag = 'scoped memory for _lambda_.6']
  %s0 = inlined_call_operand.vmem [shape: f32[16,16], index: 0, kind: input, shape index: {}]
  %s1 = inlined_call_operand.hbm [shape: f32[16,32], index: 1, kind: input, shape index: {}]
  %s2 = inlined_call_operand.vmem [shape: f32[1,32], index: 2, kind: input, shape index: {}]
  %s3 = inlined_call_operand.hbm [shape: f32[32,32], index: 3, kind: input, shape index: {}]
  %s4 = inlined_call_operand.vmem [shape: f32[1,32], index: 4, kind: input, shape index: {}]
  %s5 = inlined_call_operand.vmem [shape: f32[1,32], index: 5, kind: input, shape index: {}]
  %s6 = inlined_call_operand.<no memory space> [shape: f32[1,1], index: 6, kind: input, shape index: {}]
  %s7 = inlined_call_operand.vmem [shape: f32[16,16], index: 7, kind: output, shape index: {0}]
  %s8 = inlined_call_operand.vmem [shape: f32[16,32], index: 8, kind: output, shape index: {1}]
  %s9 = inlined_call_operand.vmem [shape: f32[16,32], index: 9, kind: output, shape index: {2}]
  %s10 = inlined_call_operand.vmem [shape: f32[1,16], index: 10, kind: output, shape index: {3}]
  %11 = xla_tuple %s7, %s8, %s9, %s10
  %s12 = sld [smem:[#allocation0]]
  $region70: #{_lambda_.6} parent=0
    _
  %s14 = ssub.s32 1, %s12
  %s15 = scalar_select 0, %s14, %s12
  %v16 = vstv %s6
  %17 = vst [vmem:[#allocation2] sm:$0x1] %v16
  $region1: #{_lambda_.6} parent=0
    #allocation3 [shape = 'u8[8192]{0}', space=vmem, size = 0x2000, scoped, tag = 'input window, operand 1, single buffered']
    #allocation4 [shape = 's32[1]{0}', space=sflag, size = 0x4, scoped, tag = 'scoped memory for _lambda_.6']
    #allocation5 [shape = 'u8[16384]{0}', space=vmem, size = 0x4000, scoped, tag = 'input window, operand 3, single buffered']
    #allocation6 [shape = 's32[1]{0}', space=sflag, size = 0x4, scoped, tag = 'scoped memory for _lambda_.6']
    %18 = vsyncpa [#allocation4], 0
    %19 = vsyncpa [#allocation6], 0
    // Predicated region
    $region2: #{_lambda_.6} parent=1 // pred_check
      _
    $region3: #{_lambda_.6} parent=1 // pred_check_branch
      %21 = sbr.rel (0) target = $region5
    $region4: #{_lambda_.6} parent=1 // pred_region
      _
    $region5: #{_lambda_.6} parent=1 // pred_fallthru
      _
    // Predicated region
    $region6: #{_lambda_.6} parent=1 // pred_check
      _
    $region7: #{_lambda_.6} parent=1 // pred_check_branch
      %23 = sbr.rel (0) target = $region9
    $region8: #{_lambda_.6} parent=1 // pred_region
      %25 = vsyncadd [#allocation4], 0
      %s26 = sshll.u32 %s1, 4
      %s27 = int_to_ptr.hbm [resolvable:$true] %s26
      %s28 = sshll.u32 [#allocation3], 4
      %s29 = int_to_ptr.vmem [resolvable:$true] %s28
      %34 = dma.hbm_to_vmem [thread:$0]  %s27, 256, %s29, [#allocation4], 128, 128, 8
    $region9: #{_lambda_.6} parent=1 // pred_fallthru
      _
    // Predicated region
    $region10: #{_lambda_.6} parent=1 // pred_check
      _
    $region11: #{_lambda_.6} parent=1 // pred_check_branch
      %36 = sbr.rel (0) target = $region13
    $region12: #{_lambda_.6} parent=1 // pred_region
      _
    $region13: #{_lambda_.6} parent=1 // pred_fallthru
      _
    // Predicated region
    $region14: #{_lambda_.6} parent=1 // pred_check
      _
    $region15: #{_lambda_.6} parent=1 // pred_check_branch
      %38 = sbr.rel (0) target = $region17
    $region16: #{_lambda_.6} parent=1 // pred_region
      %40 = vsyncadd [#allocation6], 0
      %s41 = sshll.u32 %s3, 4
      %s42 = int_to_ptr.hbm [resolvable:$true] %s41
      %s43 = sshll.u32 [#allocation5], 4
      %s44 = int_to_ptr.vmem [resolvable:$true] %s43
      %49 = dma.hbm_to_vmem [thread:$0]  %s42, 512, %s44, [#allocation6], 128, 128, 8
    $region17: #{_lambda_.6} parent=1 // pred_fallthru
      _
    // Predicated region
    $region18: #{_lambda_.6} parent=1 // pred_check
      _
    $region19: #{_lambda_.6} parent=1 // pred_check_branch
      %51 = sbr.rel (0) target = $region21
    $region20: #{_lambda_.6} parent=1 // pred_region
      _
    $region21: #{_lambda_.6} parent=1 // pred_fallthru
      _
    // Predicated region
    $region22: #{_lambda_.6} parent=1 // pred_check
      _
    $region23: #{_lambda_.6} parent=1 // pred_check_branch
      %53 = sbr.rel (0) target = $region25
    $region24: #{_lambda_.6} parent=1 // pred_region
      _
    $region25: #{_lambda_.6} parent=1 // pred_fallthru
      _
    // Predicated region
    $region26: #{_lambda_.6} parent=1 // pred_check
      _
    $region27: #{_lambda_.6} parent=1 // pred_check_branch
      %55 = sbr.rel (0) target = $region29
    $region28: #{_lambda_.6} parent=1 // pred_region
      _
    $region29: #{_lambda_.6} parent=1 // pred_fallthru
      _
    // Predicated region
    $region30: #{_lambda_.6} parent=1 // pred_check
      _
    $region31: #{_lambda_.6} parent=1 // pred_check_branch
      %57 = sbr.rel (0) target = $region33
    $region32: #{_lambda_.6} parent=1 // pred_region
      %59 = dma.done [#allocation4], 256
    $region33: #{_lambda_.6} parent=1 // pred_fallthru
      _
    // Predicated region
    $region34: #{_lambda_.6} parent=1 // pred_check
      _
    $region35: #{_lambda_.6} parent=1 // pred_check_branch
      %61 = sbr.rel (0) target = $region37
    $region36: #{_lambda_.6} parent=1 // pred_region
      %63 = dma.done [#allocation6], 512
    $region37: #{_lambda_.6} parent=1 // pred_fallthru
      _
    %v64 = vld [vmem:[%s0] sm:$0xff]
    %v65 = vld [vmem:[%s0 + $0x8] sm:$0xff]
    %vm66 = vcmask 130048
    %v67 = vsel %vm66, %v64, 0.0
    %68 = vadd.xlane.f32.xlu0 %v67
    %v69 = vpop.xlane.xlu0 %68
    %v70 = vsel %vm66, %v65, 0.0
    %71 = vadd.xlane.f32.xlu0 %v70
    %v72 = vpop.xlane.xlu0 %71
    %v73 = vrsqrt.pop %v69
    %v74 = vmul.f32 %v73, %v69
    %v75 = vmul.f32 %v74, %v73
    %v76 = vmul.f32 0.5, %v75
    %v77 = vsub.f32 1.5, %v76
    %v78 = vmul.f32 %v73, %v77
    %vm79 = vweird.f32 %v69
    %vm80 = vweird.f32 %v73
    %vm81 = vmor %vm79, %vm80
    %v82 = vsel %vm81, %v73, %v78
    %v83 = vrsqrt.pop %v72
    %v84 = vmul.f32 %v83, %v72
    %v85 = vmul.f32 %v84, %v83
    %v86 = vmul.f32 0.5, %v85
    %v87 = vsub.f32 1.5, %v86
    %v88 = vmul.f32 %v83, %v87
    %vm89 = vweird.f32 %v72
    %vm90 = vweird.f32 %v83
    %vm91 = vmor %vm89, %vm90
    %v92 = vsel %vm91, %v83, %v88
    %vm93 = vcmp.eq.f32.partialorder %v69, 0.0
    %vm94 = vcmp.eq.f32.partialorder %v72, 0.0
    %v95 = vsel %vm93, 0.0, %v82
    %v96 = vsel %vm94, 0.0, %v92
    %97 = vxpose.xlu0.b32.start [1/16] %v64, 128
    %98 = vxpose.xlu0.b32.cont [2/16] %v65, 128
    %99 = vxpose.xlu0.b32.cont [3/16] 0.0, 128
    %100 = vxpose.xlu0.b32.cont [4/16] 0.0, 128
    %101 = vxpose.xlu0.b32.cont [5/16] 0.0, 128
    %102 = vxpose.xlu0.b32.cont [6/16] 0.0, 128
    %103 = vxpose.xlu0.b32.cont [7/16] 0.0, 128
    %104 = vxpose.xlu0.b32.cont [8/16] 0.0, 128
    %105 = vxpose.xlu0.b32.cont [9/16] 0.0, 128
    %106 = vxpose.xlu0.b32.cont [10/16] 0.0, 128
    %107 = vxpose.xlu0.b32.cont [11/16] 0.0, 128
    %108 = vxpose.xlu0.b32.cont [12/16] 0.0, 128
    %109 = vxpose.xlu0.b32.cont [13/16] 0.0, 128
    %110 = vxpose.xlu0.b32.cont [14/16] 0.0, 128
    %111 = vxpose.xlu0.b32.cont [15/16] 0.0, 128
    %112 = vxpose.xlu0.b32.end [16/16] 0.0, 128
    %v113 = vpop.trf.xlu0
    %v114 = vpop.trf.xlu0
    %v115 = vpop.trf.xlu0
    %v116 = vpop.trf.xlu0
    %v117 = vpop.trf.xlu0
    %v118 = vpop.trf.xlu0
    %v119 = vpop.trf.xlu0
    %v120 = vpop.trf.xlu0
    %v121 = vpop.trf.xlu0
    %v122 = vpop.trf.xlu0
    %v123 = vpop.trf.xlu0
    %v124 = vpop.trf.xlu0
    %v125 = vpop.trf.xlu0
    %v126 = vpop.trf.xlu0
    %v127 = vpop.trf.xlu0
    %v128 = vpop.trf.xlu0
    %v129 = vmul.f32 %v113, %v95
    %v130 = vmul.f32 %v114, %v96
    %131 = vxpose.xlu0.b32.start [1/16] %v95, 128
    %132 = vxpose.xlu0.b32.cont [2/16] %v96, 128
    %133 = vxpose.xlu0.b32.cont [3/16] 0.0, 128
    %134 = vxpose.xlu0.b32.cont [4/16] 0.0, 128
    %135 = vxpose.xlu0.b32.cont [5/16] 0.0, 128
    %136 = vxpose.xlu0.b32.cont [6/16] 0.0, 128
    %137 = vxpose.xlu0.b32.cont [7/16] 0.0, 128
    %138 = vxpose.xlu0.b32.cont [8/16] 0.0, 128
    %139 = vxpose.xlu0.b32.cont [9/16] 0.0, 128
    %140 = vxpose.xlu0.b32.cont [10/16] 0.0, 128
    %141 = vxpose.xlu0.b32.cont [11/16] 0.0, 128
    %142 = vxpose.xlu0.b32.cont [12/16] 0.0, 128
    %143 = vxpose.xlu0.b32.cont [13/16] 0.0, 128
    %144 = vxpose.xlu0.b32.cont [14/16] 0.0, 128
    %145 = vxpose.xlu0.b32.cont [15/16] 0.0, 128
    %146 = vxpose.xlu0.b32.end [16/16] 0.0, 128
    %v147 = vpop.trf.xlu0
    %v148 = vpop.trf.xlu0
    %v149 = vpop.trf.xlu0
    %v150 = vpop.trf.xlu0
    %v151 = vpop.trf.xlu0
    %v152 = vpop.trf.xlu0
    %v153 = vpop.trf.xlu0
    %v154 = vpop.trf.xlu0
    %v155 = vpop.trf.xlu0
    %v156 = vpop.trf.xlu0
    %v157 = vpop.trf.xlu0
    %v158 = vpop.trf.xlu0
    %v159 = vpop.trf.xlu0
    %v160 = vpop.trf.xlu0
    %v161 = vpop.trf.xlu0
    %v162 = vpop.trf.xlu0
    %v163 = vperm.slane %v147, 0
    %v164 = vmul.f32 %v129, %v163
    %v165 = vmul.f32 %v130, %v163
    %166 = vst.msk [vmem:[%s7] sm:$0xff] %vm66, %v164
    %167 = vst.msk [vmem:[%s7 + $0x8] sm:$0xff] %vm66, %v165
    %v169 = vsel %vm66, %v164, 0
    %v172 = vsel %vm66, %v165, 0
    %174 = vmatpush.msra.mxu0 0.0
    %175 = vmatpush.msra.mxu0 0.0
    %176 = vmatpush.msra.mxu0 0.0
    %177 = vmatpush.msra.mxu0 0.0
    %178 = vmatpush.msra.mxu0 0.0
    %179 = vmatpush.msra.mxu0 0.0
    %180 = vmatpush.msra.mxu0 0.0
    %181 = vmatpush.msra.mxu0 0.0
    %182 = vmatpush.msra.mxu0 0.0
    %183 = vmatpush.msra.mxu0 0.0
    %184 = vmatpush.msra.mxu0 0.0
    %185 = vmatpush.msra.mxu0 0.0
    %186 = vmatpush.msra.mxu0 0.0
    %187 = vmatpush.msra.mxu0 0.0
    %188 = vmatpush.msra.mxu0 %v165
    %189 = vmatpush.msra.mxu0 %v164
    %190 = vmatmul.f32.gmra.mxu0 %v169
    %v191 = vpop.f32.mrf.mxu0
    %v192 = vadd.f32 0.0, %v191
    %193 = vmatmul.f32.gmra.mxu0 %v172
    %v194 = vpop.f32.mrf.mxu0
    %v195 = vadd.f32 0.0, %v194
    %196 = vdwg.mxu0
    %v197 = vld [vmem:[#allocation3] sm:$0xff]
    %v198 = vld [vmem:[#allocation3 + $0x8] sm:$0xff]
    %v199 = vld [vmem:[%s2] sm:$0x1]
    %v201 = vperm.slane %v199, 0
    %v204 = vsel %vm66, %v192, 0
    %v207 = vsel %vm66, %v195, 0
    %209 = vmatpush.msra.mxu0 0.0
    %210 = vmatpush.msra.mxu0 0.0
    %211 = vmatpush.msra.mxu0 0.0
    %212 = vmatpush.msra.mxu0 0.0
    %213 = vmatpush.msra.mxu0 0.0
    %214 = vmatpush.msra.mxu0 0.0
    %215 = vmatpush.msra.mxu0 0.0
    %216 = vmatpush.msra.mxu0 0.0
    %217 = vmatpush.msra.mxu0 0.0
    %218 = vmatpush.msra.mxu0 0.0
    %219 = vmatpush.msra.mxu0 0.0
    %220 = vmatpush.msra.mxu0 0.0
    %221 = vmatpush.msra.mxu0 0.0
    %222 = vmatpush.msra.mxu0 0.0
    %223 = vmatpush.msra.mxu0 %v198
    %224 = vmatpush.msra.mxu0 %v197
    %225 = vmatmul.f32.gmra.mxu0 %v204
    %v226 = vpop.f32.mrf.mxu0
    %v227 = vadd.f32 %v201, %v226
    %228 = vmatmul.f32.gmra.mxu0 %v207
    %v229 = vpop.f32.mrf.mxu0
    %v230 = vadd.f32 %v201, %v229
    %231 = vdwg.mxu0
    %v232 = vmax.f32 %v227, 0.0
    %v233 = vmax.f32 %v230, 0.0
    %vm234 = vcmask 261120
    %235 = vst.msk [vmem:[%s8] sm:$0xff] %vm234, %v232
    %236 = vst.msk [vmem:[%s8 + $0x8] sm:$0xff] %vm234, %v233
    %237 = vmatpush.msra.mxu0 0.0
    %238 = vmatpush.msra.mxu0 0.0
    %239 = vmatpush.msra.mxu0 0.0
    %240 = vmatpush.msra.mxu0 0.0
    %241 = vmatpush.msra.mxu0 0.0
    %242 = vmatpush.msra.mxu0 0.0
    %243 = vmatpush.msra.mxu0 0.0
    %244 = vmatpush.msra.mxu0 0.0
    %245 = vmatpush.msra.mxu0 0.0
    %246 = vmatpush.msra.mxu0 0.0
    %247 = vmatpush.msra.mxu0 0.0
    %248 = vmatpush.msra.mxu0 0.0
    %249 = vmatpush.msra.mxu0 0.0
    %250 = vmatpush.msra.mxu0 0.0
    %251 = vmatpush.msra.mxu0 %v233
    %252 = vmatpush.msra.mxu0 %v232
    %253 = vmatmul.f32.gmra.mxu0 %v169
    %v254 = vpop.f32.mrf.mxu0
    %v255 = vadd.f32 0.0, %v254
    %256 = vmatmul.f32.gmra.mxu0 %v172
    %v257 = vpop.f32.mrf.mxu0
    %v258 = vadd.f32 0.0, %v257
    %259 = vdwg.mxu0
    %v260 = vld [vmem:[#allocation5] sm:$0xff]
    %v261 = vld [vmem:[#allocation5 + $0x8] sm:$0xff]
    %v262 = vld [vmem:[#allocation5 + $0x10] sm:$0xff]
    %v263 = vld [vmem:[#allocation5 + $0x18] sm:$0xff]
    %v264 = vld [vmem:[%s4] sm:$0x1]
    %v266 = vperm.slane %v264, 0
    %v269 = vsel %vm234, %v255, 0
    %v272 = vsel %vm234, %v258, 0
    %274 = vmatpush.msra.mxu0 0.0
    %275 = vmatpush.msra.mxu0 0.0
    %276 = vmatpush.msra.mxu0 0.0
    %277 = vmatpush.msra.mxu0 0.0
    %278 = vmatpush.msra.mxu0 0.0
    %279 = vmatpush.msra.mxu0 0.0
    %280 = vmatpush.msra.mxu0 0.0
    %281 = vmatpush.msra.mxu0 0.0
    %282 = vmatpush.msra.mxu0 0.0
    %283 = vmatpush.msra.mxu0 0.0
    %284 = vmatpush.msra.mxu0 0.0
    %285 = vmatpush.msra.mxu0 0.0
    %286 = vmatpush.msra.mxu0 %v263
    %287 = vmatpush.msra.mxu0 %v262
    %288 = vmatpush.msra.mxu0 %v261
    %289 = vmatpush.msra.mxu0 %v260
    %290 = vmatmul.f32.gmra.mxu0 %v269
    %v291 = vpop.f32.mrf.mxu0
    %v292 = vadd.f32 %v266, %v291
    %293 = vmatmul.f32.gmra.mxu0 %v272
    %v294 = vpop.f32.mrf.mxu0
    %v295 = vadd.f32 %v266, %v294
    %296 = vdwg.mxu0
    %v297 = vmax.f32 %v292, 0.0
    %v298 = vmax.f32 %v295, 0.0
    %299 = vst.msk [vmem:[%s9] sm:$0xff] %vm234, %v297
    %300 = vst.msk [vmem:[%s9 + $0x8] sm:$0xff] %vm234, %v298
    %v301 = vld [vmem:[%s5] sm:$0x1]
    %v302 = vld [vmem:[#allocation2] sm:$0x1]
    %304 = vset.pattern.permute.xlu0 0
    %305 = vperm.xlu0 %304, %v302
    %v306 = vpop.permute.xlu0 %305
    %v308 = vperm.slane %v306, 0
    %v310 = vsel %vm234, %v301, 0
    %v313 = vsel %vm234, %v297, 0
    %v316 = vsel %vm234, %v298, 0
    %318 = vmatpush.xpose.msra.mxu0 0.0
    %319 = vmatpush.xpose.msra.mxu0 0.0
    %320 = vmatpush.xpose.msra.mxu0 0.0
    %321 = vmatpush.xpose.msra.mxu0 0.0
    %322 = vmatpush.xpose.msra.mxu0 0.0
    %323 = vmatpush.xpose.msra.mxu0 0.0
    %324 = vmatpush.xpose.msra.mxu0 0.0
    %325 = vmatpush.xpose.msra.mxu0 0.0
    %326 = vmatpush.xpose.msra.mxu0 0.0
    %327 = vmatpush.xpose.msra.mxu0 0.0
    %328 = vmatpush.xpose.msra.mxu0 0.0
    %329 = vmatpush.xpose.msra.mxu0 0.0
    %330 = vmatpush.xpose.msra.mxu0 0.0
    %331 = vmatpush.xpose.msra.mxu0 0.0
    %332 = vmatpush.xpose.msra.mxu0 %v316
    %333 = vmatpush.xpose.msra.mxu0 %v313
    %334 = vmatmul.f32.gmra.mxu0 %v310
    %v335 = vpop.f32.mrf.mxu0
    %v336 = vadd.f32 %v308, %v335
    %337 = vdwg.mxu0
    %v338 = vxor.u32 %v336, 2147483648
    %v339 = vmul.f32 %v338, 1.442695
    %v340 = vpow.pop %v339
    %v341 = vadd.f32 %v340, 1.0
    %v342 = vrcp.pop %v341
    %v343 = vmul.f32 %v341, %v342
    %v344 = vsub.f32 1.0, %v343
    %v345 = vmul.f32 %v342, %v344
    %v346 = vadd.f32 %v342, %v345
    %vm347 = vweird.f32 %v341
    %vm348 = vweird.f32 %v342
    %vm349 = vmor %vm347, %vm348
    %v350 = vsel %vm349, %v342, %v346
    %v351 = vand.u32 2147483647, %v341
    %vm352 = vcmp.eq.f32.partialorder %v351, 8.507059e+37
    %v353 = vand.u32 %v341, 2147483648
    %v354 = vor.u32 1.1754944e-38, %v353
    %v355 = vsel %vm352, %v354, %v350
    %v356 = vmul.f32 1.0, %v355
    %vm357 = vcmask 122880
    %358 = vst.msk [vmem:[%s10] sm:$0x1] %vm357, %v356
    // Predicated region
    $region38: #{_lambda_.6} parent=1 // pred_check
      _
    $region39: #{_lambda_.6} parent=1 // pred_check_branch
      %360 = sbr.rel (0) target = $region41
    $region40: #{_lambda_.6} parent=1 // pred_region
      _
    $region41: #{_lambda_.6} parent=1 // pred_fallthru
      _
    // Predicated region
    $region42: #{_lambda_.6} parent=1 // pred_check
      _
    $region43: #{_lambda_.6} parent=1 // pred_check_branch
      %362 = sbr.rel (0) target = $region45
    $region44: #{_lambda_.6} parent=1 // pred_region
      _
    $region45: #{_lambda_.6} parent=1 // pred_fallthru
      _
    // Predicated region
    $region46: #{_lambda_.6} parent=1 // pred_check
      _
    $region47: #{_lambda_.6} parent=1 // pred_check_branch
      %364 = sbr.rel (0) target = $region49
    $region48: #{_lambda_.6} parent=1 // pred_region
      _
    $region49: #{_lambda_.6} parent=1 // pred_fallthru
      _
    // Predicated region
    $region50: #{_lambda_.6} parent=1 // pred_check
      _
    $region51: #{_lambda_.6} parent=1 // pred_check_branch
      %366 = sbr.rel (0) target = $region53
    $region52: #{_lambda_.6} parent=1 // pred_region
      _
    $region53: #{_lambda_.6} parent=1 // pred_fallthru
      _
    // Predicated region
    $region54: #{_lambda_.6} parent=1 // pred_check
      _
    $region55: #{_lambda_.6} parent=1 // pred_check_branch
      %368 = sbr.rel (0) target = $region57
    $region56: #{_lambda_.6} parent=1 // pred_region
      _
    $region57: #{_lambda_.6} parent=1 // pred_fallthru
      _
    // Predicated region
    $region58: #{_lambda_.6} parent=1 // pred_check
      _
    $region59: #{_lambda_.6} parent=1 // pred_check_branch
      %370 = sbr.rel (0) target = $region61
    $region60: #{_lambda_.6} parent=1 // pred_region
      _
    $region61: #{_lambda_.6} parent=1 // pred_fallthru
      _
    // Predicated region
    $region62: #{_lambda_.6} parent=1 // pred_check
      _
    $region63: #{_lambda_.6} parent=1 // pred_check_branch
      %372 = sbr.rel (0) target = $region65
    $region64: #{_lambda_.6} parent=1 // pred_region
      _
    $region65: #{_lambda_.6} parent=1 // pred_fallthru
      _
    // Predicated region
    $region66: #{_lambda_.6} parent=1 // pred_check
      _
    $region67: #{_lambda_.6} parent=1 // pred_check_branch
      %374 = sbr.rel (0) target = $region69
    $region68: #{_lambda_.6} parent=1 // pred_region
      _
    $region69: #{_lambda_.6} parent=1 // pred_fallthru
      _
    %375 = vsyncpa [#allocation4], 1
    %376 = vsyncpa [#allocation6], 1

// kernel: _lambda_.7
$region0: #{_lambda_.7}
  #allocation0 [shape = 'u32[]', space=smem, size = 0x4, offset = 0x4, fixed_abs, tag = 'smem constant byte address 0x4 - core index']
  #allocation1 [shape = 'u32[72,128]{1,0:T(1,128)}', space=vmem, size = 0x9000, scoped, tag = 'internal scratch']
  #allocation2 [shape = 'f32[1,1]{1,0:T(1,128)S(1)}', space=vmem, size = 0x200, scoped, tag = 'scoped memory for _lambda_.7']
  %s0 = inlined_call_operand.vmem [shape: f32[14,16], index: 0, kind: input, shape index: {}]
  %s1 = inlined_call_operand.vmem [shape: f32[16,14], index: 1, kind: input, shape index: {}]
  %s2 = inlined_call_operand.vmem [shape: f32[14,32], index: 2, kind: input, shape index: {}]
  %s3 = inlined_call_operand.vmem [shape: f32[32,32], index: 3, kind: input, shape index: {}]
  %s4 = inlined_call_operand.vmem [shape: f32[1,32], index: 4, kind: input, shape index: {}]
  %s5 = inlined_call_operand.vmem [shape: f32[1,32], index: 5, kind: input, shape index: {}]
  %s6 = inlined_call_operand.<no memory space> [shape: f32[1,1], index: 6, kind: input, shape index: {}]
  %s7 = inlined_call_operand.vmem [shape: f32[14,14], index: 7, kind: output, shape index: {0}]
  %s8 = inlined_call_operand.vmem [shape: f32[14,32], index: 8, kind: output, shape index: {1}]
  %s9 = inlined_call_operand.vmem [shape: f32[1,14], index: 9, kind: output, shape index: {2}]
  %10 = xla_tuple %s7, %s8, %s9
  %s11 = sld [smem:[#allocation0]]
  $region54: #{_lambda_.7} parent=0
    _
  %s13 = ssub.s32 1, %s11
  %s14 = scalar_select 0, %s13, %s11
  %v15 = vstv %s6
  %16 = vst [vmem:[#allocation2] sm:$0x1] %v15
  // Predicated region
  $region2: #{_lambda_.7} parent=0 // pred_check
    _
  $region3: #{_lambda_.7} parent=0 // pred_check_branch
    %18 = sbr.rel (0) target = $region5
  $region4: #{_lambda_.7} parent=0 // pred_region
    _
  $region5: #{_lambda_.7} parent=0 // pred_fallthru
    _
  // Predicated region
  $region6: #{_lambda_.7} parent=0 // pred_check
    _
  $region7: #{_lambda_.7} parent=0 // pred_check_branch
    %20 = sbr.rel (0) target = $region9
  $region8: #{_lambda_.7} parent=0 // pred_region
    _
  $region9: #{_lambda_.7} parent=0 // pred_fallthru
    _
  // Predicated region
  $region10: #{_lambda_.7} parent=0 // pred_check
    _
  $region11: #{_lambda_.7} parent=0 // pred_check_branch
    %22 = sbr.rel (0) target = $region13
  $region12: #{_lambda_.7} parent=0 // pred_region
    _
  $region13: #{_lambda_.7} parent=0 // pred_fallthru
    _
  // Predicated region
  $region14: #{_lambda_.7} parent=0 // pred_check
    _
  $region15: #{_lambda_.7} parent=0 // pred_check_branch
    %24 = sbr.rel (0) target = $region17
  $region16: #{_lambda_.7} parent=0 // pred_region
    _
  $region17: #{_lambda_.7} parent=0 // pred_fallthru
    _
  // Predicated region
  $region18: #{_lambda_.7} parent=0 // pred_check
    _
  $region19: #{_lambda_.7} parent=0 // pred_check_branch
    %26 = sbr.rel (0) target = $region21
  $region20: #{_lambda_.7} parent=0 // pred_region
    _
  $region21: #{_lambda_.7} parent=0 // pred_fallthru
    _
  // Predicated region
  $region22: #{_lambda_.7} parent=0 // pred_check
    _
  $region23: #{_lambda_.7} parent=0 // pred_check_branch
    %28 = sbr.rel (0) target = $region25
  $region24: #{_lambda_.7} parent=0 // pred_region
    _
  $region25: #{_lambda_.7} parent=0 // pred_fallthru
    _
  // Predicated region
  $region26: #{_lambda_.7} parent=0 // pred_check
    _
  $region27: #{_lambda_.7} parent=0 // pred_check_branch
    %30 = sbr.rel (0) target = $region29
  $region28: #{_lambda_.7} parent=0 // pred_region
    _
  $region29: #{_lambda_.7} parent=0 // pred_fallthru
    _
  %v32 = vld [vmem:[%s0] sm:$0xff]
  %v33 = vld [vmem:[%s0 + $0x8] sm:$0x3f]
  %vm34 = vcmp.ne.f32.partialorder %v32, 0.0
  %vm35 = vcmp.ne.f32.partialorder %v33, 0.0
  %v36 = vsel %vm34, 1, 0
  %v37 = vsel %vm35, 1, 0
  %v38 = vcvt.s32.f32 %v36
  %v39 = vcvt.s32.f32 %v37
  %v40 = vpack.c.bf16 %v39, %v38
  %v41 = vld [vmem:[%s1] sm:$0xff]
  %v42 = vld [vmem:[%s1 + $0x8] sm:$0xff]
  %vm43 = vcmp.ne.f32.partialorder %v41, 0.0
  %vm44 = vcmp.ne.f32.partialorder %v42, 0.0
  %v45 = vsel %vm43, 1, 0
  %v46 = vsel %vm44, 1, 0
  %v47 = vcvt.s32.f32 %v45
  %v48 = vcvt.s32.f32 %v46
  %v49 = vpack.c.bf16 %v48, %v47
  %vm50 = vcmask 130048
  %v52 = vsel %vm50, %v40, 0
  %54 = vmatpush.bf16.msra.mxu0 0
  %55 = vmatpush.bf16.msra.mxu0 0
  %56 = vmatpush.bf16.msra.mxu0 0
  %57 = vmatpush.bf16.msra.mxu0 0
  %58 = vmatpush.bf16.msra.mxu0 0
  %59 = vmatpush.bf16.msra.mxu0 0
  %60 = vmatpush.bf16.msra.mxu0 0
  %61 = vmatpush.bf16.msra.mxu0 %v49
  %62 = vmatmul.bf16.gmra.mxu0 %v52
  %v63 = vpop.f32.mrf.mxu0
  %v64 = vadd.f32 0.0, %v63
  %v65 = vpop.f32.mrf.mxu0
  %v66 = vadd.f32 0.0, %v65
  %67 = vdwg.mxu0
  %vm68 = vcmp.ne.f32.partialorder %v64, 0.0
  %vm69 = vcmp.ne.f32.partialorder %v66, 0.0
  %v70 = vsel %vm68, 1, 0
  %v71 = vsel %vm69, 1, 0
  %v72 = vcvt.s32.f32 %v70
  %v73 = vcvt.s32.f32 %v71
  %vm74 = vcmask 113664
  %v75 = vsel %vm74, %v72, 0.0
  %76 = vadd.xlane.f32.xlu0 %v75
  %v77 = vpop.xlane.xlu0 %76
  %vm78 = vcmask 111616
  %v79 = vsel %vm78, %v73, 0.0
  %80 = vadd.xlane.f32.xlu0 %v79
  %v81 = vpop.xlane.xlu0 %80
  %82 = vxpose.xlu0.b32.start [1/16] %v77, 128
  %83 = vxpose.xlu0.b32.cont [2/16] %v81, 128
  %84 = vxpose.xlu0.b32.cont [3/16] 0.0, 128
  %85 = vxpose.xlu0.b32.cont [4/16] 0.0, 128
  %86 = vxpose.xlu0.b32.cont [5/16] 0.0, 128
  %87 = vxpose.xlu0.b32.cont [6/16] 0.0, 128
  %88 = vxpose.xlu0.b32.cont [7/16] 0.0, 128
  %89 = vxpose.xlu0.b32.cont [8/16] 0.0, 128
  %90 = vxpose.xlu0.b32.cont [9/16] 0.0, 128
  %91 = vxpose.xlu0.b32.cont [10/16] 0.0, 128
  %92 = vxpose.xlu0.b32.cont [11/16] 0.0, 128
  %93 = vxpose.xlu0.b32.cont [12/16] 0.0, 128
  %94 = vxpose.xlu0.b32.cont [13/16] 0.0, 128
  %95 = vxpose.xlu0.b32.cont [14/16] 0.0, 128
  %96 = vxpose.xlu0.b32.cont [15/16] 0.0, 128
  %97 = vxpose.xlu0.b32.end [16/16] 0.0, 128
  %v98 = vpop.trf.xlu0
  %v99 = vpop.trf.xlu0
  %v100 = vpop.trf.xlu0
  %v101 = vpop.trf.xlu0
  %v102 = vpop.trf.xlu0
  %v103 = vpop.trf.xlu0
  %v104 = vpop.trf.xlu0
  %v105 = vpop.trf.xlu0
  %v106 = vpop.trf.xlu0
  %v107 = vpop.trf.xlu0
  %v108 = vpop.trf.xlu0
  %v109 = vpop.trf.xlu0
  %v110 = vpop.trf.xlu0
  %v111 = vpop.trf.xlu0
  %v112 = vpop.trf.xlu0
  %v113 = vpop.trf.xlu0
  %v114 = vperm.slane %v98, 0
  %v115 = vrcp.pop %v114
  %v116 = vmul.f32 %v114, %v115
  %v117 = vsub.f32 1.0, %v116
  %v118 = vmul.f32 %v115, %v117
  %v119 = vadd.f32 %v115, %v118
  %vm120 = vweird.f32 %v114
  %vm121 = vweird.f32 %v115
  %vm122 = vmor %vm120, %vm121
  %v123 = vsel %vm122, %v115, %v119
  %v124 = vand.u32 2147483647, %v114
  %vm125 = vcmp.eq.f32.partialorder %v124, 8.507059e+37
  %v126 = vand.u32 %v114, 2147483648
  %v127 = vor.u32 1.1754944e-38, %v126
  %v128 = vsel %vm125, %v127, %v123
  %v129 = vmul.f32 %v72, %v128
  %v130 = vmul.f32 %v73, %v128
  %131 = vst.msk [vmem:[%s7] sm:$0xff] %vm74, %v129
  %132 = vst.msk [vmem:[%s7 + $0x8] sm:$0x3f] %vm78, %v130
  %v133 = vld [vmem:[%s2] sm:$0xff]
  %v134 = vld [vmem:[%s2 + $0x8] sm:$0x3f]
  %v136 = vsel %vm74, %v129, 0
  %v139 = vsel %vm74, %v130, 0
  %vm141 = vcmask 1045504
  %v143 = vsel %vm141, %v134, 0
  %145 = vmatpush.msra.mxu0 0.0
  %146 = vmatpush.msra.mxu0 0.0
  %147 = vmatpush.msra.mxu0 0.0
  %148 = vmatpush.msra.mxu0 0.0
  %149 = vmatpush.msra.mxu0 0.0
  %150 = vmatpush.msra.mxu0 0.0
  %151 = vmatpush.msra.mxu0 0.0
  %152 = vmatpush.msra.mxu0 0.0
  %153 = vmatpush.msra.mxu0 0.0
  %154 = vmatpush.msra.mxu0 0.0
  %155 = vmatpush.msra.mxu0 0.0
  %156 = vmatpush.msra.mxu0 0.0
  %157 = vmatpush.msra.mxu0 0.0
  %158 = vmatpush.msra.mxu0 0.0
  %159 = vmatpush.msra.mxu0 %v143
  %160 = vmatpush.msra.mxu0 %v133
  %161 = vmatmul.f32.gmra.mxu0 %v136
  %v162 = vpop.f32.mrf.mxu0
  %v163 = vadd.f32 0.0, %v162
  %164 = vmatmul.f32.gmra.mxu0 %v139
  %v165 = vpop.f32.mrf.mxu0
  %v166 = vadd.f32 0.0, %v165
  %167 = vdwg.mxu0
  %v168 = vld [vmem:[%s3] sm:$0xff]
  %v169 = vld [vmem:[%s3 + $0x8] sm:$0xff]
  %v170 = vld [vmem:[%s3 + $0x10] sm:$0xff]
  %v171 = vld [vmem:[%s3 + $0x18] sm:$0xff]
  %v172 = vld [vmem:[%s4] sm:$0x1]
  %v174 = vperm.slane %v172, 0
  %vm176 = vcmask 261120
  %v178 = vsel %vm176, %v163, 0
  %v181 = vsel %vm176, %v166, 0
  %183 = vmatpush.msra.mxu0 0.0
  %184 = vmatpush.msra.mxu0 0.0
  %185 = vmatpush.msra.mxu0 0.0
  %186 = vmatpush.msra.mxu0 0.0
  %187 = vmatpush.msra.mxu0 0.0
  %188 = vmatpush.msra.mxu0 0.0
  %189 = vmatpush.msra.mxu0 0.0
  %190 = vmatpush.msra.mxu0 0.0
  %191 = vmatpush.msra.mxu0 0.0
  %192 = vmatpush.msra.mxu0 0.0
  %193 = vmatpush.msra.mxu0 0.0
  %194 = vmatpush.msra.mxu0 0.0
  %195 = vmatpush.msra.mxu0 %v171
  %196 = vmatpush.msra.mxu0 %v170
  %197 = vmatpush.msra.mxu0 %v169
  %198 = vmatpush.msra.mxu0 %v168
  %199 = vmatmul.f32.gmra.mxu0 %v178
  %v200 = vpop.f32.mrf.mxu0
  %v201 = vadd.f32 %v174, %v200
  %202 = vmatmul.f32.gmra.mxu0 %v181
  %v203 = vpop.f32.mrf.mxu0
  %v204 = vadd.f32 %v174, %v203
  %205 = vdwg.mxu0
  %v206 = vmax.f32 %v201, 0.0
  %v207 = vmax.f32 %v204, 0.0
  %208 = vst.msk [vmem:[%s8] sm:$0xff] %vm176, %v206
  %vm209 = vcmask 259072
  %210 = vst.msk [vmem:[%s8 + $0x8] sm:$0x3f] %vm209, %v207
  %v211 = vld [vmem:[%s5] sm:$0x1]
  %v212 = vld [vmem:[#allocation2] sm:$0x1]
  %214 = vset.pattern.permute.xlu0 0
  %215 = vperm.xlu0 %214, %v212
  %v216 = vpop.permute.xlu0 %215
  %v218 = vperm.slane %v216, 0
  %v220 = vsel %vm176, %v211, 0
  %v223 = vsel %vm176, %v206, 0
  %v226 = vsel %vm176, %v207, 0
  %228 = vmatpush.xpose.msra.mxu0 0.0
  %229 = vmatpush.xpose.msra.mxu0 0.0
  %230 = vmatpush.xpose.msra.mxu0 0.0
  %231 = vmatpush.xpose.msra.mxu0 0.0
  %232 = vmatpush.xpose.msra.mxu0 0.0
  %233 = vmatpush.xpose.msra.mxu0 0.0
  %234 = vmatpush.xpose.msra.mxu0 0.0
  %235 = vmatpush.xpose.msra.mxu0 0.0
  %236 = vmatpush.xpose.msra.mxu0 0.0
  %237 = vmatpush.xpose.msra.mxu0 0.0
  %238 = vmatpush.xpose.msra.mxu0 0.0
  %239 = vmatpush.xpose.msra.mxu0 0.0
  %240 = vmatpush.xpose.msra.mxu0 0.0
  %241 = vmatpush.xpose.msra.mxu0 0.0
  %242 = vmatpush.xpose.msra.mxu0 %v226
  %243 = vmatpush.xpose.msra.mxu0 %v223
  %244 = vmatmul.f32.gmra.mxu0 %v220
  %v245 = vpop.f32.mrf.mxu0
  %v246 = vadd.f32 %v218, %v245
  %247 = vdwg.mxu0
  %v248 = vxor.u32 %v246, 2147483648
  %v249 = vmul.f32 %v248, 1.442695
  %v250 = vpow.pop %v249
  %v251 = vadd.f32 %v250, 1.0
  %v252 = vrcp.pop %v251
  %v253 = vmul.f32 %v251, %v252
  %v254 = vsub.f32 1.0, %v253
  %v255 = vmul.f32 %v252, %v254
  %v256 = vadd.f32 %v252, %v255
  %vm257 = vweird.f32 %v251
  %vm258 = vweird.f32 %v252
  %vm259 = vmor %vm257, %vm258
  %v260 = vsel %vm259, %v252, %v256
  %v261 = vand.u32 2147483647, %v251
  %vm262 = vcmp.eq.f32.partialorder %v261, 8.507059e+37
  %v263 = vand.u32 %v251, 2147483648
  %v264 = vor.u32 1.1754944e-38, %v263
  %v265 = vsel %vm262, %v264, %v260
  %v266 = vmul.f32 1.0, %v265
  %vm267 = vcmask 106496
  %268 = vst.msk [vmem:[%s9] sm:$0x1] %vm267, %v266
  // Predicated region
  $region30: #{_lambda_.7} parent=0 // pred_check
    _
  $region31: #{_lambda_.7} parent=0 // pred_check_branch
    %270 = sbr.rel (0) target = $region33
  $region32: #{_lambda_.7} parent=0 // pred_region
    _
  $region33: #{_lambda_.7} parent=0 // pred_fallthru
    _
  // Predicated region
  $region34: #{_lambda_.7} parent=0 // pred_check
    _
  $region35: #{_lambda_.7} parent=0 // pred_check_branch
    %272 = sbr.rel (0) target = $region37
  $region36: #{_lambda_.7} parent=0 // pred_region
    _
  $region37: #{_lambda_.7} parent=0 // pred_fallthru
    _
  // Predicated region
  $region38: #{_lambda_.7} parent=0 // pred_check
    _
  $region39: #{_lambda_.7} parent=0 // pred_check_branch
    %274 = sbr.rel (0) target = $region41
  $region40: #{_lambda_.7} parent=0 // pred_region
    _
  $region41: #{_lambda_.7} parent=0 // pred_fallthru
    _
  // Predicated region
  $region42: #{_lambda_.7} parent=0 // pred_check
    _
  $region43: #{_lambda_.7} parent=0 // pred_check_branch
    %276 = sbr.rel (0) target = $region45
  $region44: #{_lambda_.7} parent=0 // pred_region
    _
  $region45: #{_lambda_.7} parent=0 // pred_fallthru
    _
  // Predicated region
  $region46: #{_lambda_.7} parent=0 // pred_check
    _
  $region47: #{_lambda_.7} parent=0 // pred_check_branch
    %278 = sbr.rel (0) target = $region49
  $region48: #{_lambda_.7} parent=0 // pred_region
    _
  $region49: #{_lambda_.7} parent=0 // pred_fallthru
    _
  // Predicated region
  $region50: #{_lambda_.7} parent=0 // pred_check
    _
  $region51: #{_lambda_.7} parent=0 // pred_check_branch
    %280 = sbr.rel (0) target = $region53
  $region52: #{_lambda_.7} parent=0 // pred_region
    _
  $region53: #{_lambda_.7} parent=0 // pred_fallthru
    _

// kernel: _lambda_.8
$region0: #{_lambda_.8}
  #allocation0 [shape = 'u32[]', space=smem, size = 0x4, offset = 0x4, fixed_abs, tag = 'smem constant byte address 0x4 - core index']
  #allocation1 [shape = 'u32[72,128]{1,0:T(1,128)}', space=vmem, size = 0x9000, scoped, tag = 'internal scratch']
  %s0 = inlined_call_operand.vmem [shape: f32[9,14], index: 0, kind: input, shape index: {}]
  %s1 = inlined_call_operand.vmem [shape: f32[14,9], index: 1, kind: input, shape index: {}]
  %s2 = inlined_call_operand.vmem [shape: f32[9,32], index: 2, kind: input, shape index: {}]
  %s3 = inlined_call_operand.vmem [shape: f32[32,32], index: 3, kind: input, shape index: {}]
  %s4 = inlined_call_operand.vmem [shape: f32[1,32], index: 4, kind: input, shape index: {}]
  %s5 = inlined_call_operand.vmem [shape: f32[9,32], index: 5, kind: output, shape index: {}]
  %s6 = sld [smem:[#allocation0]]
  $region30: #{_lambda_.8} parent=0
    _
  %s8 = ssub.s32 1, %s6
  %s9 = scalar_select 0, %s8, %s6
  // Predicated region
  $region2: #{_lambda_.8} parent=0 // pred_check
    _
  $region3: #{_lambda_.8} parent=0 // pred_check_branch
    %11 = sbr.rel (0) target = $region5
  $region4: #{_lambda_.8} parent=0 // pred_region
    _
  $region5: #{_lambda_.8} parent=0 // pred_fallthru
    _
  // Predicated region
  $region6: #{_lambda_.8} parent=0 // pred_check
    _
  $region7: #{_lambda_.8} parent=0 // pred_check_branch
    %13 = sbr.rel (0) target = $region9
  $region8: #{_lambda_.8} parent=0 // pred_region
    _
  $region9: #{_lambda_.8} parent=0 // pred_fallthru
    _
  // Predicated region
  $region10: #{_lambda_.8} parent=0 // pred_check
    _
  $region11: #{_lambda_.8} parent=0 // pred_check_branch
    %15 = sbr.rel (0) target = $region13
  $region12: #{_lambda_.8} parent=0 // pred_region
    _
  $region13: #{_lambda_.8} parent=0 // pred_fallthru
    _
  // Predicated region
  $region14: #{_lambda_.8} parent=0 // pred_check
    _
  $region15: #{_lambda_.8} parent=0 // pred_check_branch
    %17 = sbr.rel (0) target = $region17
  $region16: #{_lambda_.8} parent=0 // pred_region
    _
  $region17: #{_lambda_.8} parent=0 // pred_fallthru
    _
  // Predicated region
  $region18: #{_lambda_.8} parent=0 // pred_check
    _
  $region19: #{_lambda_.8} parent=0 // pred_check_branch
    %19 = sbr.rel (0) target = $region21
  $region20: #{_lambda_.8} parent=0 // pred_region
    _
  $region21: #{_lambda_.8} parent=0 // pred_fallthru
    _
  %v21 = vld [vmem:[%s0] sm:$0xff]
  %v22 = vld [vmem:[%s0 + $0x8] sm:$0x1]
  %vm23 = vcmp.ne.f32.partialorder %v21, 0.0
  %vm24 = vcmp.ne.f32.partialorder %v22, 0.0
  %v25 = vsel %vm23, 1, 0
  %v26 = vsel %vm24, 1, 0
  %v27 = vcvt.s32.f32 %v25
  %v28 = vcvt.s32.f32 %v26
  %v29 = vpack.c.bf16 %v28, %v27
  %v30 = vld [vmem:[%s1] sm:$0xff]
  %v31 = vld [vmem:[%s1 + $0x8] sm:$0x3f]
  %vm32 = vcmp.ne.f32.partialorder %v30, 0.0
  %vm33 = vcmp.ne.f32.partialorder %v31, 0.0
  %v34 = vsel %vm32, 1, 0
  %v35 = vsel %vm33, 1, 0
  %v36 = vcvt.s32.f32 %v34
  %v37 = vcvt.s32.f32 %v35
  %v38 = vpack.c.bf16 %v37, %v36
  %vm39 = vcmask 113664
  %v41 = vsel %vm39, %v29, 0
  %vm43 = vcmask 1046528
  %v45 = vsel %vm43, %v38, 0
  %47 = vmatpush.bf16.msra.mxu0 0
  %48 = vmatpush.bf16.msra.mxu0 0
  %49 = vmatpush.bf16.msra.mxu0 0
  %50 = vmatpush.bf16.msra.mxu0 0
  %51 = vmatpush.bf16.msra.mxu0 0
  %52 = vmatpush.bf16.msra.mxu0 0
  %53 = vmatpush.bf16.msra.mxu0 0
  %54 = vmatpush.bf16.msra.mxu0 %v45
  %55 = vmatmul.bf16.gmra.mxu0 %v41
  %v56 = vpop.f32.mrf.mxu0
  %v57 = vadd.f32 0.0, %v56
  %v58 = vpop.f32.mrf.mxu0
  %v59 = vadd.f32 0.0, %v58
  %60 = vdwg.mxu0
  %vm61 = vcmp.ne.f32.partialorder %v57, 0.0
  %vm62 = vcmp.ne.f32.partialorder %v59, 0.0
  %v63 = vsel %vm61, 1, 0
  %v64 = vsel %vm62, 1, 0
  %v65 = vcvt.s32.f32 %v63
  %v66 = vcvt.s32.f32 %v64
  %vm67 = vcmask 72704
  %v68 = vsel %vm67, %v65, 0.0
  %69 = vadd.xlane.f32.xlu0 %v68
  %v70 = vpop.xlane.xlu0 %69
  %vm71 = vcmask 65536
  %v72 = vsel %vm71, %v66, 0.0
  %73 = vadd.xlane.f32.xlu0 %v72
  %v74 = vpop.xlane.xlu0 %73
  %75 = vxpose.xlu0.b32.start [1/16] %v70, 128
  %76 = vxpose.xlu0.b32.cont [2/16] %v74, 128
  %77 = vxpose.xlu0.b32.cont [3/16] 0.0, 128
  %78 = vxpose.xlu0.b32.cont [4/16] 0.0, 128
  %79 = vxpose.xlu0.b32.cont [5/16] 0.0, 128
  %80 = vxpose.xlu0.b32.cont [6/16] 0.0, 128
  %81 = vxpose.xlu0.b32.cont [7/16] 0.0, 128
  %82 = vxpose.xlu0.b32.cont [8/16] 0.0, 128
  %83 = vxpose.xlu0.b32.cont [9/16] 0.0, 128
  %84 = vxpose.xlu0.b32.cont [10/16] 0.0, 128
  %85 = vxpose.xlu0.b32.cont [11/16] 0.0, 128
  %86 = vxpose.xlu0.b32.cont [12/16] 0.0, 128
  %87 = vxpose.xlu0.b32.cont [13/16] 0.0, 128
  %88 = vxpose.xlu0.b32.cont [14/16] 0.0, 128
  %89 = vxpose.xlu0.b32.cont [15/16] 0.0, 128
  %90 = vxpose.xlu0.b32.end [16/16] 0.0, 128
  %v91 = vpop.trf.xlu0
  %v92 = vpop.trf.xlu0
  %v93 = vpop.trf.xlu0
  %v94 = vpop.trf.xlu0
  %v95 = vpop.trf.xlu0
  %v96 = vpop.trf.xlu0
  %v97 = vpop.trf.xlu0
  %v98 = vpop.trf.xlu0
  %v99 = vpop.trf.xlu0
  %v100 = vpop.trf.xlu0
  %v101 = vpop.trf.xlu0
  %v102 = vpop.trf.xlu0
  %v103 = vpop.trf.xlu0
  %v104 = vpop.trf.xlu0
  %v105 = vpop.trf.xlu0
  %v106 = vpop.trf.xlu0
  %v107 = vperm.slane %v91, 0
  %v108 = vrcp.pop %v107
  %v109 = vmul.f32 %v107, %v108
  %v110 = vsub.f32 1.0, %v109
  %v111 = vmul.f32 %v108, %v110
  %v112 = vadd.f32 %v108, %v111
  %vm113 = vweird.f32 %v107
  %vm114 = vweird.f32 %v108
  %vm115 = vmor %vm113, %vm114
  %v116 = vsel %vm115, %v108, %v112
  %v117 = vand.u32 2147483647, %v107
  %vm118 = vcmp.eq.f32.partialorder %v117, 8.507059e+37
  %v119 = vand.u32 %v107, 2147483648
  %v120 = vor.u32 1.1754944e-38, %v119
  %v121 = vsel %vm118, %v120, %v116
  %v122 = vmul.f32 %v65, %v121
  %v123 = vmul.f32 %v66, %v121
  %v124 = vld [vmem:[%s2] sm:$0xff]
  %v125 = vld [vmem:[%s2 + $0x8] sm:$0x1]
  %v127 = vsel %vm67, %v122, 0
  %v130 = vsel %vm67, %v123, 0
  %vm132 = vcmask 1040384
  %v134 = vsel %vm132, %v125, 0
  %136 = vmatpush.msra.mxu0 0.0
  %137 = vmatpush.msra.mxu0 0.0
  %138 = vmatpush.msra.mxu0 0.0
  %139 = vmatpush.msra.mxu0 0.0
  %140 = vmatpush.msra.mxu0 0.0
  %141 = vmatpush.msra.mxu0 0.0
  %142 = vmatpush.msra.mxu0 0.0
  %143 = vmatpush.msra.mxu0 0.0
  %144 = vmatpush.msra.mxu0 0.0
  %145 = vmatpush.msra.mxu0 0.0
  %146 = vmatpush.msra.mxu0 0.0
  %147 = vmatpush.msra.mxu0 0.0
  %148 = vmatpush.msra.mxu0 0.0
  %149 = vmatpush.msra.mxu0 0.0
  %150 = vmatpush.msra.mxu0 %v134
  %151 = vmatpush.msra.mxu0 %v124
  %152 = vmatmul.f32.gmra.mxu0 %v127
  %v153 = vpop.f32.mrf.mxu0
  %v154 = vadd.f32 0.0, %v153
  %155 = vmatmul.f32.gmra.mxu0 %v130
  %v156 = vpop.f32.mrf.mxu0
  %v157 = vadd.f32 0.0, %v156
  %158 = vdwg.mxu0
  %v159 = vld [vmem:[%s3] sm:$0xff]
  %v160 = vld [vmem:[%s3 + $0x8] sm:$0xff]
  %v161 = vld [vmem:[%s3 + $0x10] sm:$0xff]
  %v162 = vld [vmem:[%s3 + $0x18] sm:$0xff]
  %v163 = vld [vmem:[%s4] sm:$0x1]
  %v165 = vperm.slane %v163, 0
  %vm167 = vcmask 261120
  %v169 = vsel %vm167, %v154, 0
  %v172 = vsel %vm167, %v157, 0
  %174 = vmatpush.msra.mxu0 0.0
  %175 = vmatpush.msra.mxu0 0.0
  %176 = vmatpush.msra.mxu0 0.0
  %177 = vmatpush.msra.mxu0 0.0
  %178 = vmatpush.msra.mxu0 0.0
  %179 = vmatpush.msra.mxu0 0.0
  %180 = vmatpush.msra.mxu0 0.0
  %181 = vmatpush.msra.mxu0 0.0
  %182 = vmatpush.msra.mxu0 0.0
  %183 = vmatpush.msra.mxu0 0.0
  %184 = vmatpush.msra.mxu0 0.0
  %185 = vmatpush.msra.mxu0 0.0
  %186 = vmatpush.msra.mxu0 %v162
  %187 = vmatpush.msra.mxu0 %v161
  %188 = vmatpush.msra.mxu0 %v160
  %189 = vmatpush.msra.mxu0 %v159
  %190 = vmatmul.f32.gmra.mxu0 %v169
  %v191 = vpop.f32.mrf.mxu0
  %v192 = vadd.f32 %v165, %v191
  %193 = vmatmul.f32.gmra.mxu0 %v172
  %v194 = vpop.f32.mrf.mxu0
  %v195 = vadd.f32 %v165, %v194
  %196 = vdwg.mxu0
  %v197 = vmax.f32 %v192, 0.0
  %v198 = vmax.f32 %v195, 0.0
  %199 = vst.msk [vmem:[%s5] sm:$0xff] %vm167, %v197
  %vm200 = vcmask 253952
  %201 = vst.msk [vmem:[%s5 + $0x8] sm:$0x1] %vm200, %v198
  // Predicated region
  $region22: #{_lambda_.8} parent=0 // pred_check
    _
  $region23: #{_lambda_.8} parent=0 // pred_check_branch
    %203 = sbr.rel (0) target = $region25
  $region24: #{_lambda_.8} parent=0 // pred_region
    _
  $region25: #{_lambda_.8} parent=0 // pred_fallthru
    _
  // Predicated region
  $region26: #{_lambda_.8} parent=0 // pred_check
    _
  $region27: #{_lambda_.8} parent=0 // pred_check_branch
    %205 = sbr.rel (0) target = $region29
  $region28: #{_lambda_.8} parent=0 // pred_region
    _
  $region29: #{_lambda_.8} parent=0 // pred_fallthru
    _

// kernel: _lambda_.9
$region0: #{_lambda_.9}
  #allocation0 [shape = 'u32[]', space=smem, size = 0x4, offset = 0x4, fixed_abs, tag = 'smem constant byte address 0x4 - core index']
  #allocation1 [shape = 'u32[72,128]{1,0:T(1,128)}', space=vmem, size = 0x9000, scoped, tag = 'internal scratch']
  %s0 = inlined_call_operand.vmem [shape: f32[14,14], index: 0, kind: input, shape index: {}]
  %s1 = inlined_call_operand.vmem [shape: f32[14,32], index: 1, kind: input, shape index: {}]
  %s2 = inlined_call_operand.vmem [shape: f32[32,32], index: 2, kind: input, shape index: {}]
  %s3 = inlined_call_operand.vmem [shape: f32[1,32], index: 3, kind: input, shape index: {}]
  %s4 = inlined_call_operand.vmem [shape: f32[14,32], index: 4, kind: input, shape index: {}]
  %s5 = inlined_call_operand.vmem [shape: f32[14,32], index: 5, kind: output, shape index: {}]
  %s6 = sld [smem:[#allocation0]]
  $region30: #{_lambda_.9} parent=0
    _
  %s8 = ssub.s32 1, %s6
  %s9 = scalar_select 0, %s8, %s6
  // Predicated region
  $region2: #{_lambda_.9} parent=0 // pred_check
    _
  $region3: #{_lambda_.9} parent=0 // pred_check_branch
    %11 = sbr.rel (0) target = $region5
  $region4: #{_lambda_.9} parent=0 // pred_region
    _
  $region5: #{_lambda_.9} parent=0 // pred_fallthru
    _
  // Predicated region
  $region6: #{_lambda_.9} parent=0 // pred_check
    _
  $region7: #{_lambda_.9} parent=0 // pred_check_branch
    %13 = sbr.rel (0) target = $region9
  $region8: #{_lambda_.9} parent=0 // pred_region
    _
  $region9: #{_lambda_.9} parent=0 // pred_fallthru
    _
  // Predicated region
  $region10: #{_lambda_.9} parent=0 // pred_check
    _
  $region11: #{_lambda_.9} parent=0 // pred_check_branch
    %15 = sbr.rel (0) target = $region13
  $region12: #{_lambda_.9} parent=0 // pred_region
    _
  $region13: #{_lambda_.9} parent=0 // pred_fallthru
    _
  // Predicated region
  $region14: #{_lambda_.9} parent=0 // pred_check
    _
  $region15: #{_lambda_.9} parent=0 // pred_check_branch
    %17 = sbr.rel (0) target = $region17
  $region16: #{_lambda_.9} parent=0 // pred_region
    _
  $region17: #{_lambda_.9} parent=0 // pred_fallthru
    _
  // Predicated region
  $region18: #{_lambda_.9} parent=0 // pred_check
    _
  $region19: #{_lambda_.9} parent=0 // pred_check_branch
    %19 = sbr.rel (0) target = $region21
  $region20: #{_lambda_.9} parent=0 // pred_region
    _
  $region21: #{_lambda_.9} parent=0 // pred_fallthru
    _
  %v20 = vld [vmem:[%s0] sm:$0xff]
  %v21 = vld [vmem:[%s0 + $0x8] sm:$0x3f]
  %v22 = vld [vmem:[%s1] sm:$0xff]
  %v23 = vld [vmem:[%s1 + $0x8] sm:$0x3f]
  %vm24 = vcmask 113664
  %v26 = vsel %vm24, %v20, 0
  %v29 = vsel %vm24, %v21, 0
  %vm31 = vcmask 1045504
  %v33 = vsel %vm31, %v23, 0
  %35 = vmatpush.msra.mxu0 0.0
  %36 = vmatpush.msra.mxu0 0.0
  %37 = vmatpush.msra.mxu0 0.0
  %38 = vmatpush.msra.mxu0 0.0
  %39 = vmatpush.msra.mxu0 0.0
  %40 = vmatpush.msra.mxu0 0.0
  %41 = vmatpush.msra.mxu0 0.0
  %42 = vmatpush.msra.mxu0 0.0
  %43 = vmatpush.msra.mxu0 0.0
  %44 = vmatpush.msra.mxu0 0.0
  %45 = vmatpush.msra.mxu0 0.0
  %46 = vmatpush.msra.mxu0 0.0
  %47 = vmatpush.msra.mxu0 0.0
  %48 = vmatpush.msra.mxu0 0.0
  %49 = vmatpush.msra.mxu0 %v33
  %50 = vmatpush.msra.mxu0 %v22
  %51 = vmatmul.f32.gmra.mxu0 %v26
  %v52 = vpop.f32.mrf.mxu0
  %v53 = vadd.f32 0.0, %v52
  %54 = vmatmul.f32.gmra.mxu0 %v29
  %v55 = vpop.f32.mrf.mxu0
  %v56 = vadd.f32 0.0, %v55
  %57 = vdwg.mxu0
  %v58 = vld [vmem:[%s2] sm:$0xff]
  %v59 = vld [vmem:[%s2 + $0x8] sm:$0xff]
  %v60 = vld [vmem:[%s2 + $0x10] sm:$0xff]
  %v61 = vld [vmem:[%s2 + $0x18] sm:$0xff]
  %v62 = vld [vmem:[%s3] sm:$0x1]
  %v64 = vperm.slane %v62, 0
  %vm66 = vcmask 261120
  %v68 = vsel %vm66, %v53, 0
  %v71 = vsel %vm66, %v56, 0
  %73 = vmatpush.msra.mxu0 0.0
  %74 = vmatpush.msra.mxu0 0.0
  %75 = vmatpush.msra.mxu0 0.0
  %76 = vmatpush.msra.mxu0 0.0
  %77 = vmatpush.msra.mxu0 0.0
  %78 = vmatpush.msra.mxu0 0.0
  %79 = vmatpush.msra.mxu0 0.0
  %80 = vmatpush.msra.mxu0 0.0
  %81 = vmatpush.msra.mxu0 0.0
  %82 = vmatpush.msra.mxu0 0.0
  %83 = vmatpush.msra.mxu0 0.0
  %84 = vmatpush.msra.mxu0 0.0
  %85 = vmatpush.msra.mxu0 %v61
  %86 = vmatpush.msra.mxu0 %v60
  %87 = vmatpush.msra.mxu0 %v59
  %88 = vmatpush.msra.mxu0 %v58
  %89 = vmatmul.f32.gmra.mxu0 %v68
  %v90 = vpop.f32.mrf.mxu0
  %v91 = vadd.f32 %v64, %v90
  %92 = vmatmul.f32.gmra.mxu0 %v71
  %v93 = vpop.f32.mrf.mxu0
  %v94 = vadd.f32 %v64, %v93
  %95 = vdwg.mxu0
  %v96 = vmax.f32 %v91, 0.0
  %v97 = vmax.f32 %v94, 0.0
  %v98 = vld [vmem:[%s4] sm:$0xff]
  %v99 = vld [vmem:[%s4 + $0x8] sm:$0x3f]
  %v100 = vadd.f32 %v96, %v98
  %v101 = vadd.f32 %v97, %v99
  %102 = vst.msk [vmem:[%s5] sm:$0xff] %vm66, %v100
  %vm103 = vcmask 259072
  %104 = vst.msk [vmem:[%s5 + $0x8] sm:$0x3f] %vm103, %v101
  // Predicated region
  $region22: #{_lambda_.9} parent=0 // pred_check
    _
  $region23: #{_lambda_.9} parent=0 // pred_check_branch
    %106 = sbr.rel (0) target = $region25
  $region24: #{_lambda_.9} parent=0 // pred_region
    _
  $region25: #{_lambda_.9} parent=0 // pred_fallthru
    _
  // Predicated region
  $region26: #{_lambda_.9} parent=0 // pred_check
    _
  $region27: #{_lambda_.9} parent=0 // pred_check_branch
    %108 = sbr.rel (0) target = $region29
  $region28: #{_lambda_.9} parent=0 // pred_region
    _
  $region29: #{_lambda_.9} parent=0 // pred_fallthru
    _

// kernel: custom-call.2
$region0: #{custom-call.2}
  %s0 = inlined_call_operand.vmem [shape: f32[8,8], index: 0, kind: input, shape index: {}]
  %s1 = inlined_call_operand.vmem [shape: f32[8,8], index: 1, kind: input, shape index: {}]
  %s2 = inlined_call_operand.vmem [shape: f32[8,8], index: 2, kind: input, shape index: {}]
  %s3 = inlined_call_operand.vmem [shape: f32[8,8], index: 3, kind: input, shape index: {}]
  %s4 = inlined_call_operand.vmem [shape: f32[8], index: 4, kind: output, shape index: {0}]
  %s5 = inlined_call_operand.vmem [shape: f32[8], index: 5, kind: output, shape index: {1}]
  %s6 = inlined_call_operand.vmem [shape: f32[8,8], index: 6, kind: output, shape index: {2}]
  %s7 = inlined_call_operand.vmem [shape: f32[8,8], index: 7, kind: output, shape index: {3}]
  %s8 = inlined_call_operand.vmem [shape: f32[8,8], index: 8, kind: output, shape index: {4}]
  %s9 = inlined_call_operand.vmem [shape: f32[8,8], index: 9, kind: output, shape index: {5}]
  %10 = xla_tuple %s4, %s5, %s6, %s7, %s8, %s9
  $region1: #{custom-call.2} parent=0
    #allocation0 [shape = 'u8[4096]{0}', space=vmem, size = 0x1000, scoped, tag = 'operand span for operand 0']
    #allocation1 [shape = 'u8[4096]{0}', space=vmem, size = 0x1000, scoped, tag = 'operand span for operand 1']
    #allocation2 [shape = 'u8[4096]{0}', space=vmem, size = 0x1000, scoped, tag = 'operand span for operand 2']
    #allocation3 [shape = 'u8[4096]{0}', space=vmem, size = 0x1000, scoped, tag = 'operand span for operand 3']
    #allocation4 [shape = 'u8[4096]{0}', space=vmem, size = 0x1000, scoped, tag = 'operand span for operand 4']
    #allocation5 [shape = 'u8[512]{0}', space=vmem, size = 0x400, scoped, tag = 'packed  for operand 4']
    #allocation6 [shape = 'u8[4096]{0}', space=vmem, size = 0x1000, scoped, tag = 'operand span for operand 5']
    #allocation7 [shape = 'u8[512]{0}', space=vmem, size = 0x400, scoped, tag = 'packed  for operand 5']
    #allocation8 [shape = 'u8[4096]{0}', space=vmem, size = 0x1000, scoped, tag = 'operand span for operand 6']
    #allocation9 [shape = 'u8[4096]{0}', space=vmem, size = 0x1000, scoped, tag = 'operand span for operand 7']
    #allocation10 [shape = 'u8[4096]{0}', space=vmem, size = 0x1000, scoped, tag = 'operand span for operand 8']
    #allocation11 [shape = 'u8[4096]{0}', space=vmem, size = 0x1000, scoped, tag = 'operand span for operand 9']
    #allocation12 [shape = 'f32[8,8]{1,0}', space=vmem, size = 0x1000, scoped, tag = 'a top-left matrix']
    #allocation13 [shape = 'f32[8,8]{1,0}', space=vmem, size = 0x1000, scoped, tag = 'a top-right matrix']
    #allocation14 [shape = 'f32[8,8]{1,0}', space=vmem, size = 0x1000, scoped, tag = 'a bottom-left matrix']
    #allocation15 [shape = 'f32[8,8]{1,0}', space=vmem, size = 0x1000, scoped, tag = 'a bottom-right matrix']
    // Predicated region
    $region2: #{custom-call.2} parent=1 // pred_check
      _
    $region3: #{custom-call.2} parent=1 // pred_check_branch
      %12 = sbr.rel (0) target = $region5
    $region4: #{custom-call.2} parent=1 // pred_region
      %p14 = scmp.gt.s32.totalorder 1, 0
      // Predicated region
      $region6: #{custom-call.2} parent=4 // pred_check
        %p15 = pneg %p14
      $region7: #{custom-call.2} parent=4 // pred_check_branch
        %17 = sbr.rel (%p15) target = $region9
      $region8: #{custom-call.2} parent=4 // pred_region
        %s18 = ssub.s32 1, 1
        %s19 = smul.u32 %s18, 8
        %s20 = scalar_lea.vmem %s0, %s19
        %v21 = vld [vmem:[%s0] sm:$0xff]
        // While loop
        $region10: #{custom-call.2} parent=8 // loop_pre_header
          _
        $region11: #{custom-call.2} parent=8 // loop_header
          %s22 = sphi %s0, %s44
          %s23 = sphi [#allocation0], %s45
          %v24 = vphi %v21, %v46
          %s25 = ssub.s32 %s20, 64
          %p26 = scmp.gt.s32.totalorder %s22, %s25
        $region12: #{custom-call.2} parent=8 // loop_header_branch
          %28 = sbr.rel (%p26) target = $region16
        $region13: #{custom-call.2} parent=8 // loop_body
          %29 = vst [vmem:[%s23] sm:$0xff] %v24
          %v30 = vld [vmem:[%s22 + $0x8] sm:$0xff]
          %31 = vst [vmem:[%s23 + $0x8] sm:$0xff] %v30
          %v32 = vld [vmem:[%s22 + $0x10] sm:$0xff]
          %33 = vst [vmem:[%s23 + $0x10] sm:$0xff] %v32
          %v34 = vld [vmem:[%s22 + $0x18] sm:$0xff]
          %35 = vst [vmem:[%s23 + $0x18] sm:$0xff] %v34
          %v36 = vld [vmem:[%s22 + $0x20] sm:$0xff]
          %37 = vst [vmem:[%s23 + $0x20] sm:$0xff] %v36
          %v38 = vld [vmem:[%s22 + $0x28] sm:$0xff]
          %39 = vst [vmem:[%s23 + $0x28] sm:$0xff] %v38
          %v40 = vld [vmem:[%s22 + $0x30] sm:$0xff]
          %41 = vst [vmem:[%s23 + $0x30] sm:$0xff] %v40
          %v42 = vld [vmem:[%s22 + $0x38] sm:$0xff]
          %43 = vst [vmem:[%s23 + $0x38] sm:$0xff] %v42
        $region14: #{custom-call.2} parent=8 // loop_footer
          %s44 = scalar_lea.vmem %s22, 64
          %s45 = scalar_lea.vmem %s23, 64
          %v46 = vld [vmem:[%s22 + $0x40] sm:$0xff]
        $region15: #{custom-call.2} parent=8 // loop_footer_branch
          %47 = sbr.rel target = $region11
        $region16: #{custom-call.2} parent=8 // loop_exit
          _
        // While loop
        $region17: #{custom-call.2} parent=8 // loop_pre_header
          _
        $region18: #{custom-call.2} parent=8 // loop_header
          %s48 = sphi %s22, %s56
          %s49 = sphi %s23, %s57
          %v50 = vphi %v24, %v50
          %p51 = scmp.gt.s32.totalorder %s48, %s20
        $region19: #{custom-call.2} parent=8 // loop_header_branch
          %53 = sbr.rel (%p51) target = $region23
        $region20: #{custom-call.2} parent=8 // loop_body
          %v54 = vld [vmem:[%s48] sm:$0xff]
          %55 = vst [vmem:[%s49] sm:$0xff] %v54
        $region21: #{custom-call.2} parent=8 // loop_footer
          %s56 = scalar_lea.vmem %s48, 8
          %s57 = scalar_lea.vmem %s49, 8
        $region22: #{custom-call.2} parent=8 // loop_footer_branch
          %58 = sbr.rel target = $region18
        $region23: #{custom-call.2} parent=8 // loop_exit
          _
      $region9: #{custom-call.2} parent=4 // pred_fallthru
        _
      %s60 = ssub.s32 1, 1
      %s61 = smul.u32 1, 8
      %s62 = scalar_lea.vmem [#allocation0], %s61
      %s63 = smul.u32 1, 8
      %s64 = scalar_lea.vmem %s0, %s63
      %v65 = vld [vmem:[%s64] sm:%s60]
      %66 = vst [vmem:[%s62] sm:%s60] %v65
    $region5: #{custom-call.2} parent=1 // pred_fallthru
      _
    // Predicated region
    $region24: #{custom-call.2} parent=1 // pred_check
      _
    $region25: #{custom-call.2} parent=1 // pred_check_branch
      %68 = sbr.rel (0) target = $region27
    $region26: #{custom-call.2} parent=1 // pred_region
      %p70 = scmp.gt.s32.totalorder 1, 0
      // Predicated region
      $region28: #{custom-call.2} parent=26 // pred_check
        %p71 = pneg %p70
      $region29: #{custom-call.2} parent=26 // pred_check_branch
        %73 = sbr.rel (%p71) target = $region31
      $region30: #{custom-call.2} parent=26 // pred_region
        %s74 = ssub.s32 1, 1
        %s75 = smul.u32 %s74, 8
        %s76 = scalar_lea.vmem %s1, %s75
        %v77 = vld [vmem:[%s1] sm:$0xff]
        // While loop
        $region32: #{custom-call.2} parent=30 // loop_pre_header
          _
        $region33: #{custom-call.2} parent=30 // loop_header
          %s78 = sphi %s1, %s100
          %s79 = sphi [#allocation1], %s101
          %v80 = vphi %v77, %v102
          %s81 = ssub.s32 %s76, 64
          %p82 = scmp.gt.s32.totalorder %s78, %s81
        $region34: #{custom-call.2} parent=30 // loop_header_branch
          %84 = sbr.rel (%p82) target = $region38
        $region35: #{custom-call.2} parent=30 // loop_body
          %85 = vst [vmem:[%s79] sm:$0xff] %v80
          %v86 = vld [vmem:[%s78 + $0x8] sm:$0xff]
          %87 = vst [vmem:[%s79 + $0x8] sm:$0xff] %v86
          %v88 = vld [vmem:[%s78 + $0x10] sm:$0xff]
          %89 = vst [vmem:[%s79 + $0x10] sm:$0xff] %v88
          %v90 = vld [vmem:[%s78 + $0x18] sm:$0xff]
          %91 = vst [vmem:[%s79 + $0x18] sm:$0xff] %v90
          %v92 = vld [vmem:[%s78 + $0x20] sm:$0xff]
          %93 = vst [vmem:[%s79 + $0x20] sm:$0xff] %v92
          %v94 = vld [vmem:[%s78 + $0x28] sm:$0xff]
          %95 = vst [vmem:[%s79 + $0x28] sm:$0xff] %v94
          %v96 = vld [vmem:[%s78 + $0x30] sm:$0xff]
          %97 = vst [vmem:[%s79 + $0x30] sm:$0xff] %v96
          %v98 = vld [vmem:[%s78 + $0x38] sm:$0xff]
          %99 = vst [vmem:[%s79 + $0x38] sm:$0xff] %v98
        $region36: #{custom-call.2} parent=30 // loop_footer
          %s100 = scalar_lea.vmem %s78, 64
          %s101 = scalar_lea.vmem %s79, 64
          %v102 = vld [vmem:[%s78 + $0x40] sm:$0xff]
        $region37: #{custom-call.2} parent=30 // loop_footer_branch
          %103 = sbr.rel target = $region33
        $region38: #{custom-call.2} parent=30 // loop_exit
          _
        // While loop
        $region39: #{custom-call.2} parent=30 // loop_pre_header
          _
        $region40: #{custom-call.2} parent=30 // loop_header
          %s104 = sphi %s78, %s112
          %s105 = sphi %s79, %s113
          %v106 = vphi %v80, %v106
          %p107 = scmp.gt.s32.totalorder %s104, %s76
        $region41: #{custom-call.2} parent=30 // loop_header_branch
          %109 = sbr.rel (%p107) target = $region45
        $region42: #{custom-call.2} parent=30 // loop_body
          %v110 = vld [vmem:[%s104] sm:$0xff]
          %111 = vst [vmem:[%s105] sm:$0xff] %v110
        $region43: #{custom-call.2} parent=30 // loop_footer
          %s112 = scalar_lea.vmem %s104, 8
          %s113 = scalar_lea.vmem %s105, 8
        $region44: #{custom-call.2} parent=30 // loop_footer_branch
          %114 = sbr.rel target = $region40
        $region45: #{custom-call.2} parent=30 // loop_exit
          _
      $region31: #{custom-call.2} parent=26 // pred_fallthru
        _
      %s116 = ssub.s32 1, 1
      %s117 = smul.u32 1, 8
      %s118 = scalar_lea.vmem [#allocation1], %s117
      %s119 = smul.u32 1, 8
      %s120 = scalar_lea.vmem %s1, %s119
      %v121 = vld [vmem:[%s120] sm:%s116]
      %122 = vst [vmem:[%s118] sm:%s116] %v121
    $region27: #{custom-call.2} parent=1 // pred_fallthru
      _
    // Predicated region
    $region46: #{custom-call.2} parent=1 // pred_check
      _
    $region47: #{custom-call.2} parent=1 // pred_check_branch
      %124 = sbr.rel (0) target = $region49
    $region48: #{custom-call.2} parent=1 // pred_region
      %p126 = scmp.gt.s32.totalorder 1, 0
      // Predicated region
      $region50: #{custom-call.2} parent=48 // pred_check
        %p127 = pneg %p126
      $region51: #{custom-call.2} parent=48 // pred_check_branch
        %129 = sbr.rel (%p127) target = $region53
      $region52: #{custom-call.2} parent=48 // pred_region
        %s130 = ssub.s32 1, 1
        %s131 = smul.u32 %s130, 8
        %s132 = scalar_lea.vmem %s2, %s131
        %v133 = vld [vmem:[%s2] sm:$0xff]
        // While loop
        $region54: #{custom-call.2} parent=52 // loop_pre_header
          _
        $region55: #{custom-call.2} parent=52 // loop_header
          %s134 = sphi %s2, %s156
          %s135 = sphi [#allocation2], %s157
          %v136 = vphi %v133, %v158
          %s137 = ssub.s32 %s132, 64
          %p138 = scmp.gt.s32.totalorder %s134, %s137
        $region56: #{custom-call.2} parent=52 // loop_header_branch
          %140 = sbr.rel (%p138) target = $region60
        $region57: #{custom-call.2} parent=52 // loop_body
          %141 = vst [vmem:[%s135] sm:$0xff] %v136
          %v142 = vld [vmem:[%s134 + $0x8] sm:$0xff]
          %143 = vst [vmem:[%s135 + $0x8] sm:$0xff] %v142
          %v144 = vld [vmem:[%s134 + $0x10] sm:$0xff]
          %145 = vst [vmem:[%s135 + $0x10] sm:$0xff] %v144
          %v146 = vld [vmem:[%s134 + $0x18] sm:$0xff]
          %147 = vst [vmem:[%s135 + $0x18] sm:$0xff] %v146
          %v148 = vld [vmem:[%s134 + $0x20] sm:$0xff]
          %149 = vst [vmem:[%s135 + $0x20] sm:$0xff] %v148
          %v150 = vld [vmem:[%s134 + $0x28] sm:$0xff]
          %151 = vst [vmem:[%s135 + $0x28] sm:$0xff] %v150
          %v152 = vld [vmem:[%s134 + $0x30] sm:$0xff]
          %153 = vst [vmem:[%s135 + $0x30] sm:$0xff] %v152
          %v154 = vld [vmem:[%s134 + $0x38] sm:$0xff]
          %155 = vst [vmem:[%s135 + $0x38] sm:$0xff] %v154
        $region58: #{custom-call.2} parent=52 // loop_footer
          %s156 = scalar_lea.vmem %s134, 64
          %s157 = scalar_lea.vmem %s135, 64
          %v158 = vld [vmem:[%s134 + $0x40] sm:$0xff]
        $region59: #{custom-call.2} parent=52 // loop_footer_branch
          %159 = sbr.rel target = $region55
        $region60: #{custom-call.2} parent=52 // loop_exit
          _
        // While loop
        $region61: #{custom-call.2} parent=52 // loop_pre_header
          _
        $region62: #{custom-call.2} parent=52 // loop_header
          %s160 = sphi %s134, %s168
          %s161 = sphi %s135, %s169
          %v162 = vphi %v136, %v162
          %p163 = scmp.gt.s32.totalorder %s160, %s132
        $region63: #{custom-call.2} parent=52 // loop_header_branch
          %165 = sbr.rel (%p163) target = $region67
        $region64: #{custom-call.2} parent=52 // loop_body
          %v166 = vld [vmem:[%s160] sm:$0xff]
          %167 = vst [vmem:[%s161] sm:$0xff] %v166
        $region65: #{custom-call.2} parent=52 // loop_footer
          %s168 = scalar_lea.vmem %s160, 8
          %s169 = scalar_lea.vmem %s161, 8
        $region66: #{custom-call.2} parent=52 // loop_footer_branch
          %170 = sbr.rel target = $region62
        $region67: #{custom-call.2} parent=52 // loop_exit
          _
      $region53: #{custom-call.2} parent=48 // pred_fallthru
        _
      %s172 = ssub.s32 1, 1
      %s173 = smul.u32 1, 8
      %s174 = scalar_lea.vmem [#allocation2], %s173
      %s175 = smul.u32 1, 8
      %s176 = scalar_lea.vmem %s2, %s175
      %v177 = vld [vmem:[%s176] sm:%s172]
      %178 = vst [vmem:[%s174] sm:%s172] %v177
    $region49: #{custom-call.2} parent=1 // pred_fallthru
      _
    // Predicated region
    $region68: #{custom-call.2} parent=1 // pred_check
      _
    $region69: #{custom-call.2} parent=1 // pred_check_branch
      %180 = sbr.rel (0) target = $region71
    $region70: #{custom-call.2} parent=1 // pred_region
      %p182 = scmp.gt.s32.totalorder 1, 0
      // Predicated region
      $region72: #{custom-call.2} parent=70 // pred_check
        %p183 = pneg %p182
      $region73: #{custom-call.2} parent=70 // pred_check_branch
        %185 = sbr.rel (%p183) target = $region75
      $region74: #{custom-call.2} parent=70 // pred_region
        %s186 = ssub.s32 1, 1
        %s187 = smul.u32 %s186, 8
        %s188 = scalar_lea.vmem %s3, %s187
        %v189 = vld [vmem:[%s3] sm:$0xff]
        // While loop
        $region76: #{custom-call.2} parent=74 // loop_pre_header
          _
        $region77: #{custom-call.2} parent=74 // loop_header
          %s190 = sphi %s3, %s212
          %s191 = sphi [#allocation3], %s213
          %v192 = vphi %v189, %v214
          %s193 = ssub.s32 %s188, 64
          %p194 = scmp.gt.s32.totalorder %s190, %s193
        $region78: #{custom-call.2} parent=74 // loop_header_branch
          %196 = sbr.rel (%p194) target = $region82
        $region79: #{custom-call.2} parent=74 // loop_body
          %197 = vst [vmem:[%s191] sm:$0xff] %v192
          %v198 = vld [vmem:[%s190 + $0x8] sm:$0xff]
          %199 = vst [vmem:[%s191 + $0x8] sm:$0xff] %v198
          %v200 = vld [vmem:[%s190 + $0x10] sm:$0xff]
          %201 = vst [vmem:[%s191 + $0x10] sm:$0xff] %v200
          %v202 = vld [vmem:[%s190 + $0x18] sm:$0xff]
          %203 = vst [vmem:[%s191 + $0x18] sm:$0xff] %v202
          %v204 = vld [vmem:[%s190 + $0x20] sm:$0xff]
          %205 = vst [vmem:[%s191 + $0x20] sm:$0xff] %v204
          %v206 = vld [vmem:[%s190 + $0x28] sm:$0xff]
          %207 = vst [vmem:[%s191 + $0x28] sm:$0xff] %v206
          %v208 = vld [vmem:[%s190 + $0x30] sm:$0xff]
          %209 = vst [vmem:[%s191 + $0x30] sm:$0xff] %v208
          %v210 = vld [vmem:[%s190 + $0x38] sm:$0xff]
          %211 = vst [vmem:[%s191 + $0x38] sm:$0xff] %v210
        $region80: #{custom-call.2} parent=74 // loop_footer
          %s212 = scalar_lea.vmem %s190, 64
          %s213 = scalar_lea.vmem %s191, 64
          %v214 = vld [vmem:[%s190 + $0x40] sm:$0xff]
        $region81: #{custom-call.2} parent=74 // loop_footer_branch
          %215 = sbr.rel target = $region77
        $region82: #{custom-call.2} parent=74 // loop_exit
          _
        // While loop
        $region83: #{custom-call.2} parent=74 // loop_pre_header
          _
        $region84: #{custom-call.2} parent=74 // loop_header
          %s216 = sphi %s190, %s224
          %s217 = sphi %s191, %s225
          %v218 = vphi %v192, %v218
          %p219 = scmp.gt.s32.totalorder %s216, %s188
        $region85: #{custom-call.2} parent=74 // loop_header_branch
          %221 = sbr.rel (%p219) target = $region89
        $region86: #{custom-call.2} parent=74 // loop_body
          %v222 = vld [vmem:[%s216] sm:$0xff]
          %223 = vst [vmem:[%s217] sm:$0xff] %v222
        $region87: #{custom-call.2} parent=74 // loop_footer
          %s224 = scalar_lea.vmem %s216, 8
          %s225 = scalar_lea.vmem %s217, 8
        $region88: #{custom-call.2} parent=74 // loop_footer_branch
          %226 = sbr.rel target = $region84
        $region89: #{custom-call.2} parent=74 // loop_exit
          _
      $region75: #{custom-call.2} parent=70 // pred_fallthru
        _
      %s228 = ssub.s32 1, 1
      %s229 = smul.u32 1, 8
      %s230 = scalar_lea.vmem [#allocation3], %s229
      %s231 = smul.u32 1, 8
      %s232 = scalar_lea.vmem %s3, %s231
      %v233 = vld [vmem:[%s232] sm:%s228]
      %234 = vst [vmem:[%s230] sm:%s228] %v233
    $region71: #{custom-call.2} parent=1 // pred_fallthru
      _
    %s235 = smov [#allocation12]
    %v236 = vld [vmem:[#allocation0] sm:$0xff]
    %237 = vst [vmem:[%s235] sm:$0xff] %v236
    %s238 = smov [#allocation13]
    %v239 = vld [vmem:[#allocation1] sm:$0xff]
    %240 = vst [vmem:[%s238] sm:$0xff] %v239
    %s241 = smov [#allocation14]
    %v242 = vld [vmem:[#allocation2] sm:$0xff]
    %243 = vst [vmem:[%s241] sm:$0xff] %v242
    %s244 = smov [#allocation15]
    %v245 = vld [vmem:[#allocation3] sm:$0xff]
    %246 = vst [vmem:[%s244] sm:$0xff] %v245
    %247 = vst [vmem:[#allocation8] sm:$0xff] 0.0
    %248 = vst [vmem:[#allocation9] sm:$0xff] 0.0
    %249 = vst [vmem:[#allocation10] sm:$0xff] 0.0
    %250 = vst [vmem:[#allocation11] sm:$0xff] 0.0
    %s251 = smov [#allocation8]
    %v252 = vlaneseq
    %v253 = vand.u32 %v252, 127
    %v254 = vmov %v253
    %v255 = vlaneseq
    %v256 = vshrl.u32 %v255, 7
    %v257 = vmov %v256
    %v258 = vld [vmem:[%s251] sm:$0xff]
    %vm261 = vcmp.eq.s32.totalorder %v257, %v254
    %v262 = vsel %vm261, 1.0, %v258
    %263 = vst [vmem:[%s251] sm:$0xff] %v262
    %s264 = smov [#allocation11]
    %v265 = vlaneseq
    %v266 = vand.u32 %v265, 127
    %v267 = vmov %v266
    %v268 = vlaneseq
    %v269 = vshrl.u32 %v268, 7
    %v270 = vmov %v269
    %v271 = vld [vmem:[%s264] sm:$0xff]
    %vm274 = vcmp.eq.s32.totalorder %v270, %v267
    %v275 = vsel %vm274, 1.0, %v271
    %276 = vst [vmem:[%s264] sm:$0xff] %v275
    // While loop
    $region90: #{custom-call.2} parent=1 // loop_pre_header
      _
    $region91: #{custom-call.2} parent=1 // loop_header
      %s278 = sphi 0, %s860
      %v279 = vlaneseq
      %v280 = vand.u32 %v279, 127
      %v281 = vmov %v280
      %v282 = vlaneseq
      %v283 = vshrl.u32 %v282, 7
      %v284 = vmov %v283
      %s285 = smov [#allocation12]
      %v286 = vlaneseq
      %v287 = vand.u32 %v286, 127
      %vm288 = vcmp.ge.s32.totalorder %v287, 0
      %vm289 = vcmp.lt.s32.totalorder %v287, 8
      %vm290 = vmand %vm288, %vm289
      %v291 = vld [vmem:[%s285] sm:$0xff]
      %v292 = vsel %vm290, %v291, 0.0
      %v293 = vmul.f32 %v292, %v292
      %vm296 = vcmp.eq.s32.totalorder %v284, %v281
      %v297 = vsel %vm296, 0.0, %v293
      %v298 = vlaneseq
      %v299 = vand.u32 %v298, 127
      %v300 = vmov %v299
      %v301 = vlaneseq
      %v302 = vshrl.u32 %v301, 7
      %v303 = vmov %v302
      %s304 = smov [#allocation13]
      %v305 = vlaneseq
      %v306 = vand.u32 %v305, 127
      %vm307 = vcmp.ge.s32.totalorder %v306, 0
      %vm308 = vcmp.lt.s32.totalorder %v306, 8
      %vm309 = vmand %vm307, %vm308
      %v310 = vld [vmem:[%s304] sm:$0xff]
      %v311 = vsel %vm309, %v310, 0.0
      %v312 = vmul.f32 %v311, %v311
      %v313 = vadd.f32 %v297, %v312
      %v314 = vadd.f32 %v293, %v312
      %v315 = vlaneseq
      %v316 = vand.u32 %v315, 127
      %v317 = vmov %v316
      %v318 = vlaneseq
      %v319 = vshrl.u32 %v318, 7
      %v320 = vmov %v319
      %s321 = smov [#allocation14]
      %v322 = vlaneseq
      %v323 = vand.u32 %v322, 127
      %vm324 = vcmp.ge.s32.totalorder %v323, 0
      %vm325 = vcmp.lt.s32.totalorder %v323, 8
      %vm326 = vmand %vm324, %vm325
      %v327 = vld [vmem:[%s321] sm:$0xff]
      %v328 = vsel %vm326, %v327, 0.0
      %v329 = vmul.f32 %v328, %v328
      %v330 = vadd.f32 %v313, %v329
      %v331 = vadd.f32 %v314, %v329
      %v332 = vlaneseq
      %v333 = vand.u32 %v332, 127
      %v334 = vmov %v333
      %v335 = vlaneseq
      %v336 = vshrl.u32 %v335, 7
      %v337 = vmov %v336
      %s338 = smov [#allocation15]
      %v339 = vlaneseq
      %v340 = vand.u32 %v339, 127
      %vm341 = vcmp.ge.s32.totalorder %v340, 0
      %vm342 = vcmp.lt.s32.totalorder %v340, 8
      %vm343 = vmand %vm341, %vm342
      %v344 = vld [vmem:[%s338] sm:$0xff]
      %v345 = vsel %vm343, %v344, 0.0
      %v346 = vmul.f32 %v345, %v345
      %vm349 = vcmp.eq.s32.totalorder %v337, %v334
      %v350 = vsel %vm349, 0.0, %v346
      %v351 = vadd.f32 %v330, %v350
      %v352 = vadd.f32 %v331, %v346
      %353 = vadd.xlane.f32.xlu0 %v352
      %v354 = vpop.xlane.xlu0 %353
      %v355 = vrot.slane %v354, 4
      %v356 = vadd.f32 %v354, %v355
      %v357 = vrot.slane %v356, 2
      %v358 = vadd.f32 %v356, %v357
      %v359 = vrot.slane %v358, 1
      %v360 = vadd.f32 %v358, %v359
      %361 = vadd.xlane.f32.xlu0 %v351
      %v362 = vpop.xlane.xlu0 %361
      %v363 = vrot.slane %v362, 4
      %v364 = vadd.f32 %v362, %v363
      %v365 = vrot.slane %v364, 2
      %v366 = vadd.f32 %v364, %v365
      %v367 = vrot.slane %v366, 1
      %v368 = vadd.f32 %v366, %v367
      %s369 = vtos %v368
      %s370 = vtos %v360
      %s371 = smul.f32 1e-10, %s370
      %p372 = scmp.le.f32.partialorder %s369, %s371
      %p373 = scmp.ge.s32.totalorder %s278, 15
      %p374 = por %p372, %p373
    $region92: #{custom-call.2} parent=1 // loop_header_branch
      %862 = sbr.rel (%p374) target = $region96
    $region93: #{custom-call.2} parent=1 // loop_body
      loop: start=0, step=1, limit=15
      $region97: #{custom-call.2} parent=93 // loop_pre_header
        _
      $region98: #{custom-call.2} parent=93 // loop_header
        %s376 = sphi 0, %s380
        %p377 = scmp.ge.s32.totalorder %s376, 15
      $region99: #{custom-call.2} parent=93 // loop_header_branch
        %379 = sbr.rel (%p377) target = $region103
      $region100: #{custom-call.2} parent=93 // loop_body
        #allocation16 [shape = 'f32[1024]{0}', space=vmem, size = 0x1000, scoped, tag = 'a_tl_diag vmem']
        #allocation17 [shape = 'f32[1024]{0}', space=vmem, size = 0x1000, scoped, tag = 'a_tr_diag vmem']
        #allocation18 [shape = 'f32[1024]{0}', space=vmem, size = 0x1000, scoped, tag = 'a_br_diag vmem']
        #allocation19 [shape = 'f32[1024]{0}', space=vmem, size = 0x1000, scoped, tag = 'rt1 vmem']
        #allocation20 [shape = 'f32[1024]{0}', space=vmem, size = 0x1000, scoped, tag = 'rt2 vmem']
        #allocation21 [shape = 'f32[1024]{0}', space=vmem, size = 0x1000, scoped, tag = 'c vmem']
        #allocation22 [shape = 'f32[1024]{0}', space=vmem, size = 0x1000, scoped, tag = 's vmem']
        #allocation23 [shape = 'f32[4096]{0}', space=vmem, size = 0x4000, scoped, tag = 'c broadcast']
        #allocation24 [shape = 'f32[4096]{0}', space=vmem, size = 0x4000, scoped, tag = 's broadcast']
        %s381 = smov [#allocation12]
        %s382 = smov [#allocation16]
        %v383 = vlaneseq
        %v384 = vand.u32 %v383, 127
        %v385 = vmov %v384
        %v386 = vlaneseq
        %v387 = vshrl.u32 %v386, 7
        %v388 = vmov %v387
        %v389 = vld [vmem:[%s381] sm:$0xff]
        %vm392 = vcmp.eq.s32.totalorder %v388, %v385
        %v393 = vsel %vm392, %v389, 0.0
        %v394 = vrot.slane %v393, 4
        %v395 = vadd.f32 %v393, %v394
        %v396 = vrot.slane %v395, 2
        %v397 = vadd.f32 %v395, %v396
        %v398 = vrot.slane %v397, 1
        %v399 = vadd.f32 %v397, %v398
        %400 = vst [vmem:[%s382] sm:$0x1] %v399
        %s401 = smov [#allocation13]
        %s402 = smov [#allocation17]
        %v403 = vlaneseq
        %v404 = vand.u32 %v403, 127
        %v405 = vmov %v404
        %v406 = vlaneseq
        %v407 = vshrl.u32 %v406, 7
        %v408 = vmov %v407
        %v409 = vld [vmem:[%s401] sm:$0xff]
        %vm412 = vcmp.eq.s32.totalorder %v408, %v405
        %v413 = vsel %vm412, %v409, 0.0
        %v414 = vrot.slane %v413, 4
        %v415 = vadd.f32 %v413, %v414
        %v416 = vrot.slane %v415, 2
        %v417 = vadd.f32 %v415, %v416
        %v418 = vrot.slane %v417, 1
        %v419 = vadd.f32 %v417, %v418
        %420 = vst [vmem:[%s402] sm:$0x1] %v419
        %s421 = smov [#allocation15]
        %s422 = smov [#allocation18]
        %v423 = vlaneseq
        %v424 = vand.u32 %v423, 127
        %v425 = vmov %v424
        %v426 = vlaneseq
        %v427 = vshrl.u32 %v426, 7
        %v428 = vmov %v427
        %v429 = vld [vmem:[%s421] sm:$0xff]
        %vm432 = vcmp.eq.s32.totalorder %v428, %v425
        %v433 = vsel %vm432, %v429, 0.0
        %v434 = vrot.slane %v433, 4
        %v435 = vadd.f32 %v433, %v434
        %v436 = vrot.slane %v435, 2
        %v437 = vadd.f32 %v435, %v436
        %v438 = vrot.slane %v437, 1
        %v439 = vadd.f32 %v437, %v438
        %440 = vst [vmem:[%s422] sm:$0x1] %v439
        %s441 = smov [#allocation21]
        %s442 = smov [#allocation22]
        %s443 = smov [#allocation16]
        %v444 = vld [vmem:[%s443] sm:$0xff]
        %s445 = smov [#allocation17]
        %v446 = vld [vmem:[%s445] sm:$0xff]
        %s447 = smov [#allocation18]
        %v448 = vld [vmem:[%s447] sm:$0xff]
        %v449 = vsub.f32 %v448, %v444
        %v450 = vmul.f32 2.0, %v446
        %v451 = vrcp.pop %v450
        %v452 = vmul.f32 %v450, %v451
        %v453 = vsub.f32 1.0, %v452
        %v454 = vmul.f32 %v451, %v453
        %v455 = vadd.f32 %v451, %v454
        %vm456 = vweird.f32 %v450
        %vm457 = vweird.f32 %v451
        %vm458 = vmor %vm456, %vm457
        %v459 = vsel %vm458, %v451, %v455
        %v460 = vand.u32 2147483647, %v450
        %vm461 = vcmp.eq.f32.partialorder %v460, 8.507059e+37
        %v462 = vand.u32 %v450, 2147483648
        %v463 = vor.u32 1.1754944e-38, %v462
        %v464 = vsel %vm461, %v463, %v459
        %v465 = vmul.f32 %v449, %v464
        %vm466 = vcmp.ge.f32.partialorder %v465, 0.0
        %v467 = vmul.f32 %v465, %v465
        %v468 = vadd.f32 1.0, %v467
        %v469 = vrsqrt.pop %v468
        %v470 = vmul.f32 %v469, %v468
        %v471 = vmul.f32 %v470, %v469
        %v472 = vmul.f32 0.5, %v471
        %v473 = vsub.f32 1.5, %v472
        %v474 = vmul.f32 %v469, %v473
        %v475 = vmul.f32 %v468, %v474
        %vm476 = vcmp.eq.f32.partialorder %v468, inf
        %v477 = vsel %vm476, %v468, %v475
        %vm478 = vcmp.eq.f32.partialorder %v468, 0.0
        %v479 = vand.u32 %v468, 2147483648
        %v480 = vsel %vm478, %v479, %v477
        %v481 = vxor.u32 %v480, 2147483648
        %v482 = vsel %vm466, %v480, %v481
        %v483 = vadd.f32 %v465, %v482
        %v484 = vrcp.pop %v483
        %v485 = vmul.f32 %v483, %v484
        %v486 = vsub.f32 1.0, %v485
        %v487 = vmul.f32 %v484, %v486
        %v488 = vadd.f32 %v484, %v487
        %vm489 = vweird.f32 %v483
        %vm490 = vweird.f32 %v484
        %vm491 = vmor %vm489, %vm490
        %v492 = vsel %vm491, %v484, %v488
        %v493 = vand.u32 2147483647, %v483
        %vm494 = vcmp.eq.f32.partialorder %v493, 8.507059e+37
        %v495 = vand.u32 %v483, 2147483648
        %v496 = vor.u32 1.1754944e-38, %v495
        %v497 = vsel %vm494, %v496, %v492
        %v498 = vand.u32 2147483647, %v444
        %v499 = vand.u32 2147483647, %v446
        %v500 = vand.u32 2147483647, %v448
        %v501 = vmin.f32 %v498, %v500
        %v502 = vmul.f32 1.1920929e-08, %v501
        %vm503 = vcmp.le.f32.partialorder %v499, %v502
        %v504 = vsel %vm503, 0.0, %v497
        %v505 = vmul.f32 %v504, %v504
        %v506 = vadd.f32 1.0, %v505
        %v507 = vrsqrt.pop %v506
        %v508 = vmul.f32 %v507, %v506
        %v509 = vmul.f32 %v508, %v507
        %v510 = vmul.f32 0.5, %v509
        %v511 = vsub.f32 1.5, %v510
        %v512 = vmul.f32 %v507, %v511
        %vm513 = vweird.f32 %v506
        %vm514 = vweird.f32 %v507
        %vm515 = vmor %vm513, %vm514
        %v516 = vsel %vm515, %v507, %v512
        %v517 = vmul.f32 %v504, %v516
        %v518 = vmul.f32 %v504, %v446
        %v519 = vsub.f32 %v444, %v518
        %v520 = vmul.f32 %v504, %v446
        %v521 = vadd.f32 %v448, %v520
        %s522 = smov [#allocation19]
        %523 = vst [vmem:[%s522] sm:$0xff] %v519
        %s524 = smov [#allocation20]
        %525 = vst [vmem:[%s524] sm:$0xff] %v521
        %s526 = smov %s441
        %527 = vst [vmem:[%s526] sm:$0xff] %v516
        %s528 = smov %s442
        %529 = vst [vmem:[%s528] sm:$0xff] %v517
        %s530 = smov [#allocation21]
        %v531 = vld [vmem:[%s530] ss:$0 sm:$0xff]
        %v532 = vlaneseq
        %v533 = vand.u32 %v532, 127
        %v534 = vmov %v533
        %v535 = vlaneseq
        %v536 = vshrl.u32 %v535, 7
        %v537 = vmov %v536
        %vm539 = vcmp.eq.s32.totalorder %v537, %v534
        %v540 = vsel %vm539, %v531, 0.0
        %541 = vadd.xlane.f32.xlu0 %v540
        %v542 = vpop.xlane.xlu0 %541
        %s543 = smov [#allocation23]
        %544 = vst [vmem:[%s543] sm:$0xff] %v542
        %s545 = smov [#allocation22]
        %v546 = vld [vmem:[%s545] ss:$0 sm:$0xff]
        %v547 = vlaneseq
        %v548 = vand.u32 %v547, 127
        %v549 = vmov %v548
        %v550 = vlaneseq
        %v551 = vshrl.u32 %v550, 7
        %v552 = vmov %v551
        %vm554 = vcmp.eq.s32.totalorder %v552, %v549
        %v555 = vsel %vm554, %v546, 0.0
        %556 = vadd.xlane.f32.xlu0 %v555
        %v557 = vpop.xlane.xlu0 %556
        %s558 = smov [#allocation24]
        %559 = vst [vmem:[%s558] sm:$0xff] %v557
        %s560 = smov [#allocation23]
        %v561 = vld [vmem:[%s560] sm:$0xff]
        %s562 = smov [#allocation24]
        %v563 = vld [vmem:[%s562] sm:$0xff]
        %s564 = smov [#allocation12]
        %s565 = smov [#allocation13]
        %s566 = smov [#allocation14]
        %s567 = smov [#allocation15]
        %v568 = vld [vmem:[%s564] sm:$0xff]
        %v569 = vld [vmem:[%s565] sm:$0xff]
        %v570 = vld [vmem:[%s566] sm:$0xff]
        %v571 = vld [vmem:[%s567] sm:$0xff]
        %v572 = vmul.f32 %v561, %v568
        %v573 = vmul.f32 %v563, %v570
        %v574 = vsub.f32 %v572, %v573
        %v575 = vmul.f32 %v561, %v569
        %v576 = vmul.f32 %v563, %v571
        %v577 = vsub.f32 %v575, %v576
        %v578 = vmul.f32 %v563, %v568
        %v579 = vmul.f32 %v561, %v570
        %v580 = vadd.f32 %v578, %v579
        %v581 = vmul.f32 %v563, %v569
        %v582 = vmul.f32 %v561, %v571
        %v583 = vadd.f32 %v581, %v582
        %584 = vst [vmem:[%s564] sm:$0xff] %v574
        %585 = vst [vmem:[%s565] sm:$0xff] %v577
        %586 = vst [vmem:[%s566] sm:$0xff] %v580
        %587 = vst [vmem:[%s567] sm:$0xff] %v583
        %s588 = smov [#allocation21]
        %v589 = vld [vmem:[%s588] ss:$0 sm:$0xff]
        %s590 = smov [#allocation22]
        %v591 = vld [vmem:[%s590] ss:$0 sm:$0xff]
        %s592 = smov [#allocation12]
        %s593 = smov [#allocation13]
        %s594 = smov [#allocation14]
        %s595 = smov [#allocation15]
        %v596 = vld [vmem:[%s592] sm:$0xff]
        %v597 = vld [vmem:[%s593] sm:$0xff]
        %v598 = vld [vmem:[%s594] sm:$0xff]
        %v599 = vld [vmem:[%s595] sm:$0xff]
        %v600 = vmul.f32 %v589, %v596
        %v601 = vmul.f32 %v591, %v597
        %v602 = vsub.f32 %v600, %v601
        %v603 = vmul.f32 %v591, %v596
        %v604 = vmul.f32 %v589, %v597
        %v605 = vadd.f32 %v603, %v604
        %v606 = vmul.f32 %v589, %v598
        %v607 = vmul.f32 %v591, %v599
        %v608 = vsub.f32 %v606, %v607
        %v609 = vmul.f32 %v591, %v598
        %v610 = vmul.f32 %v589, %v599
        %v611 = vadd.f32 %v609, %v610
        %612 = vst [vmem:[%s592] sm:$0xff] %v602
        %613 = vst [vmem:[%s593] sm:$0xff] %v605
        %614 = vst [vmem:[%s594] sm:$0xff] %v608
        %615 = vst [vmem:[%s595] sm:$0xff] %v611
        %s616 = smov [#allocation12]
        %s617 = smov [#allocation19]
        %v618 = vlaneseq
        %v619 = vand.u32 %v618, 127
        %v620 = vmov %v619
        %v621 = vlaneseq
        %v622 = vshrl.u32 %v621, 7
        %v623 = vmov %v622
        %v624 = vld [vmem:[%s617] ss:$0 sm:$0xff]
        %v625 = vld [vmem:[%s616] sm:$0xff]
        %vm628 = vcmp.eq.s32.totalorder %v623, %v620
        %v629 = vsel %vm628, %v624, %v625
        %630 = vst [vmem:[%s616] sm:$0xff] %v629
        %s631 = smov [#allocation13]
        %v632 = vlaneseq
        %v633 = vand.u32 %v632, 127
        %v634 = vmov %v633
        %v635 = vlaneseq
        %v636 = vshrl.u32 %v635, 7
        %v637 = vmov %v636
        %v638 = vld [vmem:[%s631] sm:$0xff]
        %vm641 = vcmp.eq.s32.totalorder %v637, %v634
        %v642 = vsel %vm641, 0.0, %v638
        %643 = vst [vmem:[%s631] sm:$0xff] %v642
        %s644 = smov [#allocation14]
        %v645 = vlaneseq
        %v646 = vand.u32 %v645, 127
        %v647 = vmov %v646
        %v648 = vlaneseq
        %v649 = vshrl.u32 %v648, 7
        %v650 = vmov %v649
        %v651 = vld [vmem:[%s644] sm:$0xff]
        %vm654 = vcmp.eq.s32.totalorder %v650, %v647
        %v655 = vsel %vm654, 0.0, %v651
        %656 = vst [vmem:[%s644] sm:$0xff] %v655
        %s657 = smov [#allocation15]
        %s658 = smov [#allocation20]
        %v659 = vlaneseq
        %v660 = vand.u32 %v659, 127
        %v661 = vmov %v660
        %v662 = vlaneseq
        %v663 = vshrl.u32 %v662, 7
        %v664 = vmov %v663
        %v665 = vld [vmem:[%s658] ss:$0 sm:$0xff]
        %v666 = vld [vmem:[%s657] sm:$0xff]
        %vm669 = vcmp.eq.s32.totalorder %v664, %v661
        %v670 = vsel %vm669, %v665, %v666
        %671 = vst [vmem:[%s657] sm:$0xff] %v670
        %s672 = smov [#allocation12]
        %s673 = smov [#allocation13]
        %v674 = vld [vmem:[%s673] sm:$0xff]
        %675 = vrot.lane.b32.xlu0 %v674, 1
        %v676 = vpop.permute.xlu0 %675
        %v677 = vld [vmem:[%s672] sm:$0xff]
        %v678 = vld [vmem:[%s672] sm:$0xff]
        %679 = vrot.lane.b32.xlu0 %v678, 1
        %v680 = vpop.permute.xlu0 %679
        %v681 = vlaneseq
        %v682 = vand.u32 %v681, 127
        %vm683 = vcmp.eq.s32.totalorder %v682, 0
        %v684 = vsel %vm683, %v678, %v680
        %v685 = vlaneseq
        %v686 = vand.u32 %v685, 127
        %vm687 = vcmp.eq.s32.totalorder %v686, 1
        %v688 = vsel %vm687, %v676, %v684
        %v689 = vlaneseq
        %v690 = vand.u32 %v689, 127
        %vm691 = vcmp.ge.s32.totalorder %v690, 0
        %vm692 = vcmp.lt.s32.totalorder %v690, 8
        %vm693 = vmand %vm691, %vm692
        %v694 = vsel %vm693, %v688, 0.0
        %v695 = vld [vmem:[%s673] sm:$0xff]
        %696 = vrot.lane.b32.xlu0 %v695, 127
        %v697 = vpop.permute.xlu0 %696
        %v698 = vlaneseq
        %v699 = vand.u32 %v698, 127
        %vm700 = vcmp.eq.s32.totalorder %v699, 7
        %v701 = vsel %vm700, %v677, %v697
        %702 = vst [vmem:[%s672] sm:$0xff] %v694
        %703 = vst [vmem:[%s673] sm:$0xff] %v701
        %s704 = smov [#allocation14]
        %s705 = smov [#allocation15]
        %v706 = vld [vmem:[%s705] sm:$0xff]
        %707 = vrot.lane.b32.xlu0 %v706, 1
        %v708 = vpop.permute.xlu0 %707
        %v709 = vld [vmem:[%s704] sm:$0xff]
        %v710 = vld [vmem:[%s704] sm:$0xff]
        %711 = vrot.lane.b32.xlu0 %v710, 1
        %v712 = vpop.permute.xlu0 %711
        %v713 = vlaneseq
        %v714 = vand.u32 %v713, 127
        %vm715 = vcmp.eq.s32.totalorder %v714, 0
        %v716 = vsel %vm715, %v710, %v712
        %v717 = vlaneseq
        %v718 = vand.u32 %v717, 127
        %vm719 = vcmp.eq.s32.totalorder %v718, 1
        %v720 = vsel %vm719, %v708, %v716
        %v721 = vlaneseq
        %v722 = vand.u32 %v721, 127
        %vm723 = vcmp.ge.s32.totalorder %v722, 0
        %vm724 = vcmp.lt.s32.totalorder %v722, 8
        %vm725 = vmand %vm723, %vm724
        %v726 = vsel %vm725, %v720, 0.0
        %v727 = vld [vmem:[%s705] sm:$0xff]
        %728 = vrot.lane.b32.xlu0 %v727, 127
        %v729 = vpop.permute.xlu0 %728
        %v730 = vlaneseq
        %v731 = vand.u32 %v730, 127
        %vm732 = vcmp.eq.s32.totalorder %v731, 7
        %v733 = vsel %vm732, %v709, %v729
        %734 = vst [vmem:[%s704] sm:$0xff] %v726
        %735 = vst [vmem:[%s705] sm:$0xff] %v733
        %s736 = smov [#allocation12]
        %s737 = smov [#allocation14]
        %v738 = vld [vmem:[%s736] ss:$0 sm:$0xff]
        %s740 = scalar_lea.vmem %s736, 4294967295
        %v741 = vld [vmem:[%s740] sm:$0xfe]
        %v742 = vlaneseq
        %v743 = vshrl.u32 %v742, 7
        %vm744 = vcmp.eq.s32.totalorder %v743, 0
        %v745 = vsel %vm744, %v738, %v741
        %s746 = scalar_lea.vmem %s736, 7
        %v747 = vld [vmem:[%s746] ss:$0 sm:$0xff]
        %748 = vst [vmem:[%s736] sm:$0xff] %v745
        %v749 = vld [vmem:[%s737] ss:$0 sm:$0xff]
        %s750 = scalar_lea.vmem %s736, 1
        %751 = vst [vmem:[%s750] sm:$0x1] %v749
        %s752 = scalar_lea.vmem %s737, 1
        %v753 = vld [vmem:[%s752] sm:$0x7f]
        %v754 = vlaneseq
        %v755 = vshrl.u32 %v754, 7
        %vm756 = vcmp.eq.s32.totalorder %v755, 7
        %v757 = vsel %vm756, %v747, %v753
        %v758 = vld [vmem:[%s737] ss:$0 sm:$0xff]
        %759 = vst [vmem:[%s737] sm:$0xff] %v757
        %s760 = smov [#allocation13]
        %s761 = smov [#allocation15]
        %v762 = vld [vmem:[%s760] ss:$0 sm:$0xff]
        %s764 = scalar_lea.vmem %s760, 4294967295
        %v765 = vld [vmem:[%s764] sm:$0xfe]
        %v766 = vlaneseq
        %v767 = vshrl.u32 %v766, 7
        %vm768 = vcmp.eq.s32.totalorder %v767, 0
        %v769 = vsel %vm768, %v762, %v765
        %s770 = scalar_lea.vmem %s760, 7
        %v771 = vld [vmem:[%s770] ss:$0 sm:$0xff]
        %772 = vst [vmem:[%s760] sm:$0xff] %v769
        %v773 = vld [vmem:[%s761] ss:$0 sm:$0xff]
        %s774 = scalar_lea.vmem %s760, 1
        %775 = vst [vmem:[%s774] sm:$0x1] %v773
        %s776 = scalar_lea.vmem %s761, 1
        %v777 = vld [vmem:[%s776] sm:$0x7f]
        %v778 = vlaneseq
        %v779 = vshrl.u32 %v778, 7
        %vm780 = vcmp.eq.s32.totalorder %v779, 7
        %v781 = vsel %vm780, %v771, %v777
        %v782 = vld [vmem:[%s761] ss:$0 sm:$0xff]
        %783 = vst [vmem:[%s761] sm:$0xff] %v781
        %s784 = smov [#allocation23]
        %v785 = vld [vmem:[%s784] sm:$0xff]
        %s786 = smov [#allocation24]
        %v787 = vld [vmem:[%s786] sm:$0xff]
        %s788 = smov [#allocation8]
        %s789 = smov [#allocation9]
        %s790 = smov [#allocation10]
        %s791 = smov [#allocation11]
        %v792 = vld [vmem:[%s788] sm:$0xff]
        %v793 = vld [vmem:[%s789] sm:$0xff]
        %v794 = vld [vmem:[%s790] sm:$0xff]
        %v795 = vld [vmem:[%s791] sm:$0xff]
        %v796 = vmul.f32 %v785, %v792
        %v797 = vmul.f32 %v787, %v794
        %v798 = vsub.f32 %v796, %v797
        %v799 = vmul.f32 %v785, %v793
        %v800 = vmul.f32 %v787, %v795
        %v801 = vsub.f32 %v799, %v800
        %v802 = vmul.f32 %v787, %v792
        %v803 = vmul.f32 %v785, %v794
        %v804 = vadd.f32 %v802, %v803
        %v805 = vmul.f32 %v787, %v793
        %v806 = vmul.f32 %v785, %v795
        %v807 = vadd.f32 %v805, %v806
        %808 = vst [vmem:[%s788] sm:$0xff] %v798
        %809 = vst [vmem:[%s789] sm:$0xff] %v801
        %810 = vst [vmem:[%s790] sm:$0xff] %v804
        %811 = vst [vmem:[%s791] sm:$0xff] %v807
        %s812 = smov [#allocation8]
        %s813 = smov [#allocation10]
        %v814 = vld [vmem:[%s812] ss:$0 sm:$0xff]
        %s816 = scalar_lea.vmem %s812, 4294967295
        %v817 = vld [vmem:[%s816] sm:$0xfe]
        %v818 = vlaneseq
        %v819 = vshrl.u32 %v818, 7
        %vm820 = vcmp.eq.s32.totalorder %v819, 0
        %v821 = vsel %vm820, %v814, %v817
        %s822 = scalar_lea.vmem %s812, 7
        %v823 = vld [vmem:[%s822] ss:$0 sm:$0xff]
        %824 = vst [vmem:[%s812] sm:$0xff] %v821
        %v825 = vld [vmem:[%s813] ss:$0 sm:$0xff]
        %s826 = scalar_lea.vmem %s812, 1
        %827 = vst [vmem:[%s826] sm:$0x1] %v825
        %s828 = scalar_lea.vmem %s813, 1
        %v829 = vld [vmem:[%s828] sm:$0x7f]
        %v830 = vlaneseq
        %v831 = vshrl.u32 %v830, 7
        %vm832 = vcmp.eq.s32.totalorder %v831, 7
        %v833 = vsel %vm832, %v823, %v829
        %v834 = vld [vmem:[%s813] ss:$0 sm:$0xff]
        %835 = vst [vmem:[%s813] sm:$0xff] %v833
        %s836 = smov [#allocation9]
        %s837 = smov [#allocation11]
        %v838 = vld [vmem:[%s836] ss:$0 sm:$0xff]
        %s840 = scalar_lea.vmem %s836, 4294967295
        %v841 = vld [vmem:[%s840] sm:$0xfe]
        %v842 = vlaneseq
        %v843 = vshrl.u32 %v842, 7
        %vm844 = vcmp.eq.s32.totalorder %v843, 0
        %v845 = vsel %vm844, %v838, %v841
        %s846 = scalar_lea.vmem %s836, 7
        %v847 = vld [vmem:[%s846] ss:$0 sm:$0xff]
        %848 = vst [vmem:[%s836] sm:$0xff] %v845
        %v849 = vld [vmem:[%s837] ss:$0 sm:$0xff]
        %s850 = scalar_lea.vmem %s836, 1
        %851 = vst [vmem:[%s850] sm:$0x1] %v849
        %s852 = scalar_lea.vmem %s837, 1
        %v853 = vld [vmem:[%s852] sm:$0x7f]
        %v854 = vlaneseq
        %v855 = vshrl.u32 %v854, 7
        %vm856 = vcmp.eq.s32.totalorder %v855, 7
        %v857 = vsel %vm856, %v847, %v853
        %v858 = vld [vmem:[%s837] ss:$0 sm:$0xff]
        %859 = vst [vmem:[%s837] sm:$0xff] %v857
      $region101: #{custom-call.2} parent=93 // loop_footer
        %s380 = sadd.s32 1, %s376
      $region102: #{custom-call.2} parent=93 // loop_footer_branch
        %375 = sbr.rel target = $region98
      $region103: #{custom-call.2} parent=93 // loop_exit
        _
      %s860 = sadd.s32 %s278, 1
    $region94: #{custom-call.2} parent=1 // loop_footer
      _
    $region95: #{custom-call.2} parent=1 // loop_footer_branch
      %277 = sbr.rel target = $region91
    $region96: #{custom-call.2} parent=1 // loop_exit
      _
    %s863 = smov [#allocation12]
    %s864 = smov [#allocation4]
    %v865 = vlaneseq
    %v866 = vand.u32 %v865, 127
    %v867 = vmov %v866
    %v868 = vlaneseq
    %v869 = vshrl.u32 %v868, 7
    %v870 = vmov %v869
    %v871 = vld [vmem:[%s863] sm:$0xff]
    %vm874 = vcmp.eq.s32.totalorder %v870, %v867
    %v875 = vsel %vm874, %v871, 0.0
    %v876 = vrot.slane %v875, 4
    %v877 = vadd.f32 %v875, %v876
    %v878 = vrot.slane %v877, 2
    %v879 = vadd.f32 %v877, %v878
    %v880 = vrot.slane %v879, 1
    %v881 = vadd.f32 %v879, %v880
    %882 = vst [vmem:[%s864] sm:$0x1] %v881
    %s883 = smov [#allocation15]
    %s884 = smov [#allocation6]
    %v885 = vlaneseq
    %v886 = vand.u32 %v885, 127
    %v887 = vmov %v886
    %v888 = vlaneseq
    %v889 = vshrl.u32 %v888, 7
    %v890 = vmov %v889
    %v891 = vld [vmem:[%s883] sm:$0xff]
    %vm894 = vcmp.eq.s32.totalorder %v890, %v887
    %v895 = vsel %vm894, %v891, 0.0
    %v896 = vrot.slane %v895, 4
    %v897 = vadd.f32 %v895, %v896
    %v898 = vrot.slane %v897, 2
    %v899 = vadd.f32 %v897, %v898
    %v900 = vrot.slane %v899, 1
    %v901 = vadd.f32 %v899, %v900
    %902 = vst [vmem:[%s884] sm:$0x1] %v901
    %s904 = ssub.s32 2, 1
    %v905 = vld [vmem:[#allocation4] sm:%s904]
    %s907 = ssub.s32 2, 1
    %908 = vst [vmem:[#allocation5] sm:%s907] %v905
    %s910 = ssub.s32 2, 1
    %v911 = vld [vmem:[#allocation6] sm:%s910]
    %s913 = ssub.s32 2, 1
    %914 = vst [vmem:[#allocation7] sm:%s913] %v911
    // Predicated region
    $region104: #{custom-call.2} parent=1 // pred_check
      _
    $region105: #{custom-call.2} parent=1 // pred_check_branch
      %916 = sbr.rel (0) target = $region107
    $region106: #{custom-call.2} parent=1 // pred_region
      // Predicated region
      $region108: #{custom-call.2} parent=106 // pred_check
        _
      $region109: #{custom-call.2} parent=106 // pred_check_branch
        %918 = sbr.rel (0) target = $region111
      $region110: #{custom-call.2} parent=106 // pred_region
        %p920 = scmp.gt.s32.totalorder 0, 0
        // Predicated region
        $region112: #{custom-call.2} parent=110 // pred_check
          %p921 = pneg %p920
        $region113: #{custom-call.2} parent=110 // pred_check_branch
          %923 = sbr.rel (%p921) target = $region115
        $region114: #{custom-call.2} parent=110 // pred_region
          %s924 = ssub.s32 0, 1
          %s925 = smul.u32 %s924, 8
          %s926 = scalar_lea.vmem [#allocation5], %s925
          %v927 = vld [vmem:[#allocation5] sm:$0xff]
          // While loop
          $region116: #{custom-call.2} parent=114 // loop_pre_header
            _
          $region117: #{custom-call.2} parent=114 // loop_header
            %s928 = sphi [#allocation5], %s950
            %s929 = sphi %s4, %s951
            %v930 = vphi %v927, %v952
            %s931 = ssub.s32 %s926, 64
            %p932 = scmp.gt.s32.totalorder %s928, %s931
          $region118: #{custom-call.2} parent=114 // loop_header_branch
            %934 = sbr.rel (%p932) target = $region122
          $region119: #{custom-call.2} parent=114 // loop_body
            %935 = vst [vmem:[%s929] sm:$0xff] %v930
            %v936 = vld [vmem:[%s928 + $0x8] sm:$0xff]
            %937 = vst [vmem:[%s929 + $0x8] sm:$0xff] %v936
            %v938 = vld [vmem:[%s928 + $0x10] sm:$0xff]
            %939 = vst [vmem:[%s929 + $0x10] sm:$0xff] %v938
            %v940 = vld [vmem:[%s928 + $0x18] sm:$0xff]
            %941 = vst [vmem:[%s929 + $0x18] sm:$0xff] %v940
            %v942 = vld [vmem:[%s928 + $0x20] sm:$0xff]
            %943 = vst [vmem:[%s929 + $0x20] sm:$0xff] %v942
            %v944 = vld [vmem:[%s928 + $0x28] sm:$0xff]
            %945 = vst [vmem:[%s929 + $0x28] sm:$0xff] %v944
            %v946 = vld [vmem:[%s928 + $0x30] sm:$0xff]
            %947 = vst [vmem:[%s929 + $0x30] sm:$0xff] %v946
            %v948 = vld [vmem:[%s928 + $0x38] sm:$0xff]
            %949 = vst [vmem:[%s929 + $0x38] sm:$0xff] %v948
          $region120: #{custom-call.2} parent=114 // loop_footer
            %s950 = scalar_lea.vmem %s928, 64
            %s951 = scalar_lea.vmem %s929, 64
            %v952 = vld [vmem:[%s928 + $0x40] sm:$0xff]
          $region121: #{custom-call.2} parent=114 // loop_footer_branch
            %953 = sbr.rel target = $region117
          $region122: #{custom-call.2} parent=114 // loop_exit
            _
          // While loop
          $region123: #{custom-call.2} parent=114 // loop_pre_header
            _
          $region124: #{custom-call.2} parent=114 // loop_header
            %s954 = sphi %s928, %s962
            %s955 = sphi %s929, %s963
            %v956 = vphi %v930, %v956
            %p957 = scmp.gt.s32.totalorder %s954, %s926
          $region125: #{custom-call.2} parent=114 // loop_header_branch
            %959 = sbr.rel (%p957) target = $region129
          $region126: #{custom-call.2} parent=114 // loop_body
            %v960 = vld [vmem:[%s954] sm:$0xff]
            %961 = vst [vmem:[%s955] sm:$0xff] %v960
          $region127: #{custom-call.2} parent=114 // loop_footer
            %s962 = scalar_lea.vmem %s954, 8
            %s963 = scalar_lea.vmem %s955, 8
          $region128: #{custom-call.2} parent=114 // loop_footer_branch
            %964 = sbr.rel target = $region124
          $region129: #{custom-call.2} parent=114 // loop_exit
            _
        $region115: #{custom-call.2} parent=110 // pred_fallthru
          _
        %s966 = ssub.s32 2, 1
        %s967 = smul.u32 0, 8
        %s968 = scalar_lea.vmem %s4, %s967
        %s969 = smul.u32 0, 8
        %s970 = scalar_lea.vmem [#allocation5], %s969
        %v971 = vld [vmem:[%s970] sm:%s966]
        %972 = vst [vmem:[%s968] sm:%s966] %v971
      $region111: #{custom-call.2} parent=106 // pred_fallthru
        _
    $region107: #{custom-call.2} parent=1 // pred_fallthru
      _
    // Predicated region
    $region130: #{custom-call.2} parent=1 // pred_check
      _
    $region131: #{custom-call.2} parent=1 // pred_check_branch
      %974 = sbr.rel (0) target = $region133
    $region132: #{custom-call.2} parent=1 // pred_region
      // Predicated region
      $region134: #{custom-call.2} parent=132 // pred_check
        _
      $region135: #{custom-call.2} parent=132 // pred_check_branch
        %976 = sbr.rel (0) target = $region137
      $region136: #{custom-call.2} parent=132 // pred_region
        %p978 = scmp.gt.s32.totalorder 0, 0
        // Predicated region
        $region138: #{custom-call.2} parent=136 // pred_check
          %p979 = pneg %p978
        $region139: #{custom-call.2} parent=136 // pred_check_branch
          %981 = sbr.rel (%p979) target = $region141
        $region140: #{custom-call.2} parent=136 // pred_region
          %s982 = ssub.s32 0, 1
          %s983 = smul.u32 %s982, 8
          %s984 = scalar_lea.vmem [#allocation7], %s983
          %v985 = vld [vmem:[#allocation7] sm:$0xff]
          // While loop
          $region142: #{custom-call.2} parent=140 // loop_pre_header
            _
          $region143: #{custom-call.2} parent=140 // loop_header
            %s986 = sphi [#allocation7], %s1008
            %s987 = sphi %s5, %s1009
            %v988 = vphi %v985, %v1010
            %s989 = ssub.s32 %s984, 64
            %p990 = scmp.gt.s32.totalorder %s986, %s989
          $region144: #{custom-call.2} parent=140 // loop_header_branch
            %992 = sbr.rel (%p990) target = $region148
          $region145: #{custom-call.2} parent=140 // loop_body
            %993 = vst [vmem:[%s987] sm:$0xff] %v988
            %v994 = vld [vmem:[%s986 + $0x8] sm:$0xff]
            %995 = vst [vmem:[%s987 + $0x8] sm:$0xff] %v994
            %v996 = vld [vmem:[%s986 + $0x10] sm:$0xff]
            %997 = vst [vmem:[%s987 + $0x10] sm:$0xff] %v996
            %v998 = vld [vmem:[%s986 + $0x18] sm:$0xff]
            %999 = vst [vmem:[%s987 + $0x18] sm:$0xff] %v998
            %v1000 = vld [vmem:[%s986 + $0x20] sm:$0xff]
            %1001 = vst [vmem:[%s987 + $0x20] sm:$0xff] %v1000
            %v1002 = vld [vmem:[%s986 + $0x28] sm:$0xff]
            %1003 = vst [vmem:[%s987 + $0x28] sm:$0xff] %v1002
            %v1004 = vld [vmem:[%s986 + $0x30] sm:$0xff]
            %1005 = vst [vmem:[%s987 + $0x30] sm:$0xff] %v1004
            %v1006 = vld [vmem:[%s986 + $0x38] sm:$0xff]
            %1007 = vst [vmem:[%s987 + $0x38] sm:$0xff] %v1006
          $region146: #{custom-call.2} parent=140 // loop_footer
            %s1008 = scalar_lea.vmem %s986, 64
            %s1009 = scalar_lea.vmem %s987, 64
            %v1010 = vld [vmem:[%s986 + $0x40] sm:$0xff]
          $region147: #{custom-call.2} parent=140 // loop_footer_branch
            %1011 = sbr.rel target = $region143
          $region148: #{custom-call.2} parent=140 // loop_exit
            _
          // While loop
          $region149: #{custom-call.2} parent=140 // loop_pre_header
            _
          $region150: #{custom-call.2} parent=140 // loop_header
            %s1012 = sphi %s986, %s1020
            %s1013 = sphi %s987, %s1021
            %v1014 = vphi %v988, %v1014
            %p1015 = scmp.gt.s32.totalorder %s1012, %s984
          $region151: #{custom-call.2} parent=140 // loop_header_branch
            %1017 = sbr.rel (%p1015) target = $region155
          $region152: #{custom-call.2} parent=140 // loop_body
            %v1018 = vld [vmem:[%s1012] sm:$0xff]
            %1019 = vst [vmem:[%s1013] sm:$0xff] %v1018
          $region153: #{custom-call.2} parent=140 // loop_footer
            %s1020 = scalar_lea.vmem %s1012, 8
            %s1021 = scalar_lea.vmem %s1013, 8
          $region154: #{custom-call.2} parent=140 // loop_footer_branch
            %1022 = sbr.rel target = $region150
          $region155: #{custom-call.2} parent=140 // loop_exit
            _
        $region141: #{custom-call.2} parent=136 // pred_fallthru
          _
        %s1024 = ssub.s32 2, 1
        %s1025 = smul.u32 0, 8
        %s1026 = scalar_lea.vmem %s5, %s1025
        %s1027 = smul.u32 0, 8
        %s1028 = scalar_lea.vmem [#allocation7], %s1027
        %v1029 = vld [vmem:[%s1028] sm:%s1024]
        %1030 = vst [vmem:[%s1026] sm:%s1024] %v1029
      $region137: #{custom-call.2} parent=132 // pred_fallthru
        _
    $region133: #{custom-call.2} parent=1 // pred_fallthru
      _
    // Predicated region
    $region156: #{custom-call.2} parent=1 // pred_check
      _
    $region157: #{custom-call.2} parent=1 // pred_check_branch
      %1032 = sbr.rel (0) target = $region159
    $region158: #{custom-call.2} parent=1 // pred_region
      %p1034 = scmp.gt.s32.totalorder 1, 0
      // Predicated region
      $region160: #{custom-call.2} parent=158 // pred_check
        %p1035 = pneg %p1034
      $region161: #{custom-call.2} parent=158 // pred_check_branch
        %1037 = sbr.rel (%p1035) target = $region163
      $region162: #{custom-call.2} parent=158 // pred_region
        %s1038 = ssub.s32 1, 1
        %s1039 = smul.u32 %s1038, 8
        %s1040 = scalar_lea.vmem [#allocation8], %s1039
        %v1041 = vld [vmem:[#allocation8] sm:$0xff]
        // While loop
        $region164: #{custom-call.2} parent=162 // loop_pre_header
          _
        $region165: #{custom-call.2} parent=162 // loop_header
          %s1042 = sphi [#allocation8], %s1064
          %s1043 = sphi %s6, %s1065
          %v1044 = vphi %v1041, %v1066
          %s1045 = ssub.s32 %s1040, 64
          %p1046 = scmp.gt.s32.totalorder %s1042, %s1045
        $region166: #{custom-call.2} parent=162 // loop_header_branch
          %1048 = sbr.rel (%p1046) target = $region170
        $region167: #{custom-call.2} parent=162 // loop_body
          %1049 = vst [vmem:[%s1043] sm:$0xff] %v1044
          %v1050 = vld [vmem:[%s1042 + $0x8] sm:$0xff]
          %1051 = vst [vmem:[%s1043 + $0x8] sm:$0xff] %v1050
          %v1052 = vld [vmem:[%s1042 + $0x10] sm:$0xff]
          %1053 = vst [vmem:[%s1043 + $0x10] sm:$0xff] %v1052
          %v1054 = vld [vmem:[%s1042 + $0x18] sm:$0xff]
          %1055 = vst [vmem:[%s1043 + $0x18] sm:$0xff] %v1054
          %v1056 = vld [vmem:[%s1042 + $0x20] sm:$0xff]
          %1057 = vst [vmem:[%s1043 + $0x20] sm:$0xff] %v1056
          %v1058 = vld [vmem:[%s1042 + $0x28] sm:$0xff]
          %1059 = vst [vmem:[%s1043 + $0x28] sm:$0xff] %v1058
          %v1060 = vld [vmem:[%s1042 + $0x30] sm:$0xff]
          %1061 = vst [vmem:[%s1043 + $0x30] sm:$0xff] %v1060
          %v1062 = vld [vmem:[%s1042 + $0x38] sm:$0xff]
          %1063 = vst [vmem:[%s1043 + $0x38] sm:$0xff] %v1062
        $region168: #{custom-call.2} parent=162 // loop_footer
          %s1064 = scalar_lea.vmem %s1042, 64
          %s1065 = scalar_lea.vmem %s1043, 64
          %v1066 = vld [vmem:[%s1042 + $0x40] sm:$0xff]
        $region169: #{custom-call.2} parent=162 // loop_footer_branch
          %1067 = sbr.rel target = $region165
        $region170: #{custom-call.2} parent=162 // loop_exit
          _
        // While loop
        $region171: #{custom-call.2} parent=162 // loop_pre_header
          _
        $region172: #{custom-call.2} parent=162 // loop_header
          %s1068 = sphi %s1042, %s1076
          %s1069 = sphi %s1043, %s1077
          %v1070 = vphi %v1044, %v1070
          %p1071 = scmp.gt.s32.totalorder %s1068, %s1040
        $region173: #{custom-call.2} parent=162 // loop_header_branch
          %1073 = sbr.rel (%p1071) target = $region177
        $region174: #{custom-call.2} parent=162 // loop_body
          %v1074 = vld [vmem:[%s1068] sm:$0xff]
          %1075 = vst [vmem:[%s1069] sm:$0xff] %v1074
        $region175: #{custom-call.2} parent=162 // loop_footer
          %s1076 = scalar_lea.vmem %s1068, 8
          %s1077 = scalar_lea.vmem %s1069, 8
        $region176: #{custom-call.2} parent=162 // loop_footer_branch
          %1078 = sbr.rel target = $region172
        $region177: #{custom-call.2} parent=162 // loop_exit
          _
      $region163: #{custom-call.2} parent=158 // pred_fallthru
        _
      %s1080 = ssub.s32 1, 1
      %s1081 = smul.u32 1, 8
      %s1082 = scalar_lea.vmem %s6, %s1081
      %s1083 = smul.u32 1, 8
      %s1084 = scalar_lea.vmem [#allocation8], %s1083
      %v1085 = vld [vmem:[%s1084] sm:%s1080]
      %1086 = vst [vmem:[%s1082] sm:%s1080] %v1085
    $region159: #{custom-call.2} parent=1 // pred_fallthru
      _
    // Predicated region
    $region178: #{custom-call.2} parent=1 // pred_check
      _
    $region179: #{custom-call.2} parent=1 // pred_check_branch
      %1088 = sbr.rel (0) target = $region181
    $region180: #{custom-call.2} parent=1 // pred_region
      %p1090 = scmp.gt.s32.totalorder 1, 0
      // Predicated region
      $region182: #{custom-call.2} parent=180 // pred_check
        %p1091 = pneg %p1090
      $region183: #{custom-call.2} parent=180 // pred_check_branch
        %1093 = sbr.rel (%p1091) target = $region185
      $region184: #{custom-call.2} parent=180 // pred_region
        %s1094 = ssub.s32 1, 1
        %s1095 = smul.u32 %s1094, 8
        %s1096 = scalar_lea.vmem [#allocation9], %s1095
        %v1097 = vld [vmem:[#allocation9] sm:$0xff]
        // While loop
        $region186: #{custom-call.2} parent=184 // loop_pre_header
          _
        $region187: #{custom-call.2} parent=184 // loop_header
          %s1098 = sphi [#allocation9], %s1120
          %s1099 = sphi %s7, %s1121
          %v1100 = vphi %v1097, %v1122
          %s1101 = ssub.s32 %s1096, 64
          %p1102 = scmp.gt.s32.totalorder %s1098, %s1101
        $region188: #{custom-call.2} parent=184 // loop_header_branch
          %1104 = sbr.rel (%p1102) target = $region192
        $region189: #{custom-call.2} parent=184 // loop_body
          %1105 = vst [vmem:[%s1099] sm:$0xff] %v1100
          %v1106 = vld [vmem:[%s1098 + $0x8] sm:$0xff]
          %1107 = vst [vmem:[%s1099 + $0x8] sm:$0xff] %v1106
          %v1108 = vld [vmem:[%s1098 + $0x10] sm:$0xff]
          %1109 = vst [vmem:[%s1099 + $0x10] sm:$0xff] %v1108
          %v1110 = vld [vmem:[%s1098 + $0x18] sm:$0xff]
          %1111 = vst [vmem:[%s1099 + $0x18] sm:$0xff] %v1110
          %v1112 = vld [vmem:[%s1098 + $0x20] sm:$0xff]
          %1113 = vst [vmem:[%s1099 + $0x20] sm:$0xff] %v1112
          %v1114 = vld [vmem:[%s1098 + $0x28] sm:$0xff]
          %1115 = vst [vmem:[%s1099 + $0x28] sm:$0xff] %v1114
          %v1116 = vld [vmem:[%s1098 + $0x30] sm:$0xff]
          %1117 = vst [vmem:[%s1099 + $0x30] sm:$0xff] %v1116
          %v1118 = vld [vmem:[%s1098 + $0x38] sm:$0xff]
          %1119 = vst [vmem:[%s1099 + $0x38] sm:$0xff] %v1118
        $region190: #{custom-call.2} parent=184 // loop_footer
          %s1120 = scalar_lea.vmem %s1098, 64
          %s1121 = scalar_lea.vmem %s1099, 64
          %v1122 = vld [vmem:[%s1098 + $0x40] sm:$0xff]
        $region191: #{custom-call.2} parent=184 // loop_footer_branch
          %1123 = sbr.rel target = $region187
        $region192: #{custom-call.2} parent=184 // loop_exit
          _
        // While loop
        $region193: #{custom-call.2} parent=184 // loop_pre_header
          _
        $region194: #{custom-call.2} parent=184 // loop_header
          %s1124 = sphi %s1098, %s1132
          %s1125 = sphi %s1099, %s1133
          %v1126 = vphi %v1100, %v1126
          %p1127 = scmp.gt.s32.totalorder %s1124, %s1096
        $region195: #{custom-call.2} parent=184 // loop_header_branch
          %1129 = sbr.rel (%p1127) target = $region199
        $region196: #{custom-call.2} parent=184 // loop_body
          %v1130 = vld [vmem:[%s1124] sm:$0xff]
          %1131 = vst [vmem:[%s1125] sm:$0xff] %v1130
        $region197: #{custom-call.2} parent=184 // loop_footer
          %s1132 = scalar_lea.vmem %s1124, 8
          %s1133 = scalar_lea.vmem %s1125, 8
        $region198: #{custom-call.2} parent=184 // loop_footer_branch
          %1134 = sbr.rel target = $region194
        $region199: #{custom-call.2} parent=184 // loop_exit
          _
      $region185: #{custom-call.2} parent=180 // pred_fallthru
        _
      %s1136 = ssub.s32 1, 1
      %s1137 = smul.u32 1, 8
      %s1138 = scalar_lea.vmem %s7, %s1137
      %s1139 = smul.u32 1, 8
      %s1140 = scalar_lea.vmem [#allocation9], %s1139
      %v1141 = vld [vmem:[%s1140] sm:%s1136]
      %1142 = vst [vmem:[%s1138] sm:%s1136] %v1141
    $region181: #{custom-call.2} parent=1 // pred_fallthru
      _
    // Predicated region
    $region200: #{custom-call.2} parent=1 // pred_check
      _
    $region201: #{custom-call.2} parent=1 // pred_check_branch
      %1144 = sbr.rel (0) target = $region203
    $region202: #{custom-call.2} parent=1 // pred_region
      %p1146 = scmp.gt.s32.totalorder 1, 0
      // Predicated region
      $region204: #{custom-call.2} parent=202 // pred_check
        %p1147 = pneg %p1146
      $region205: #{custom-call.2} parent=202 // pred_check_branch
        %1149 = sbr.rel (%p1147) target = $region207
      $region206: #{custom-call.2} parent=202 // pred_region
        %s1150 = ssub.s32 1, 1
        %s1151 = smul.u32 %s1150, 8
        %s1152 = scalar_lea.vmem [#allocation10], %s1151
        %v1153 = vld [vmem:[#allocation10] sm:$0xff]
        // While loop
        $region208: #{custom-call.2} parent=206 // loop_pre_header
          _
        $region209: #{custom-call.2} parent=206 // loop_header
          %s1154 = sphi [#allocation10], %s1176
          %s1155 = sphi %s8, %s1177
          %v1156 = vphi %v1153, %v1178
          %s1157 = ssub.s32 %s1152, 64
          %p1158 = scmp.gt.s32.totalorder %s1154, %s1157
        $region210: #{custom-call.2} parent=206 // loop_header_branch
          %1160 = sbr.rel (%p1158) target = $region214
        $region211: #{custom-call.2} parent=206 // loop_body
          %1161 = vst [vmem:[%s1155] sm:$0xff] %v1156
          %v1162 = vld [vmem:[%s1154 + $0x8] sm:$0xff]
          %1163 = vst [vmem:[%s1155 + $0x8] sm:$0xff] %v1162
          %v1164 = vld [vmem:[%s1154 + $0x10] sm:$0xff]
          %1165 = vst [vmem:[%s1155 + $0x10] sm:$0xff] %v1164
          %v1166 = vld [vmem:[%s1154 + $0x18] sm:$0xff]
          %1167 = vst [vmem:[%s1155 + $0x18] sm:$0xff] %v1166
          %v1168 = vld [vmem:[%s1154 + $0x20] sm:$0xff]
          %1169 = vst [vmem:[%s1155 + $0x20] sm:$0xff] %v1168
          %v1170 = vld [vmem:[%s1154 + $0x28] sm:$0xff]
          %1171 = vst [vmem:[%s1155 + $0x28] sm:$0xff] %v1170
          %v1172 = vld [vmem:[%s1154 + $0x30] sm:$0xff]
          %1173 = vst [vmem:[%s1155 + $0x30] sm:$0xff] %v1172
          %v1174 = vld [vmem:[%s1154 + $0x38] sm:$0xff]
          %1175 = vst [vmem:[%s1155 + $0x38] sm:$0xff] %v1174
        $region212: #{custom-call.2} parent=206 // loop_footer
          %s1176 = scalar_lea.vmem %s1154, 64
          %s1177 = scalar_lea.vmem %s1155, 64
          %v1178 = vld [vmem:[%s1154 + $0x40] sm:$0xff]
        $region213: #{custom-call.2} parent=206 // loop_footer_branch
          %1179 = sbr.rel target = $region209
        $region214: #{custom-call.2} parent=206 // loop_exit
          _
        // While loop
        $region215: #{custom-call.2} parent=206 // loop_pre_header
          _
        $region216: #{custom-call.2} parent=206 // loop_header
          %s1180 = sphi %s1154, %s1188
          %s1181 = sphi %s1155, %s1189
          %v1182 = vphi %v1156, %v1182
          %p1183 = scmp.gt.s32.totalorder %s1180, %s1152
        $region217: #{custom-call.2} parent=206 // loop_header_branch
          %1185 = sbr.rel (%p1183) target = $region221
        $region218: #{custom-call.2} parent=206 // loop_body
          %v1186 = vld [vmem:[%s1180] sm:$0xff]
          %1187 = vst [vmem:[%s1181] sm:$0xff] %v1186
        $region219: #{custom-call.2} parent=206 // loop_footer
          %s1188 = scalar_lea.vmem %s1180, 8
          %s1189 = scalar_lea.vmem %s1181, 8
        $region220: #{custom-call.2} parent=206 // loop_footer_branch
          %1190 = sbr.rel target = $region216
        $region221: #{custom-call.2} parent=206 // loop_exit
          _
      $region207: #{custom-call.2} parent=202 // pred_fallthru
        _
      %s1192 = ssub.s32 1, 1
      %s1193 = smul.u32 1, 8
      %s1194 = scalar_lea.vmem %s8, %s1193
      %s1195 = smul.u32 1, 8
      %s1196 = scalar_lea.vmem [#allocation10], %s1195
      %v1197 = vld [vmem:[%s1196] sm:%s1192]
      %1198 = vst [vmem:[%s1194] sm:%s1192] %v1197
    $region203: #{custom-call.2} parent=1 // pred_fallthru
      _
    // Predicated region
    $region222: #{custom-call.2} parent=1 // pred_check
      _
    $region223: #{custom-call.2} parent=1 // pred_check_branch
      %1200 = sbr.rel (0) target = $region225
    $region224: #{custom-call.2} parent=1 // pred_region
      %p1202 = scmp.gt.s32.totalorder 1, 0
      // Predicated region
      $region226: #{custom-call.2} parent=224 // pred_check
        %p1203 = pneg %p1202
      $region227: #{custom-call.2} parent=224 // pred_check_branch
        %1205 = sbr.rel (%p1203) target = $region229
      $region228: #{custom-call.2} parent=224 // pred_region
        %s1206 = ssub.s32 1, 1
        %s1207 = smul.u32 %s1206, 8
        %s1208 = scalar_lea.vmem [#allocation11], %s1207
        %v1209 = vld [vmem:[#allocation11] sm:$0xff]
        // While loop
        $region230: #{custom-call.2} parent=228 // loop_pre_header
          _
        $region231: #{custom-call.2} parent=228 // loop_header
          %s1210 = sphi [#allocation11], %s1232
          %s1211 = sphi %s9, %s1233
          %v1212 = vphi %v1209, %v1234
          %s1213 = ssub.s32 %s1208, 64
          %p1214 = scmp.gt.s32.totalorder %s1210, %s1213
        $region232: #{custom-call.2} parent=228 // loop_header_branch
          %1216 = sbr.rel (%p1214) target = $region236
        $region233: #{custom-call.2} parent=228 // loop_body
          %1217 = vst [vmem:[%s1211] sm:$0xff] %v1212
          %v1218 = vld [vmem:[%s1210 + $0x8] sm:$0xff]
          %1219 = vst [vmem:[%s1211 + $0x8] sm:$0xff] %v1218
          %v1220 = vld [vmem:[%s1210 + $0x10] sm:$0xff]
          %1221 = vst [vmem:[%s1211 + $0x10] sm:$0xff] %v1220
          %v1222 = vld [vmem:[%s1210 + $0x18] sm:$0xff]
          %1223 = vst [vmem:[%s1211 + $0x18] sm:$0xff] %v1222
          %v1224 = vld [vmem:[%s1210 + $0x20] sm:$0xff]
          %1225 = vst [vmem:[%s1211 + $0x20] sm:$0xff] %v1224
          %v1226 = vld [vmem:[%s1210 + $0x28] sm:$0xff]
          %1227 = vst [vmem:[%s1211 + $0x28] sm:$0xff] %v1226
          %v1228 = vld [vmem:[%s1210 + $0x30] sm:$0xff]
          %1229 = vst [vmem:[%s1211 + $0x30] sm:$0xff] %v1228
          %v1230 = vld [vmem:[%s1210 + $0x38] sm:$0xff]
          %1231 = vst [vmem:[%s1211 + $0x38] sm:$0xff] %v1230
        $region234: #{custom-call.2} parent=228 // loop_footer
          %s1232 = scalar_lea.vmem %s1210, 64
          %s1233 = scalar_lea.vmem %s1211, 64
          %v1234 = vld [vmem:[%s1210 + $0x40] sm:$0xff]
        $region235: #{custom-call.2} parent=228 // loop_footer_branch
          %1235 = sbr.rel target = $region231
        $region236: #{custom-call.2} parent=228 // loop_exit
          _
        // While loop
        $region237: #{custom-call.2} parent=228 // loop_pre_header
          _
        $region238: #{custom-call.2} parent=228 // loop_header
          %s1236 = sphi %s1210, %s1244
          %s1237 = sphi %s1211, %s1245
          %v1238 = vphi %v1212, %v1238
          %p1239 = scmp.gt.s32.totalorder %s1236, %s1208
        $region239: #{custom-call.2} parent=228 // loop_header_branch
          %1241 = sbr.rel (%p1239) target = $region243
        $region240: #{custom-call.2} parent=228 // loop_body
          %v1242 = vld [vmem:[%s1236] sm:$0xff]
          %1243 = vst [vmem:[%s1237] sm:$0xff] %v1242
        $region241: #{custom-call.2} parent=228 // loop_footer
          %s1244 = scalar_lea.vmem %s1236, 8
          %s1245 = scalar_lea.vmem %s1237, 8
        $region242: #{custom-call.2} parent=228 // loop_footer_branch
          %1246 = sbr.rel target = $region238
        $region243: #{custom-call.2} parent=228 // loop_exit
          _
      $region229: #{custom-call.2} parent=224 // pred_fallthru
        _
      %s1248 = ssub.s32 1, 1
      %s1249 = smul.u32 1, 8
      %s1250 = scalar_lea.vmem %s9, %s1249
      %s1251 = smul.u32 1, 8
      %s1252 = scalar_lea.vmem [#allocation11], %s1251
      %v1253 = vld [vmem:[%s1252] sm:%s1248]
      %1254 = vst [vmem:[%s1250] sm:%s1248] %v1253
    $region225: #{custom-call.2} parent=1 // pred_fallthru
      _
    // Predicated region
    $region244: #{custom-call.2} parent=1 // pred_check
      _
    $region245: #{custom-call.2} parent=1 // pred_check_branch
      %1256 = sbr.rel (0) target = $region247
    $region246: #{custom-call.2} parent=1 // pred_region
      _
    $region247: #{custom-call.2} parent=1 // pred_fallthru
      _
    // Predicated region
    $region248: #{custom-call.2} parent=1 // pred_check
      _
    $region249: #{custom-call.2} parent=1 // pred_check_branch
      %1258 = sbr.rel (0) target = $region251
    $region250: #{custom-call.2} parent=1 // pred_region
      _
    $region251: #{custom-call.2} parent=1 // pred_fallthru
      _

// kernel: _lambda_.10
$region0: #{_lambda_.10}
  #allocation0 [shape = 'u32[]', space=smem, size = 0x4, offset = 0x4, fixed_abs, tag = 'smem constant byte address 0x4 - core index']
  #allocation1 [shape = 'u32[72,128]{1,0:T(1,128)}', space=vmem, size = 0x9000, scoped, tag = 'internal scratch']
  %s0 = inlined_call_operand.vmem [shape: f32[16,16], index: 0, kind: input, shape index: {}]
  %s1 = inlined_call_operand.vmem [shape: f32[16,32], index: 1, kind: input, shape index: {}]
  %s2 = inlined_call_operand.vmem [shape: f32[32,32], index: 2, kind: input, shape index: {}]
  %s3 = inlined_call_operand.vmem [shape: f32[1,32], index: 3, kind: input, shape index: {}]
  %s4 = inlined_call_operand.vmem [shape: f32[16,32], index: 4, kind: input, shape index: {}]
  %s5 = inlined_call_operand.vmem [shape: f32[16,32], index: 5, kind: input, shape index: {}]
  %s6 = inlined_call_operand.vmem [shape: f32[32,32], index: 6, kind: input, shape index: {}]
  %s7 = inlined_call_operand.vmem [shape: f32[32,32], index: 7, kind: input, shape index: {}]
  %s8 = inlined_call_operand.vmem [shape: f32[1,32], index: 8, kind: input, shape index: {}]
  %s9 = inlined_call_operand.vmem [shape: f32[16,32], index: 9, kind: output, shape index: {}]
  %s10 = sld [smem:[#allocation0]]
  $region46: #{_lambda_.10} parent=0
    _
  %s12 = ssub.s32 1, %s10
  %s13 = scalar_select 0, %s12, %s10
  // Predicated region
  $region2: #{_lambda_.10} parent=0 // pred_check
    _
  $region3: #{_lambda_.10} parent=0 // pred_check_branch
    %15 = sbr.rel (0) target = $region5
  $region4: #{_lambda_.10} parent=0 // pred_region
    _
  $region5: #{_lambda_.10} parent=0 // pred_fallthru
    _
  // Predicated region
  $region6: #{_lambda_.10} parent=0 // pred_check
    _
  $region7: #{_lambda_.10} parent=0 // pred_check_branch
    %17 = sbr.rel (0) target = $region9
  $region8: #{_lambda_.10} parent=0 // pred_region
    _
  $region9: #{_lambda_.10} parent=0 // pred_fallthru
    _
  // Predicated region
  $region10: #{_lambda_.10} parent=0 // pred_check
    _
  $region11: #{_lambda_.10} parent=0 // pred_check_branch
    %19 = sbr.rel (0) target = $region13
  $region12: #{_lambda_.10} parent=0 // pred_region
    _
  $region13: #{_lambda_.10} parent=0 // pred_fallthru
    _
  // Predicated region
  $region14: #{_lambda_.10} parent=0 // pred_check
    _
  $region15: #{_lambda_.10} parent=0 // pred_check_branch
    %21 = sbr.rel (0) target = $region17
  $region16: #{_lambda_.10} parent=0 // pred_region
    _
  $region17: #{_lambda_.10} parent=0 // pred_fallthru
    _
  // Predicated region
  $region18: #{_lambda_.10} parent=0 // pred_check
    _
  $region19: #{_lambda_.10} parent=0 // pred_check_branch
    %23 = sbr.rel (0) target = $region21
  $region20: #{_lambda_.10} parent=0 // pred_region
    _
  $region21: #{_lambda_.10} parent=0 // pred_fallthru
    _
  // Predicated region
  $region22: #{_lambda_.10} parent=0 // pred_check
    _
  $region23: #{_lambda_.10} parent=0 // pred_check_branch
    %25 = sbr.rel (0) target = $region25
  $region24: #{_lambda_.10} parent=0 // pred_region
    _
  $region25: #{_lambda_.10} parent=0 // pred_fallthru
    _
  // Predicated region
  $region26: #{_lambda_.10} parent=0 // pred_check
    _
  $region27: #{_lambda_.10} parent=0 // pred_check_branch
    %27 = sbr.rel (0) target = $region29
  $region28: #{_lambda_.10} parent=0 // pred_region
    _
  $region29: #{_lambda_.10} parent=0 // pred_fallthru
    _
  // Predicated region
  $region30: #{_lambda_.10} parent=0 // pred_check
    _
  $region31: #{_lambda_.10} parent=0 // pred_check_branch
    %29 = sbr.rel (0) target = $region33
  $region32: #{_lambda_.10} parent=0 // pred_region
    _
  $region33: #{_lambda_.10} parent=0 // pred_fallthru
    _
  // Predicated region
  $region34: #{_lambda_.10} parent=0 // pred_check
    _
  $region35: #{_lambda_.10} parent=0 // pred_check_branch
    %31 = sbr.rel (0) target = $region37
  $region36: #{_lambda_.10} parent=0 // pred_region
    _
  $region37: #{_lambda_.10} parent=0 // pred_fallthru
    _
  %v32 = vld [vmem:[%s0] sm:$0xff]
  %v33 = vld [vmem:[%s0 + $0x8] sm:$0xff]
  %v34 = vld [vmem:[%s1] sm:$0xff]
  %v35 = vld [vmem:[%s1 + $0x8] sm:$0xff]
  %vm36 = vcmask 130048
  %v38 = vsel %vm36, %v32, 0
  %v41 = vsel %vm36, %v33, 0
  %43 = vmatpush.msra.mxu0 0.0
  %44 = vmatpush.msra.mxu0 0.0
  %45 = vmatpush.msra.mxu0 0.0
  %46 = vmatpush.msra.mxu0 0.0
  %47 = vmatpush.msra.mxu0 0.0
  %48 = vmatpush.msra.mxu0 0.0
  %49 = vmatpush.msra.mxu0 0.0
  %50 = vmatpush.msra.mxu0 0.0
  %51 = vmatpush.msra.mxu0 0.0
  %52 = vmatpush.msra.mxu0 0.0
  %53 = vmatpush.msra.mxu0 0.0
  %54 = vmatpush.msra.mxu0 0.0
  %55 = vmatpush.msra.mxu0 0.0
  %56 = vmatpush.msra.mxu0 0.0
  %57 = vmatpush.msra.mxu0 %v35
  %58 = vmatpush.msra.mxu0 %v34
  %59 = vmatmul.f32.gmra.mxu0 %v38
  %v60 = vpop.f32.mrf.mxu0
  %v61 = vadd.f32 0.0, %v60
  %62 = vmatmul.f32.gmra.mxu0 %v41
  %v63 = vpop.f32.mrf.mxu0
  %v64 = vadd.f32 0.0, %v63
  %65 = vdwg.mxu0
  %v66 = vld [vmem:[%s2] sm:$0xff]
  %v67 = vld [vmem:[%s2 + $0x8] sm:$0xff]
  %v68 = vld [vmem:[%s2 + $0x10] sm:$0xff]
  %v69 = vld [vmem:[%s2 + $0x18] sm:$0xff]
  %v70 = vld [vmem:[%s3] sm:$0x1]
  %v72 = vperm.slane %v70, 0
  %vm74 = vcmask 261120
  %v76 = vsel %vm74, %v61, 0
  %v79 = vsel %vm74, %v64, 0
  %81 = vmatpush.msra.mxu0 0.0
  %82 = vmatpush.msra.mxu0 0.0
  %83 = vmatpush.msra.mxu0 0.0
  %84 = vmatpush.msra.mxu0 0.0
  %85 = vmatpush.msra.mxu0 0.0
  %86 = vmatpush.msra.mxu0 0.0
  %87 = vmatpush.msra.mxu0 0.0
  %88 = vmatpush.msra.mxu0 0.0
  %89 = vmatpush.msra.mxu0 0.0
  %90 = vmatpush.msra.mxu0 0.0
  %91 = vmatpush.msra.mxu0 0.0
  %92 = vmatpush.msra.mxu0 0.0
  %93 = vmatpush.msra.mxu0 %v69
  %94 = vmatpush.msra.mxu0 %v68
  %95 = vmatpush.msra.mxu0 %v67
  %96 = vmatpush.msra.mxu0 %v66
  %97 = vmatmul.f32.gmra.mxu0 %v76
  %v98 = vpop.f32.mrf.mxu0
  %v99 = vadd.f32 %v72, %v98
  %100 = vmatmul.f32.gmra.mxu0 %v79
  %v101 = vpop.f32.mrf.mxu0
  %v102 = vadd.f32 %v72, %v101
  %103 = vdwg.mxu0
  %v104 = vmax.f32 %v99, 0.0
  %v105 = vmax.f32 %v102, 0.0
  %v106 = vld [vmem:[%s4] sm:$0xff]
  %v107 = vld [vmem:[%s4 + $0x8] sm:$0xff]
  %v108 = vadd.f32 %v104, %v106
  %v109 = vadd.f32 %v105, %v107
  %110 = vmatpush.msra.mxu0 0.0
  %111 = vmatpush.msra.mxu0 0.0
  %112 = vmatpush.msra.mxu0 0.0
  %113 = vmatpush.msra.mxu0 0.0
  %114 = vmatpush.msra.mxu0 0.0
  %115 = vmatpush.msra.mxu0 0.0
  %116 = vmatpush.msra.mxu0 0.0
  %117 = vmatpush.msra.mxu0 0.0
  %118 = vmatpush.msra.mxu0 0.0
  %119 = vmatpush.msra.mxu0 0.0
  %120 = vmatpush.msra.mxu0 0.0
  %121 = vmatpush.msra.mxu0 0.0
  %122 = vmatpush.msra.mxu0 0.0
  %123 = vmatpush.msra.mxu0 0.0
  %124 = vmatpush.msra.mxu0 %v109
  %125 = vmatpush.msra.mxu0 %v108
  %126 = vmatmul.f32.gmra.mxu0 %v38
  %v127 = vpop.f32.mrf.mxu0
  %v128 = vadd.f32 0.0, %v127
  %129 = vmatmul.f32.gmra.mxu0 %v41
  %v130 = vpop.f32.mrf.mxu0
  %v131 = vadd.f32 0.0, %v130
  %132 = vdwg.mxu0
  %v133 = vld [vmem:[%s5] sm:$0xff]
  %v134 = vld [vmem:[%s5 + $0x8] sm:$0xff]
  %135 = vmatpush.msra.mxu0 0.0
  %136 = vmatpush.msra.mxu0 0.0
  %137 = vmatpush.msra.mxu0 0.0
  %138 = vmatpush.msra.mxu0 0.0
  %139 = vmatpush.msra.mxu0 0.0
  %140 = vmatpush.msra.mxu0 0.0
  %141 = vmatpush.msra.mxu0 0.0
  %142 = vmatpush.msra.mxu0 0.0
  %143 = vmatpush.msra.mxu0 0.0
  %144 = vmatpush.msra.mxu0 0.0
  %145 = vmatpush.msra.mxu0 0.0
  %146 = vmatpush.msra.mxu0 0.0
  %147 = vmatpush.msra.mxu0 0.0
  %148 = vmatpush.msra.mxu0 0.0
  %149 = vmatpush.msra.mxu0 %v134
  %150 = vmatpush.msra.mxu0 %v133
  %151 = vmatmul.f32.gmra.mxu0 %v38
  %v152 = vpop.f32.mrf.mxu0
  %v153 = vadd.f32 0.0, %v152
  %154 = vmatmul.f32.gmra.mxu0 %v41
  %v155 = vpop.f32.mrf.mxu0
  %v156 = vadd.f32 0.0, %v155
  %157 = vdwg.mxu0
  %v158 = vld [vmem:[%s6] sm:$0xff]
  %v159 = vld [vmem:[%s6 + $0x8] sm:$0xff]
  %v160 = vld [vmem:[%s6 + $0x10] sm:$0xff]
  %v161 = vld [vmem:[%s6 + $0x18] sm:$0xff]
  %v162 = vld [vmem:[%s7] sm:$0xff]
  %v163 = vld [vmem:[%s7 + $0x8] sm:$0xff]
  %v164 = vld [vmem:[%s7 + $0x10] sm:$0xff]
  %v165 = vld [vmem:[%s7 + $0x18] sm:$0xff]
  %v167 = vsel %vm74, %v153, 0
  %v170 = vsel %vm74, %v156, 0
  %172 = vmatpush.msra.mxu0 0.0
  %173 = vmatpush.msra.mxu0 0.0
  %174 = vmatpush.msra.mxu0 0.0
  %175 = vmatpush.msra.mxu0 0.0
  %176 = vmatpush.msra.mxu0 0.0
  %177 = vmatpush.msra.mxu0 0.0
  %178 = vmatpush.msra.mxu0 0.0
  %179 = vmatpush.msra.mxu0 0.0
  %180 = vmatpush.msra.mxu0 0.0
  %181 = vmatpush.msra.mxu0 0.0
  %182 = vmatpush.msra.mxu0 0.0
  %183 = vmatpush.msra.mxu0 0.0
  %184 = vmatpush.msra.mxu0 %v165
  %185 = vmatpush.msra.mxu0 %v164
  %186 = vmatpush.msra.mxu0 %v163
  %187 = vmatpush.msra.mxu0 %v162
  %188 = vmatmul.f32.gmra.mxu0 %v167
  %v189 = vpop.f32.mrf.mxu0
  %v190 = vadd.f32 0.0, %v189
  %191 = vmatmul.f32.gmra.mxu0 %v170
  %v192 = vpop.f32.mrf.mxu0
  %v193 = vadd.f32 0.0, %v192
  %194 = vdwg.mxu0
  %v196 = vsel %vm74, %v128, 0
  %v199 = vsel %vm74, %v131, 0
  %201 = vmatpush.msra.mxu0 0.0
  %202 = vmatpush.msra.mxu0 0.0
  %203 = vmatpush.msra.mxu0 0.0
  %204 = vmatpush.msra.mxu0 0.0
  %205 = vmatpush.msra.mxu0 0.0
  %206 = vmatpush.msra.mxu0 0.0
  %207 = vmatpush.msra.mxu0 0.0
  %208 = vmatpush.msra.mxu0 0.0
  %209 = vmatpush.msra.mxu0 0.0
  %210 = vmatpush.msra.mxu0 0.0
  %211 = vmatpush.msra.mxu0 0.0
  %212 = vmatpush.msra.mxu0 0.0
  %213 = vmatpush.msra.mxu0 %v161
  %214 = vmatpush.msra.mxu0 %v160
  %215 = vmatpush.msra.mxu0 %v159
  %216 = vmatpush.msra.mxu0 %v158
  %217 = vmatmul.f32.gmra.mxu0 %v196
  %v218 = vpop.f32.mrf.mxu0
  %v219 = vadd.f32 %v190, %v218
  %220 = vmatmul.f32.gmra.mxu0 %v199
  %v221 = vpop.f32.mrf.mxu0
  %v222 = vadd.f32 %v193, %v221
  %223 = vdwg.mxu0
  %v224 = vld [vmem:[%s8] sm:$0x1]
  %v226 = vperm.slane %v224, 0
  %v228 = vadd.f32 %v219, %v226
  %v229 = vadd.f32 %v222, %v226
  %v230 = vmax.f32 %v228, 0.0
  %v231 = vmax.f32 %v229, 0.0
  %232 = vst.msk [vmem:[%s9] sm:$0xff] %vm74, %v230
  %233 = vst.msk [vmem:[%s9 + $0x8] sm:$0xff] %vm74, %v231
  // Predicated region
  $region38: #{_lambda_.10} parent=0 // pred_check
    _
  $region39: #{_lambda_.10} parent=0 // pred_check_branch
    %235 = sbr.rel (0) target = $region41
  $region40: #{_lambda_.10} parent=0 // pred_region
    _
  $region41: #{_lambda_.10} parent=0 // pred_fallthru
    _
  // Predicated region
  $region42: #{_lambda_.10} parent=0 // pred_check
    _
  $region43: #{_lambda_.10} parent=0 // pred_check_branch
    %237 = sbr.rel (0) target = $region45
  $region44: #{_lambda_.10} parent=0 // pred_region
    _
  $region45: #{_lambda_.10} parent=0 // pred_fallthru
    _

// kernel: _lambda_.11
$region0: #{_lambda_.11}
  #allocation0 [shape = 'u32[]', space=smem, size = 0x4, offset = 0x4, fixed_abs, tag = 'smem constant byte address 0x4 - core index']
  #allocation1 [shape = 'u32[72,128]{1,0:T(1,128)}', space=vmem, size = 0x9000, scoped, tag = 'internal scratch']
  %s0 = inlined_call_operand.vmem [shape: f32[32,16], index: 0, kind: input, shape index: {}]
  %s1 = inlined_call_operand.vmem [shape: f32[16,16], index: 1, kind: input, shape index: {}]
  %s2 = inlined_call_operand.vmem [shape: f32[16,32], index: 2, kind: input, shape index: {}]
  %s3 = inlined_call_operand.vmem [shape: f32[32,32], index: 3, kind: input, shape index: {}]
  %s4 = inlined_call_operand.vmem [shape: f32[32,32], index: 4, kind: input, shape index: {}]
  %s5 = inlined_call_operand.hbm [shape: f32[32,32], index: 5, kind: output, shape index: {0}]
  %s6 = inlined_call_operand.hbm [shape: f32[32,32], index: 6, kind: output, shape index: {1}]
  %7 = xla_tuple %s5, %s6
  %s8 = sld [smem:[#allocation0]]
  $region38: #{_lambda_.11} parent=0
    _
  %s10 = ssub.s32 1, %s8
  %s11 = scalar_select 0, %s10, %s8
  $region1: #{_lambda_.11} parent=0
    #allocation2 [shape = 'u8[16384]{0}', space=vmem, size = 0x4000, scoped, tag = 'output window, operand 0, single buffered']
    #allocation3 [shape = 's32[1]{0}', space=sflag, size = 0x4, scoped, tag = 'scoped memory for _lambda_.11']
    #allocation4 [shape = 'u8[16384]{0}', space=vmem, size = 0x4000, scoped, tag = 'output window, operand 1, single buffered']
    #allocation5 [shape = 's32[1]{0}', space=sflag, size = 0x4, scoped, tag = 'scoped memory for _lambda_.11']
    %12 = vsyncpa [#allocation3], 0
    %13 = vsyncpa [#allocation5], 0
    // Predicated region
    $region2: #{_lambda_.11} parent=1 // pred_check
      _
    $region3: #{_lambda_.11} parent=1 // pred_check_branch
      %15 = sbr.rel (0) target = $region5
    $region4: #{_lambda_.11} parent=1 // pred_region
      _
    $region5: #{_lambda_.11} parent=1 // pred_fallthru
      _
    // Predicated region
    $region6: #{_lambda_.11} parent=1 // pred_check
      _
    $region7: #{_lambda_.11} parent=1 // pred_check_branch
      %17 = sbr.rel (0) target = $region9
    $region8: #{_lambda_.11} parent=1 // pred_region
      _
    $region9: #{_lambda_.11} parent=1 // pred_fallthru
      _
    // Predicated region
    $region10: #{_lambda_.11} parent=1 // pred_check
      _
    $region11: #{_lambda_.11} parent=1 // pred_check_branch
      %19 = sbr.rel (0) target = $region13
    $region12: #{_lambda_.11} parent=1 // pred_region
      _
    $region13: #{_lambda_.11} parent=1 // pred_fallthru
      _
    // Predicated region
    $region14: #{_lambda_.11} parent=1 // pred_check
      _
    $region15: #{_lambda_.11} parent=1 // pred_check_branch
      %21 = sbr.rel (0) target = $region17
    $region16: #{_lambda_.11} parent=1 // pred_region
      _
    $region17: #{_lambda_.11} parent=1 // pred_fallthru
      _
    // Predicated region
    $region18: #{_lambda_.11} parent=1 // pred_check
      _
    $region19: #{_lambda_.11} parent=1 // pred_check_branch
      %23 = sbr.rel (0) target = $region21
    $region20: #{_lambda_.11} parent=1 // pred_region
      _
    $region21: #{_lambda_.11} parent=1 // pred_fallthru
      _
    %v24 = vld [vmem:[%s0] sm:$0xff]
    %v25 = vld [vmem:[%s0 + $0x8] sm:$0xff]
    %v26 = vld [vmem:[%s0 + $0x10] sm:$0xff]
    %v27 = vld [vmem:[%s0 + $0x18] sm:$0xff]
    %v28 = vld [vmem:[%s1] sm:$0xff]
    %v29 = vld [vmem:[%s1 + $0x8] sm:$0xff]
    %vm30 = vcmask 130048
    %v32 = vsel %vm30, %v24, 0
    %v35 = vsel %vm30, %v25, 0
    %v38 = vsel %vm30, %v26, 0
    %v41 = vsel %vm30, %v27, 0
    %v44 = vsel %vm30, %v28, 0
    %v47 = vsel %vm30, %v29, 0
    %49 = vmatpush.xpose.msra.mxu0 0.0
    %50 = vmatpush.xpose.msra.mxu0 0.0
    %51 = vmatpush.xpose.msra.mxu0 0.0
    %52 = vmatpush.xpose.msra.mxu0 0.0
    %53 = vmatpush.xpose.msra.mxu0 0.0
    %54 = vmatpush.xpose.msra.mxu0 0.0
    %55 = vmatpush.xpose.msra.mxu0 0.0
    %56 = vmatpush.xpose.msra.mxu0 0.0
    %57 = vmatpush.xpose.msra.mxu0 0.0
    %58 = vmatpush.xpose.msra.mxu0 0.0
    %59 = vmatpush.xpose.msra.mxu0 0.0
    %60 = vmatpush.xpose.msra.mxu0 0.0
    %61 = vmatpush.xpose.msra.mxu0 0.0
    %62 = vmatpush.xpose.msra.mxu0 0.0
    %63 = vmatpush.xpose.msra.mxu0 %v47
    %64 = vmatpush.xpose.msra.mxu0 %v44
    %65 = vmatmul.f32.gmra.mxu0 %v32
    %v66 = vpop.f32.mrf.mxu0
    %v67 = vadd.f32 0.0, %v66
    %68 = vmatmul.f32.gmra.mxu0 %v35
    %v69 = vpop.f32.mrf.mxu0
    %v70 = vadd.f32 0.0, %v69
    %71 = vmatmul.f32.gmra.mxu0 %v38
    %v72 = vpop.f32.mrf.mxu0
    %v73 = vadd.f32 0.0, %v72
    %74 = vmatmul.f32.gmra.mxu0 %v41
    %v75 = vpop.f32.mrf.mxu0
    %v76 = vadd.f32 0.0, %v75
    %77 = vdwg.mxu0
    %v78 = vld [vmem:[%s2] sm:$0xff]
    %v79 = vld [vmem:[%s2 + $0x8] sm:$0xff]
    %v81 = vsel %vm30, %v67, 0
    %v84 = vsel %vm30, %v70, 0
    %v87 = vsel %vm30, %v73, 0
    %v90 = vsel %vm30, %v76, 0
    %92 = vmatpush.msra.mxu0 0.0
    %93 = vmatpush.msra.mxu0 0.0
    %94 = vmatpush.msra.mxu0 0.0
    %95 = vmatpush.msra.mxu0 0.0
    %96 = vmatpush.msra.mxu0 0.0
    %97 = vmatpush.msra.mxu0 0.0
    %98 = vmatpush.msra.mxu0 0.0
    %99 = vmatpush.msra.mxu0 0.0
    %100 = vmatpush.msra.mxu0 0.0
    %101 = vmatpush.msra.mxu0 0.0
    %102 = vmatpush.msra.mxu0 0.0
    %103 = vmatpush.msra.mxu0 0.0
    %104 = vmatpush.msra.mxu0 0.0
    %105 = vmatpush.msra.mxu0 0.0
    %106 = vmatpush.msra.mxu0 %v79
    %107 = vmatpush.msra.mxu0 %v78
    %108 = vmatmul.f32.gmra.mxu0 %v81
    %v109 = vpop.f32.mrf.mxu0
    %v110 = vadd.f32 0.0, %v109
    %111 = vmatmul.f32.gmra.mxu0 %v84
    %v112 = vpop.f32.mrf.mxu0
    %v113 = vadd.f32 0.0, %v112
    %114 = vmatmul.f32.gmra.mxu0 %v87
    %v115 = vpop.f32.mrf.mxu0
    %v116 = vadd.f32 0.0, %v115
    %117 = vmatmul.f32.gmra.mxu0 %v90
    %v118 = vpop.f32.mrf.mxu0
    %v119 = vadd.f32 0.0, %v118
    %120 = vdwg.mxu0
    %v121 = vand.u32 2147483647, %v110
    %v122 = vand.u32 2147483647, %v113
    %v123 = vand.u32 2147483647, %v116
    %v124 = vand.u32 2147483647, %v119
    %v125 = vlaneseq
    %v126 = vshrl.u32 %v125, 7
    %v127 = vadd.s32 %v126, 8
    %v128 = vadd.s32 %v126, 16
    %v129 = vadd.s32 %v126, 24
    %v130 = vlaneseq
    %v131 = vand.u32 %v130, 127
    %vm132 = vcmp.eq.s32.totalorder %v126, %v131
    %vm133 = vcmp.eq.s32.totalorder %v127, %v131
    %vm134 = vcmp.eq.s32.totalorder %v128, %v131
    %vm135 = vcmp.eq.s32.totalorder %v129, %v131
    %v136 = vsel %vm132, 1.0, %v121
    %v137 = vsel %vm133, 1.0, %v122
    %v138 = vsel %vm134, 1.0, %v123
    %v139 = vsel %vm135, 1.0, %v124
    %vm140 = vcmask 261120
    %141 = vst.msk [vmem:[#allocation2] sm:$0xff] %vm140, %v136
    %142 = vst.msk [vmem:[#allocation2 + $0x8] sm:$0xff] %vm140, %v137
    %143 = vst.msk [vmem:[#allocation2 + $0x10] sm:$0xff] %vm140, %v138
    %144 = vst.msk [vmem:[#allocation2 + $0x18] sm:$0xff] %vm140, %v139
    %v146 = vsel %vm140, %v136, 0
    %v149 = vsel %vm140, %v137, 0
    %v152 = vsel %vm140, %v138, 0
    %v155 = vsel %vm140, %v139, 0
    %157 = vmatpush.xpose.msra.mxu0 0.0
    %158 = vmatpush.xpose.msra.mxu0 0.0
    %159 = vmatpush.xpose.msra.mxu0 0.0
    %160 = vmatpush.xpose.msra.mxu0 0.0
    %161 = vmatpush.xpose.msra.mxu0 0.0
    %162 = vmatpush.xpose.msra.mxu0 0.0
    %163 = vmatpush.xpose.msra.mxu0 0.0
    %164 = vmatpush.xpose.msra.mxu0 0.0
    %165 = vmatpush.xpose.msra.mxu0 0.0
    %166 = vmatpush.xpose.msra.mxu0 0.0
    %167 = vmatpush.xpose.msra.mxu0 0.0
    %168 = vmatpush.xpose.msra.mxu0 0.0
    %169 = vmatpush.xpose.msra.mxu0 %v155
    %170 = vmatpush.xpose.msra.mxu0 %v152
    %171 = vmatpush.xpose.msra.mxu0 %v149
    %172 = vmatpush.xpose.msra.mxu0 %v146
    %173 = vmatmul.f32.gmra.mxu0 %v146
    %v174 = vpop.f32.mrf.mxu0
    %v175 = vadd.f32 0.0, %v174
    %176 = vmatmul.f32.gmra.mxu0 %v149
    %v177 = vpop.f32.mrf.mxu0
    %v178 = vadd.f32 0.0, %v177
    %179 = vmatmul.f32.gmra.mxu0 %v152
    %v180 = vpop.f32.mrf.mxu0
    %v181 = vadd.f32 0.0, %v180
    %182 = vmatmul.f32.gmra.mxu0 %v155
    %v183 = vpop.f32.mrf.mxu0
    %v184 = vadd.f32 0.0, %v183
    %185 = vdwg.mxu0
    %186 = vxpose.xlu0.b32.start [1/16] %v175, 128
    %187 = vxpose.xlu0.b32.cont [2/16] %v178, 128
    %188 = vxpose.xlu0.b32.cont [3/16] %v181, 128
    %189 = vxpose.xlu0.b32.cont [4/16] %v184, 128
    %190 = vxpose.xlu0.b32.cont [5/16] 0.0, 128
    %191 = vxpose.xlu0.b32.cont [6/16] 0.0, 128
    %192 = vxpose.xlu0.b32.cont [7/16] 0.0, 128
    %193 = vxpose.xlu0.b32.cont [8/16] 0.0, 128
    %194 = vxpose.xlu0.b32.cont [9/16] 0.0, 128
    %195 = vxpose.xlu0.b32.cont [10/16] 0.0, 128
    %196 = vxpose.xlu0.b32.cont [11/16] 0.0, 128
    %197 = vxpose.xlu0.b32.cont [12/16] 0.0, 128
    %198 = vxpose.xlu0.b32.cont [13/16] 0.0, 128
    %199 = vxpose.xlu0.b32.cont [14/16] 0.0, 128
    %200 = vxpose.xlu0.b32.cont [15/16] 0.0, 128
    %201 = vxpose.xlu0.b32.end [16/16] 0.0, 128
    %v202 = vpop.trf.xlu0
    %v203 = vpop.trf.xlu0
    %v204 = vpop.trf.xlu0
    %v205 = vpop.trf.xlu0
    %v206 = vpop.trf.xlu0
    %v207 = vpop.trf.xlu0
    %v208 = vpop.trf.xlu0
    %v209 = vpop.trf.xlu0
    %v210 = vpop.trf.xlu0
    %v211 = vpop.trf.xlu0
    %v212 = vpop.trf.xlu0
    %v213 = vpop.trf.xlu0
    %v214 = vpop.trf.xlu0
    %v215 = vpop.trf.xlu0
    %v216 = vpop.trf.xlu0
    %v217 = vpop.trf.xlu0
    %v218 = vadd.f32 %v175, %v202
    %v219 = vadd.f32 %v178, %v203
    %v220 = vadd.f32 %v181, %v204
    %v221 = vadd.f32 %v184, %v205
    %v222 = vmul.f32 %v218, 0.5
    %v223 = vmul.f32 %v219, 0.5
    %v224 = vmul.f32 %v220, 0.5
    %v225 = vmul.f32 %v221, 0.5
    %v226 = vsel %vm132, 1.0, %v222
    %v227 = vsel %vm133, 1.0, %v223
    %v228 = vsel %vm134, 1.0, %v224
    %v229 = vsel %vm135, 1.0, %v225
    %v230 = vand.u32 2147483647, %v226
    %v231 = vand.u32 2147483647, %v227
    %v232 = vand.u32 2147483647, %v228
    %v233 = vand.u32 2147483647, %v229
    %v234 = vld [vmem:[%s3] sm:$0xff]
    %v235 = vld [vmem:[%s3 + $0x8] sm:$0xff]
    %v236 = vld [vmem:[%s3 + $0x10] sm:$0xff]
    %v237 = vld [vmem:[%s3 + $0x18] sm:$0xff]
    %238 = vmatpush.msra.mxu0 0.0
    %239 = vmatpush.msra.mxu0 0.0
    %240 = vmatpush.msra.mxu0 0.0
    %241 = vmatpush.msra.mxu0 0.0
    %242 = vmatpush.msra.mxu0 0.0
    %243 = vmatpush.msra.mxu0 0.0
    %244 = vmatpush.msra.mxu0 0.0
    %245 = vmatpush.msra.mxu0 0.0
    %246 = vmatpush.msra.mxu0 0.0
    %247 = vmatpush.msra.mxu0 0.0
    %248 = vmatpush.msra.mxu0 0.0
    %249 = vmatpush.msra.mxu0 0.0
    %250 = vmatpush.msra.mxu0 %v237
    %251 = vmatpush.msra.mxu0 %v236
    %252 = vmatpush.msra.mxu0 %v235
    %253 = vmatpush.msra.mxu0 %v234
    %254 = vmatmul.f32.gmra.mxu0 %v146
    %v255 = vpop.f32.mrf.mxu0
    %v256 = vadd.f32 0.0, %v255
    %257 = vmatmul.f32.gmra.mxu0 %v149
    %v258 = vpop.f32.mrf.mxu0
    %v259 = vadd.f32 0.0, %v258
    %260 = vmatmul.f32.gmra.mxu0 %v152
    %v261 = vpop.f32.mrf.mxu0
    %v262 = vadd.f32 0.0, %v261
    %263 = vmatmul.f32.gmra.mxu0 %v155
    %v264 = vpop.f32.mrf.mxu0
    %v265 = vadd.f32 0.0, %v264
    %266 = vdwg.mxu0
    %v268 = vsel %vm140, %v230, 0
    %v271 = vsel %vm140, %v231, 0
    %v274 = vsel %vm140, %v232, 0
    %v277 = vsel %vm140, %v233, 0
    %279 = vmatpush.msra.mxu0 0.0
    %280 = vmatpush.msra.mxu0 0.0
    %281 = vmatpush.msra.mxu0 0.0
    %282 = vmatpush.msra.mxu0 0.0
    %283 = vmatpush.msra.mxu0 0.0
    %284 = vmatpush.msra.mxu0 0.0
    %285 = vmatpush.msra.mxu0 0.0
    %286 = vmatpush.msra.mxu0 0.0
    %287 = vmatpush.msra.mxu0 0.0
    %288 = vmatpush.msra.mxu0 0.0
    %289 = vmatpush.msra.mxu0 0.0
    %290 = vmatpush.msra.mxu0 0.0
    %291 = vmatpush.msra.mxu0 %v265
    %292 = vmatpush.msra.mxu0 %v262
    %293 = vmatpush.msra.mxu0 %v259
    %294 = vmatpush.msra.mxu0 %v256
    %295 = vmatmul.f32.gmra.mxu0 %v268
    %v296 = vpop.f32.mrf.mxu0
    %v297 = vadd.f32 0.0, %v296
    %298 = vmatmul.f32.gmra.mxu0 %v271
    %v299 = vpop.f32.mrf.mxu0
    %v300 = vadd.f32 0.0, %v299
    %301 = vmatmul.f32.gmra.mxu0 %v274
    %v302 = vpop.f32.mrf.mxu0
    %v303 = vadd.f32 0.0, %v302
    %304 = vmatmul.f32.gmra.mxu0 %v277
    %v305 = vpop.f32.mrf.mxu0
    %v306 = vadd.f32 0.0, %v305
    %307 = vdwg.mxu0
    %v308 = vmax.f32 %v297, 0.0
    %v309 = vmax.f32 %v300, 0.0
    %v310 = vmax.f32 %v303, 0.0
    %v311 = vmax.f32 %v306, 0.0
    %v312 = vld [vmem:[%s4] sm:$0xff]
    %v313 = vld [vmem:[%s4 + $0x8] sm:$0xff]
    %v314 = vld [vmem:[%s4 + $0x10] sm:$0xff]
    %v315 = vld [vmem:[%s4 + $0x18] sm:$0xff]
    %316 = vmatpush.msra.mxu0 0.0
    %317 = vmatpush.msra.mxu0 0.0
    %318 = vmatpush.msra.mxu0 0.0
    %319 = vmatpush.msra.mxu0 0.0
    %320 = vmatpush.msra.mxu0 0.0
    %321 = vmatpush.msra.mxu0 0.0
    %322 = vmatpush.msra.mxu0 0.0
    %323 = vmatpush.msra.mxu0 0.0
    %324 = vmatpush.msra.mxu0 0.0
    %325 = vmatpush.msra.mxu0 0.0
    %326 = vmatpush.msra.mxu0 0.0
    %327 = vmatpush.msra.mxu0 0.0
    %328 = vmatpush.msra.mxu0 %v315
    %329 = vmatpush.msra.mxu0 %v314
    %330 = vmatpush.msra.mxu0 %v313
    %331 = vmatpush.msra.mxu0 %v312
    %332 = vmatmul.f32.gmra.mxu0 %v146
    %v333 = vpop.f32.mrf.mxu0
    %v334 = vadd.f32 0.0, %v333
    %335 = vmatmul.f32.gmra.mxu0 %v149
    %v336 = vpop.f32.mrf.mxu0
    %v337 = vadd.f32 0.0, %v336
    %338 = vmatmul.f32.gmra.mxu0 %v152
    %v339 = vpop.f32.mrf.mxu0
    %v340 = vadd.f32 0.0, %v339
    %341 = vmatmul.f32.gmra.mxu0 %v155
    %v342 = vpop.f32.mrf.mxu0
    %v343 = vadd.f32 0.0, %v342
    %344 = vdwg.mxu0
    %v346 = vsel %vm140, %v308, 0
    %v349 = vsel %vm140, %v309, 0
    %v352 = vsel %vm140, %v310, 0
    %v355 = vsel %vm140, %v311, 0
    %357 = vmatpush.msra.mxu0 0.0
    %358 = vmatpush.msra.mxu0 0.0
    %359 = vmatpush.msra.mxu0 0.0
    %360 = vmatpush.msra.mxu0 0.0
    %361 = vmatpush.msra.mxu0 0.0
    %362 = vmatpush.msra.mxu0 0.0
    %363 = vmatpush.msra.mxu0 0.0
    %364 = vmatpush.msra.mxu0 0.0
    %365 = vmatpush.msra.mxu0 0.0
    %366 = vmatpush.msra.mxu0 0.0
    %367 = vmatpush.msra.mxu0 0.0
    %368 = vmatpush.msra.mxu0 0.0
    %369 = vmatpush.msra.mxu0 %v343
    %370 = vmatpush.msra.mxu0 %v340
    %371 = vmatpush.msra.mxu0 %v337
    %372 = vmatpush.msra.mxu0 %v334
    %373 = vmatmul.f32.gmra.mxu0 %v346
    %v374 = vpop.f32.mrf.mxu0
    %v375 = vadd.f32 0.0, %v374
    %376 = vmatmul.f32.gmra.mxu0 %v349
    %v377 = vpop.f32.mrf.mxu0
    %v378 = vadd.f32 0.0, %v377
    %379 = vmatmul.f32.gmra.mxu0 %v352
    %v380 = vpop.f32.mrf.mxu0
    %v381 = vadd.f32 0.0, %v380
    %382 = vmatmul.f32.gmra.mxu0 %v355
    %v383 = vpop.f32.mrf.mxu0
    %v384 = vadd.f32 0.0, %v383
    %385 = vdwg.mxu0
    %v386 = vmax.f32 %v375, 0.0
    %v387 = vmax.f32 %v378, 0.0
    %v388 = vmax.f32 %v381, 0.0
    %v389 = vmax.f32 %v384, 0.0
    %390 = vxpose.xlu0.b32.start [1/16] %v386, 128
    %391 = vxpose.xlu0.b32.cont [2/16] %v387, 128
    %392 = vxpose.xlu0.b32.cont [3/16] %v388, 128
    %393 = vxpose.xlu0.b32.cont [4/16] %v389, 128
    %394 = vxpose.xlu0.b32.cont [5/16] 0.0, 128
    %395 = vxpose.xlu0.b32.cont [6/16] 0.0, 128
    %396 = vxpose.xlu0.b32.cont [7/16] 0.0, 128
    %397 = vxpose.xlu0.b32.cont [8/16] 0.0, 128
    %398 = vxpose.xlu0.b32.cont [9/16] 0.0, 128
    %399 = vxpose.xlu0.b32.cont [10/16] 0.0, 128
    %400 = vxpose.xlu0.b32.cont [11/16] 0.0, 128
    %401 = vxpose.xlu0.b32.cont [12/16] 0.0, 128
    %402 = vxpose.xlu0.b32.cont [13/16] 0.0, 128
    %403 = vxpose.xlu0.b32.cont [14/16] 0.0, 128
    %404 = vxpose.xlu0.b32.cont [15/16] 0.0, 128
    %405 = vxpose.xlu0.b32.end [16/16] 0.0, 128
    %v406 = vpop.trf.xlu0
    %v407 = vpop.trf.xlu0
    %v408 = vpop.trf.xlu0
    %v409 = vpop.trf.xlu0
    %v410 = vpop.trf.xlu0
    %v411 = vpop.trf.xlu0
    %v412 = vpop.trf.xlu0
    %v413 = vpop.trf.xlu0
    %v414 = vpop.trf.xlu0
    %v415 = vpop.trf.xlu0
    %v416 = vpop.trf.xlu0
    %v417 = vpop.trf.xlu0
    %v418 = vpop.trf.xlu0
    %v419 = vpop.trf.xlu0
    %v420 = vpop.trf.xlu0
    %v421 = vpop.trf.xlu0
    %v422 = vadd.f32 %v386, %v406
    %v423 = vadd.f32 %v387, %v407
    %v424 = vadd.f32 %v388, %v408
    %v425 = vadd.f32 %v389, %v409
    %v426 = vmul.f32 %v422, 0.5
    %v427 = vmul.f32 %v423, 0.5
    %v428 = vmul.f32 %v424, 0.5
    %v429 = vmul.f32 %v425, 0.5
    %v430 = vsel %vm132, 1.0, %v426
    %v431 = vsel %vm133, 1.0, %v427
    %v432 = vsel %vm134, 1.0, %v428
    %v433 = vsel %vm135, 1.0, %v429
    %v434 = vand.u32 2147483647, %v430
    %v435 = vand.u32 2147483647, %v431
    %v436 = vand.u32 2147483647, %v432
    %v437 = vand.u32 2147483647, %v433
    %438 = vst.msk [vmem:[#allocation4] sm:$0xff] %vm140, %v434
    %439 = vst.msk [vmem:[#allocation4 + $0x8] sm:$0xff] %vm140, %v435
    %440 = vst.msk [vmem:[#allocation4 + $0x10] sm:$0xff] %vm140, %v436
    %441 = vst.msk [vmem:[#allocation4 + $0x18] sm:$0xff] %vm140, %v437
    // Predicated region
    $region22: #{_lambda_.11} parent=1 // pred_check
      _
    $region23: #{_lambda_.11} parent=1 // pred_check_branch
      %443 = sbr.rel (0) target = $region25
    $region24: #{_lambda_.11} parent=1 // pred_region
      %445 = vsyncadd [#allocation3], 0
      %s446 = sshll.u32 [#allocation2], 4
      %s447 = int_to_ptr.vmem [resolvable:$true] %s446
      %s448 = sshll.u32 %s5, 4
      %s449 = int_to_ptr.hbm [resolvable:$true] %s448
      %454 = dma.vmem_to_hbm [thread:$0]  %s447, 512, %s449, [#allocation3], 128, 128, 8
    $region25: #{_lambda_.11} parent=1 // pred_fallthru
      _
    // Predicated region
    $region26: #{_lambda_.11} parent=1 // pred_check
      _
    $region27: #{_lambda_.11} parent=1 // pred_check_branch
      %456 = sbr.rel (0) target = $region29
    $region28: #{_lambda_.11} parent=1 // pred_region
      %458 = vsyncadd [#allocation5], 0
      %s459 = sshll.u32 [#allocation4], 4
      %s460 = int_to_ptr.vmem [resolvable:$true] %s459
      %s461 = sshll.u32 %s6, 4
      %s462 = int_to_ptr.hbm [resolvable:$true] %s461
      %467 = dma.vmem_to_hbm [thread:$0]  %s460, 512, %s462, [#allocation5], 128, 128, 8
    $region29: #{_lambda_.11} parent=1 // pred_fallthru
      _
    // Predicated region
    $region30: #{_lambda_.11} parent=1 // pred_check
      _
    $region31: #{_lambda_.11} parent=1 // pred_check_branch
      %469 = sbr.rel (0) target = $region33
    $region32: #{_lambda_.11} parent=1 // pred_region
      %471 = dma.done [#allocation3], 512
    $region33: #{_lambda_.11} parent=1 // pred_fallthru
      _
    // Predicated region
    $region34: #{_lambda_.11} parent=1 // pred_check
      _
    $region35: #{_lambda_.11} parent=1 // pred_check_branch
      %473 = sbr.rel (0) target = $region37
    $region36: #{_lambda_.11} parent=1 // pred_region
      %475 = dma.done [#allocation5], 512
    $region37: #{_lambda_.11} parent=1 // pred_fallthru
      _
    %476 = vsyncpa [#allocation3], 1
    %477 = vsyncpa [#allocation5], 1

</llo_original>
